<compile_context>
chip_gen: v6e
topology: v6e:2x2x1
jax: 0.10.0
libtpu: 0.0.40
codegen_flags: <defaults>
</compile_context>

<pallas_src>
import jax
import jax.numpy as jnp
from jax import lax
from jax.experimental import pallas as pl
from jax.experimental.pallas import tpu as pltpu

VOCAB_SIZE = 1000
MAX_SEQ_LEN = 8
EMBEDDING_DIM = 128
BATCH = 32


def _embedding_kernel(ids_ref, hi_ref, mid_ref, lo_ref, pos_ref, out_ref):
    # ids_ref: VMEM (ROWS, 1)      int32    flattened (batch*seq) token ids of this block
    # hi/mid/lo_ref: VMEM (Vp, D)  bfloat16 exact 3-term split of the padded f32 token table
    # pos_ref: VMEM (T, D)         float32  positional table (resident, const index_map)
    # out_ref: VMEM (ROWS, D)      float32  lane-dense output block (one unmasked store)
    rows, d = out_ref.shape
    t = pos_ref.shape[0]
    v_pad = hi_ref.shape[0]

    ids = ids_ref[...]                                            # (ROWS, 1) int32
    col = lax.broadcasted_iota(jnp.int32, (rows, v_pad), 1)       # (ROWS, Vp)
    # Exact 0/1 selector; go bool -> f32 -> bf16 (both casts are trivially
    # supported by the Mosaic lowering; 0 and 1 are exact in bf16).
    one_hot = (col == ids).astype(jnp.float32).astype(jnp.bfloat16)

    # Gather-as-matmul: 3 native bf16 MXU passes reconstruct the exact f32 row.
    tok = jnp.dot(one_hot, hi_ref[...], preferred_element_type=jnp.float32)
    tok = tok + jnp.dot(one_hot, mid_ref[...], preferred_element_type=jnp.float32)
    tok = tok + jnp.dot(one_hot, lo_ref[...], preferred_element_type=jnp.float32)

    # Positional add: reshape-broadcast (trailing (8,128) dims untouched -> layout-free).
    out = tok.reshape(rows // t, t, d) + pos_ref[...][None, :, :]
    out_ref[...] = out.reshape(rows, d)


def prepare_embedding_params(token_table, pos_table):
    """One-time (init-time) preparation: pad vocab to a lane multiple and split
    the f32 table into an exact hi+mid+lo bf16 decomposition."""
    v, d = token_table.shape
    v_pad = ((v + 127) // 128) * 128
    tok_pad = jnp.pad(token_table.astype(jnp.float32), ((0, v_pad - v), (0, 0)))
    hi = tok_pad.astype(jnp.bfloat16)
    r1 = tok_pad - hi.astype(jnp.float32)
    mid = r1.astype(jnp.bfloat16)
    r2 = r1 - mid.astype(jnp.float32)
    lo = r2.astype(jnp.bfloat16)
    return hi, mid, lo, pos_table.astype(jnp.float32)


def _grid_steps_for_device(batch):
    """2-way batch split only on multi-TensorCore chips (v7x); 1 otherwise."""
    try:
        kind = jax.devices()[0].device_kind.lower()
    except Exception:
        kind = ""
    steps = 2 if ("v7" in kind or "tpu7" in kind) else 1
    if batch % steps != 0:      # output blocks must cover whole batch rows
        steps = 1
    return steps


def embedding_forward(X, params):
    tok_hi, tok_mid, tok_lo, pos_table = params
    B, T = X.shape
    v_pad, D = tok_hi.shape
    assert pos_table.shape == (T, D), "seq length must match positional table"

    grid = _grid_steps_for_device(B)
    assert B % grid == 0
    rows = (B // grid) * T                       # rows per grid step (multiple of T)

    ids_flat = X.astype(jnp.int32).reshape(B * T, 1)

    flops = 2 * (B * T) * v_pad * D * 3          # 3 bf16 one-hot matmul passes
    bytes_accessed = (ids_flat.size * 4 + 3 * tok_hi.size * 2
                      + pos_table.size * 4 + B * T * D * 4)

    grid_spec = pltpu.PrefetchScalarGridSpec(
        num_scalar_prefetch=0,
        grid=(grid,),
        in_specs=[
            pl.BlockSpec((rows, 1), lambda i: (i, 0)),        # this step's ids
            pl.BlockSpec((v_pad, D), lambda i: (0, 0)),       # resident table (hi)
            pl.BlockSpec((v_pad, D), lambda i: (0, 0)),       # resident table (mid)
            pl.BlockSpec((v_pad, D), lambda i: (0, 0)),       # resident table (lo)
            pl.BlockSpec((T, D), lambda i: (0, 0)),           # positional table
        ],
        out_specs=pl.BlockSpec((rows, D), lambda i: (i, 0)),  # lane-dense output block
    )
    out_flat = pl.pallas_call(
        _embedding_kernel,
        out_shape=jax.ShapeDtypeStruct((B * T, D), jnp.float32),
        grid_spec=grid_spec,
        compiler_params=pltpu.CompilerParams(
            dimension_semantics=("parallel",)),   # only matters on v7x (grid=2)
        cost_estimate=pl.CostEstimate(
            flops=flops, transcendentals=0, bytes_accessed=bytes_accessed),
    )(ids_flat, tok_hi, tok_mid, tok_lo, pos_table)
    return out_flat.reshape(B, T, D)


if __name__ == "__main__":
    key = jax.random.PRNGKey(0)
    k_tok, k_pos, k_x = jax.random.split(key, 3)

    # Deterministic parameter init (nn.Embedding default: N(0, 1)).
    token_table = jax.random.normal(k_tok, (VOCAB_SIZE, EMBEDDING_DIM), jnp.float32)
    pos_table = jax.random.normal(k_pos, (MAX_SEQ_LEN, EMBEDDING_DIM), jnp.float32)
    # nn.Linear(embedding_dim, vocab_size) is declared in the PyTorch __init__
    # but never used in forward, so it is intentionally not materialized here.

    # Input: (batch=32, seq=8) int token ids in [0, vocab_size).
    X = jax.random.randint(k_x, (BATCH, MAX_SEQ_LEN), 0, VOCAB_SIZE, dtype=jnp.int32)

    # One-time init-time preparation (hoisted out of the per-call hot path).
    params = jax.block_until_ready(prepare_embedding_params(token_table, pos_table))

    out = embedding_forward(X, params)
    out = jax.block_until_ready(out)

    # Pure-JAX reference for correctness.
    ref = token_table[X] + pos_table[None, :, :]
    assert out.shape == (BATCH, MAX_SEQ_LEN, EMBEDDING_DIM)
    assert out.dtype == jnp.float32
    assert jnp.allclose(out, ref, atol=2e-5, rtol=2e-5)

    print("KERNEL_OK")
</pallas_src>

<mosaic_0001>
module attributes {stable_mosaic.version = 11 : i64} {
  func.func @_embedding_kernel(%arg0: i32, %arg1: memref<256x1xi32, #tpu.memory_space<vmem>>, %arg2: memref<1024x128xbf16, #tpu.memory_space<vmem>>, %arg3: memref<1024x128xbf16, #tpu.memory_space<vmem>>, %arg4: memref<1024x128xbf16, #tpu.memory_space<vmem>>, %arg5: memref<8x128xf32, #tpu.memory_space<vmem>>, %arg6: memref<256x128xf32, #tpu.memory_space<vmem>>) attributes {dimension_semantics = [#tpu.dimension_semantics<parallel>], iteration_bounds = array<i64: 1>, scalar_prefetch = 0 : i64, scratch_operands = 0 : i64, tpu.core_type = #tpu.core_type<tc>, window_params = [{transform_indices = @transform_0, window_bounds = array<i64: 256, 1>}, {pipeline_mode = #tpu.pipeline_mode<synchronous>, transform_indices = @transform_1, window_bounds = array<i64: 1024, 128>}, {pipeline_mode = #tpu.pipeline_mode<synchronous>, transform_indices = @transform_2, window_bounds = array<i64: 1024, 128>}, {pipeline_mode = #tpu.pipeline_mode<synchronous>, transform_indices = @transform_3, window_bounds = array<i64: 1024, 128>}, {pipeline_mode = #tpu.pipeline_mode<synchronous>, transform_indices = @transform_4, window_bounds = array<i64: 8, 128>}, {transform_indices = @transform_5, window_bounds = array<i64: 256, 128>}]} {
    %c0 = arith.constant 0 : index
    %c0_0 = arith.constant 0 : index
    %0 = vector.load %arg1[%c0, %c0_0] : memref<256x1xi32, #tpu.memory_space<vmem>>, vector<256x1xi32>
    %1 = tpu.iota {dimensions = array<i32: 1>} : vector<256x1024xi32>
    %2 = vector.broadcast %0 : vector<256x1xi32> to vector<256x1024xi32>
    %3 = arith.cmpi eq, %1, %2 : vector<256x1024xi32>
    %4 = arith.extui %3 : vector<256x1024xi1> to vector<256x1024xi32>
    %5 = arith.sitofp %4 : vector<256x1024xi32> to vector<256x1024xf32>
    %6 = arith.truncf %5 : vector<256x1024xf32> to vector<256x1024xbf16>
    %c0_1 = arith.constant 0 : index
    %c0_2 = arith.constant 0 : index
    %7 = vector.load %arg2[%c0_1, %c0_2] : memref<1024x128xbf16, #tpu.memory_space<vmem>>, vector<1024x128xbf16>
    %cst = arith.constant dense<0.000000e+00> : vector<256x128xf32>
    %8 = tpu.matmul %6, %7, %cst {dimension_numbers = #tpu.dot_dimension_numbers<[1], [0], [0], [1], [0, 0, 1, 1], [], []>} : vector<256x1024xbf16>, vector<1024x128xbf16>, vector<256x128xf32> -> vector<256x128xf32>
    %c0_3 = arith.constant 0 : index
    %c0_4 = arith.constant 0 : index
    %9 = vector.load %arg3[%c0_3, %c0_4] : memref<1024x128xbf16, #tpu.memory_space<vmem>>, vector<1024x128xbf16>
    %cst_5 = arith.constant dense<0.000000e+00> : vector<256x128xf32>
    %10 = tpu.matmul %6, %9, %cst_5 {dimension_numbers = #tpu.dot_dimension_numbers<[1], [0], [0], [1], [0, 0, 1, 1], [], []>} : vector<256x1024xbf16>, vector<1024x128xbf16>, vector<256x128xf32> -> vector<256x128xf32>
    %11 = arith.addf %8, %10 : vector<256x128xf32>
    %c0_6 = arith.constant 0 : index
    %c0_7 = arith.constant 0 : index
    %12 = vector.load %arg4[%c0_6, %c0_7] : memref<1024x128xbf16, #tpu.memory_space<vmem>>, vector<1024x128xbf16>
    %cst_8 = arith.constant dense<0.000000e+00> : vector<256x128xf32>
    %13 = tpu.matmul %6, %12, %cst_8 {dimension_numbers = #tpu.dot_dimension_numbers<[1], [0], [0], [1], [0, 0, 1, 1], [], []>} : vector<256x1024xbf16>, vector<1024x128xbf16>, vector<256x128xf32> -> vector<256x128xf32>
    %14 = arith.addf %11, %13 : vector<256x128xf32>
    %15 = vector.shape_cast %14 : vector<256x128xf32> to vector<32x8x128xf32>
    %c0_9 = arith.constant 0 : index
    %c0_10 = arith.constant 0 : index
    %16 = vector.load %arg5[%c0_9, %c0_10] : memref<8x128xf32, #tpu.memory_space<vmem>>, vector<8x128xf32>
    %17 = vector.shape_cast %16 : vector<8x128xf32> to vector<1x8x128xf32>
    %18 = vector.broadcast %17 : vector<1x8x128xf32> to vector<32x8x128xf32>
    %19 = arith.addf %15, %18 : vector<32x8x128xf32>
    %20 = vector.shape_cast %19 : vector<32x8x128xf32> to vector<256x128xf32>
    %c0_11 = arith.constant 0 : index
    %c0_12 = arith.constant 0 : index
    %21 = vector.load %arg6[%c0_11, %c0_12] : memref<256x128xf32, #tpu.memory_space<vmem>>, vector<256x128xf32>
    tpu.vector_store %arg6[%c0_11, %c0_12], %20 {strides = array<i32>} : memref<256x128xf32, #tpu.memory_space<vmem>>, vector<256x128xf32>,
    return
  }
  func.func @transform_0(%arg0: i32) -> (i32, i32) {
    %c0_i32 = arith.constant 0 : i32
    %c0_i32_0 = arith.constant 0 : i32
    return %arg0, %c0_i32 : i32, i32
  }
  func.func @transform_1(%arg0: i32) -> (i32, i32) {
    %c0_i32 = arith.constant 0 : i32
    %c0_i32_0 = arith.constant 0 : i32
    %c0_i32_1 = arith.constant 0 : i32
    return %c0_i32, %c0_i32_0 : i32, i32
  }
  func.func @transform_2(%arg0: i32) -> (i32, i32) {
    %c0_i32 = arith.constant 0 : i32
    %c0_i32_0 = arith.constant 0 : i32
    %c0_i32_1 = arith.constant 0 : i32
    return %c0_i32, %c0_i32_0 : i32, i32
  }
  func.func @transform_3(%arg0: i32) -> (i32, i32) {
    %c0_i32 = arith.constant 0 : i32
    %c0_i32_0 = arith.constant 0 : i32
    %c0_i32_1 = arith.constant 0 : i32
    return %c0_i32, %c0_i32_0 : i32, i32
  }
  func.func @transform_4(%arg0: i32) -> (i32, i32) {
    %c0_i32 = arith.constant 0 : i32
    %c0_i32_0 = arith.constant 0 : i32
    %c0_i32_1 = arith.constant 0 : i32
    return %c0_i32, %c0_i32_0 : i32, i32
  }
  func.func @transform_5(%arg0: i32) -> (i32, i32) {
    %c0_i32 = arith.constant 0 : i32
    %c0_i32_0 = arith.constant 0 : i32
    return %arg0, %c0_i32 : i32, i32
  }
}

</mosaic_0001>

<llo_original>
// kernel: tpu_custom_call.1
$region0: #{tpu_custom_call.1}
  #allocation0 [shape = 'u32[]', space=smem, size = 0x4, offset = 0x4, fixed_abs, tag = 'smem constant byte address 0x4 - core index']
  #allocation1 [shape = 'u32[144,128]{1,0:T(1,128)}', space=vmem, size = 0x12000, scoped, tag = 'internal scratch']
  %s0 = inlined_call_operand.vmem [shape: s32[256,1], index: 0, kind: input, shape index: {}]
  %s1 = inlined_call_operand.hbm [shape: bf16[1024,128], index: 1, kind: input, shape index: {}]
  %s2 = inlined_call_operand.hbm [shape: bf16[1024,128], index: 2, kind: input, shape index: {}]
  %s3 = inlined_call_operand.hbm [shape: bf16[1024,128], index: 3, kind: input, shape index: {}]
  %s4 = inlined_call_operand.vmem [shape: f32[8,128], index: 4, kind: input, shape index: {}]
  %s5 = inlined_call_operand.hbm [shape: f32[256,128], index: 5, kind: output, shape index: {}]
  %s6 = sld [smem:[#allocation0]]
  $region42: #{tpu_custom_call.1} parent=0
    _
  %s8 = ssub.s32 1, %s6
  %s9 = scalar_select 0, %s8, %s6
  $region1: #{tpu_custom_call.1} parent=0
    #allocation2 [shape = 'u8[262144]{0}', space=vmem, size = 0x40000, scoped, tag = 'input window, operand 1, single buffered']
    #allocation3 [shape = 's32[1]{0}', space=sflag, size = 0x4, scoped, tag = 'scoped memory for tpu_custom_call.1']
    #allocation4 [shape = 's32[1]{0}', space=sflag, size = 0x4, scoped, tag = 'scoped memory for tpu_custom_call.1']
    #allocation5 [shape = 'u8[262144]{0}', space=vmem, size = 0x40000, scoped, tag = 'input window, operand 2, single buffered']
    #allocation6 [shape = 's32[1]{0}', space=sflag, size = 0x4, scoped, tag = 'scoped memory for tpu_custom_call.1']
    #allocation7 [shape = 'u8[262144]{0}', space=vmem, size = 0x40000, scoped, tag = 'input window, operand 3, single buffered']
    #allocation8 [shape = 'u8[131072]{0}', space=vmem, size = 0x20000, scoped, tag = 'output window, operand 0, single buffered']
    %10 = vsyncpa [#allocation3], 0
    %11 = vsyncpa [#allocation6], 0
    %12 = vsyncpa [#allocation4], 0
    // Predicated region
    $region2: #{tpu_custom_call.1} parent=1 // pred_check
      _
    $region3: #{tpu_custom_call.1} parent=1 // pred_check_branch
      %14 = sbr.rel (0) target = $region5
    $region4: #{tpu_custom_call.1} parent=1 // pred_region
      _
    $region5: #{tpu_custom_call.1} parent=1 // pred_fallthru
      _
    // Predicated region
    $region6: #{tpu_custom_call.1} parent=1 // pred_check
      _
    $region7: #{tpu_custom_call.1} parent=1 // pred_check_branch
      %16 = sbr.rel (0) target = $region9
    $region8: #{tpu_custom_call.1} parent=1 // pred_region
      %s18 = ssub.s32 8192, 8192
      %19 = vsyncadd [#allocation3], %s18
      %s20 = sshll.u32 [#allocation2], 4
      %s21 = int_to_ptr.vmem [resolvable:$true] %s20
      %26 = dma.hbm_to_vmem [thread:$0]  %s1, 8192, %s21, [#allocation3], 64, 64, 4
    $region9: #{tpu_custom_call.1} parent=1 // pred_fallthru
      _
    // Predicated region
    $region10: #{tpu_custom_call.1} parent=1 // pred_check
      _
    $region11: #{tpu_custom_call.1} parent=1 // pred_check_branch
      %28 = sbr.rel (0) target = $region13
    $region12: #{tpu_custom_call.1} parent=1 // pred_region
      %s30 = ssub.s32 8192, 8192
      %31 = vsyncadd [#allocation6], %s30
      %s32 = sshll.u32 [#allocation5], 4
      %s33 = int_to_ptr.vmem [resolvable:$true] %s32
      %38 = dma.hbm_to_vmem [thread:$0]  %s2, 8192, %s33, [#allocation6], 64, 64, 4
    $region13: #{tpu_custom_call.1} parent=1 // pred_fallthru
      _
    // Predicated region
    $region14: #{tpu_custom_call.1} parent=1 // pred_check
      _
    $region15: #{tpu_custom_call.1} parent=1 // pred_check_branch
      %40 = sbr.rel (0) target = $region17
    $region16: #{tpu_custom_call.1} parent=1 // pred_region
      %s42 = ssub.s32 8192, 8192
      %43 = vsyncadd [#allocation6], %s42
      %s44 = sshll.u32 [#allocation7], 4
      %s45 = int_to_ptr.vmem [resolvable:$true] %s44
      %50 = dma.hbm_to_vmem [thread:$0]  %s3, 8192, %s45, [#allocation6], 64, 64, 4
    $region17: #{tpu_custom_call.1} parent=1 // pred_fallthru
      _
    // Predicated region
    $region18: #{tpu_custom_call.1} parent=1 // pred_check
      _
    $region19: #{tpu_custom_call.1} parent=1 // pred_check_branch
      %52 = sbr.rel (0) target = $region21
    $region20: #{tpu_custom_call.1} parent=1 // pred_region
      _
    $region21: #{tpu_custom_call.1} parent=1 // pred_fallthru
      _
    // Predicated region
    $region22: #{tpu_custom_call.1} parent=1 // pred_check
      _
    $region23: #{tpu_custom_call.1} parent=1 // pred_check_branch
      %54 = sbr.rel (0) target = $region25
    $region24: #{tpu_custom_call.1} parent=1 // pred_region
      %55 = dma.done [#allocation3], 8192
    $region25: #{tpu_custom_call.1} parent=1 // pred_fallthru
      _
    // Predicated region
    $region26: #{tpu_custom_call.1} parent=1 // pred_check
      _
    $region27: #{tpu_custom_call.1} parent=1 // pred_check_branch
      %57 = sbr.rel (0) target = $region29
    $region28: #{tpu_custom_call.1} parent=1 // pred_region
      %58 = dma.done [#allocation6], 8192
    $region29: #{tpu_custom_call.1} parent=1 // pred_fallthru
      _
    // Predicated region
    $region30: #{tpu_custom_call.1} parent=1 // pred_check
      _
    $region31: #{tpu_custom_call.1} parent=1 // pred_check_branch
      %60 = sbr.rel (0) target = $region33
    $region32: #{tpu_custom_call.1} parent=1 // pred_region
      %61 = dma.done [#allocation6], 8192
    $region33: #{tpu_custom_call.1} parent=1 // pred_fallthru
      _
    %v63 = vld [vmem:[%s0] sm:$0xff]
    %v64 = vld [vmem:[%s0 + $0x8] sm:$0xff]
    %v65 = vld [vmem:[%s0 + $0x10] sm:$0xff]
    %v66 = vld [vmem:[%s0 + $0x18] sm:$0xff]
    %v67 = vld [vmem:[%s0 + $0x20] sm:$0xff]
    %v68 = vld [vmem:[%s0 + $0x28] sm:$0xff]
    %v69 = vld [vmem:[%s0 + $0x30] sm:$0xff]
    %v70 = vld [vmem:[%s0 + $0x38] sm:$0xff]
    %v71 = vld [vmem:[%s0 + $0x40] sm:$0xff]
    %v72 = vld [vmem:[%s0 + $0x48] sm:$0xff]
    %v73 = vld [vmem:[%s0 + $0x50] sm:$0xff]
    %v74 = vld [vmem:[%s0 + $0x58] sm:$0xff]
    %v75 = vld [vmem:[%s0 + $0x60] sm:$0xff]
    %v76 = vld [vmem:[%s0 + $0x68] sm:$0xff]
    %v77 = vld [vmem:[%s0 + $0x70] sm:$0xff]
    %v78 = vld [vmem:[%s0 + $0x78] sm:$0xff]
    %v79 = vld [vmem:[%s0 + $0x80] sm:$0xff]
    %v80 = vld [vmem:[%s0 + $0x88] sm:$0xff]
    %v81 = vld [vmem:[%s0 + $0x90] sm:$0xff]
    %v82 = vld [vmem:[%s0 + $0x98] sm:$0xff]
    %v83 = vld [vmem:[%s0 + $0xa0] sm:$0xff]
    %v84 = vld [vmem:[%s0 + $0xa8] sm:$0xff]
    %v85 = vld [vmem:[%s0 + $0xb0] sm:$0xff]
    %v86 = vld [vmem:[%s0 + $0xb8] sm:$0xff]
    %v87 = vld [vmem:[%s0 + $0xc0] sm:$0xff]
    %v88 = vld [vmem:[%s0 + $0xc8] sm:$0xff]
    %v89 = vld [vmem:[%s0 + $0xd0] sm:$0xff]
    %v90 = vld [vmem:[%s0 + $0xd8] sm:$0xff]
    %v91 = vld [vmem:[%s0 + $0xe0] sm:$0xff]
    %v92 = vld [vmem:[%s0 + $0xe8] sm:$0xff]
    %v93 = vld [vmem:[%s0 + $0xf0] sm:$0xff]
    %v94 = vld [vmem:[%s0 + $0xf8] sm:$0xff]
    %v95 = vlaneseq
    %v96 = vand.u32 %v95, 127
    %v97 = vadd.s32 %v96, 128
    %v98 = vadd.s32 %v96, 256
    %v99 = vadd.s32 %v96, 384
    %v100 = vadd.s32 %v96, 512
    %v101 = vadd.s32 %v96, 640
    %v102 = vadd.s32 %v96, 768
    %v103 = vadd.s32 %v96, 896
    %104 = vset.pattern.permute.xlu0 0
    %105 = vperm.xlu0 %104, %v63
    %v106 = vpop.permute.xlu0 %105
    %107 = vset.pattern.permute.xlu0 0
    %108 = vperm.xlu0 %107, %v64
    %v109 = vpop.permute.xlu0 %108
    %110 = vset.pattern.permute.xlu0 0
    %111 = vperm.xlu0 %110, %v65
    %v112 = vpop.permute.xlu0 %111
    %113 = vset.pattern.permute.xlu0 0
    %114 = vperm.xlu0 %113, %v66
    %v115 = vpop.permute.xlu0 %114
    %116 = vset.pattern.permute.xlu0 0
    %117 = vperm.xlu0 %116, %v67
    %v118 = vpop.permute.xlu0 %117
    %119 = vset.pattern.permute.xlu0 0
    %120 = vperm.xlu0 %119, %v68
    %v121 = vpop.permute.xlu0 %120
    %122 = vset.pattern.permute.xlu0 0
    %123 = vperm.xlu0 %122, %v69
    %v124 = vpop.permute.xlu0 %123
    %125 = vset.pattern.permute.xlu0 0
    %126 = vperm.xlu0 %125, %v70
    %v127 = vpop.permute.xlu0 %126
    %128 = vset.pattern.permute.xlu0 0
    %129 = vperm.xlu0 %128, %v71
    %v130 = vpop.permute.xlu0 %129
    %131 = vset.pattern.permute.xlu0 0
    %132 = vperm.xlu0 %131, %v72
    %v133 = vpop.permute.xlu0 %132
    %134 = vset.pattern.permute.xlu0 0
    %135 = vperm.xlu0 %134, %v73
    %v136 = vpop.permute.xlu0 %135
    %137 = vset.pattern.permute.xlu0 0
    %138 = vperm.xlu0 %137, %v74
    %v139 = vpop.permute.xlu0 %138
    %140 = vset.pattern.permute.xlu0 0
    %141 = vperm.xlu0 %140, %v75
    %v142 = vpop.permute.xlu0 %141
    %143 = vset.pattern.permute.xlu0 0
    %144 = vperm.xlu0 %143, %v76
    %v145 = vpop.permute.xlu0 %144
    %146 = vset.pattern.permute.xlu0 0
    %147 = vperm.xlu0 %146, %v77
    %v148 = vpop.permute.xlu0 %147
    %149 = vset.pattern.permute.xlu0 0
    %150 = vperm.xlu0 %149, %v78
    %v151 = vpop.permute.xlu0 %150
    %152 = vset.pattern.permute.xlu0 0
    %153 = vperm.xlu0 %152, %v79
    %v154 = vpop.permute.xlu0 %153
    %155 = vset.pattern.permute.xlu0 0
    %156 = vperm.xlu0 %155, %v80
    %v157 = vpop.permute.xlu0 %156
    %158 = vset.pattern.permute.xlu0 0
    %159 = vperm.xlu0 %158, %v81
    %v160 = vpop.permute.xlu0 %159
    %161 = vset.pattern.permute.xlu0 0
    %162 = vperm.xlu0 %161, %v82
    %v163 = vpop.permute.xlu0 %162
    %164 = vset.pattern.permute.xlu0 0
    %165 = vperm.xlu0 %164, %v83
    %v166 = vpop.permute.xlu0 %165
    %167 = vset.pattern.permute.xlu0 0
    %168 = vperm.xlu0 %167, %v84
    %v169 = vpop.permute.xlu0 %168
    %170 = vset.pattern.permute.xlu0 0
    %171 = vperm.xlu0 %170, %v85
    %v172 = vpop.permute.xlu0 %171
    %173 = vset.pattern.permute.xlu0 0
    %174 = vperm.xlu0 %173, %v86
    %v175 = vpop.permute.xlu0 %174
    %176 = vset.pattern.permute.xlu0 0
    %177 = vperm.xlu0 %176, %v87
    %v178 = vpop.permute.xlu0 %177
    %179 = vset.pattern.permute.xlu0 0
    %180 = vperm.xlu0 %179, %v88
    %v181 = vpop.permute.xlu0 %180
    %182 = vset.pattern.permute.xlu0 0
    %183 = vperm.xlu0 %182, %v89
    %v184 = vpop.permute.xlu0 %183
    %185 = vset.pattern.permute.xlu0 0
    %186 = vperm.xlu0 %185, %v90
    %v187 = vpop.permute.xlu0 %186
    %188 = vset.pattern.permute.xlu0 0
    %189 = vperm.xlu0 %188, %v91
    %v190 = vpop.permute.xlu0 %189
    %191 = vset.pattern.permute.xlu0 0
    %192 = vperm.xlu0 %191, %v92
    %v193 = vpop.permute.xlu0 %192
    %194 = vset.pattern.permute.xlu0 0
    %195 = vperm.xlu0 %194, %v93
    %v196 = vpop.permute.xlu0 %195
    %197 = vset.pattern.permute.xlu0 0
    %198 = vperm.xlu0 %197, %v94
    %v199 = vpop.permute.xlu0 %198
    %vm200 = vcmp.eq.s32.totalorder %v96, %v106
    %vm201 = vcmp.eq.s32.totalorder %v97, %v106
    %vm202 = vcmp.eq.s32.totalorder %v98, %v106
    %vm203 = vcmp.eq.s32.totalorder %v99, %v106
    %vm204 = vcmp.eq.s32.totalorder %v100, %v106
    %vm205 = vcmp.eq.s32.totalorder %v101, %v106
    %vm206 = vcmp.eq.s32.totalorder %v102, %v106
    %vm207 = vcmp.eq.s32.totalorder %v103, %v106
    %vm208 = vcmp.eq.s32.totalorder %v96, %v109
    %vm209 = vcmp.eq.s32.totalorder %v97, %v109
    %vm210 = vcmp.eq.s32.totalorder %v98, %v109
    %vm211 = vcmp.eq.s32.totalorder %v99, %v109
    %vm212 = vcmp.eq.s32.totalorder %v100, %v109
    %vm213 = vcmp.eq.s32.totalorder %v101, %v109
    %vm214 = vcmp.eq.s32.totalorder %v102, %v109
    %vm215 = vcmp.eq.s32.totalorder %v103, %v109
    %vm216 = vcmp.eq.s32.totalorder %v96, %v112
    %vm217 = vcmp.eq.s32.totalorder %v97, %v112
    %vm218 = vcmp.eq.s32.totalorder %v98, %v112
    %vm219 = vcmp.eq.s32.totalorder %v99, %v112
    %vm220 = vcmp.eq.s32.totalorder %v100, %v112
    %vm221 = vcmp.eq.s32.totalorder %v101, %v112
    %vm222 = vcmp.eq.s32.totalorder %v102, %v112
    %vm223 = vcmp.eq.s32.totalorder %v103, %v112
    %vm224 = vcmp.eq.s32.totalorder %v96, %v115
    %vm225 = vcmp.eq.s32.totalorder %v97, %v115
    %vm226 = vcmp.eq.s32.totalorder %v98, %v115
    %vm227 = vcmp.eq.s32.totalorder %v99, %v115
    %vm228 = vcmp.eq.s32.totalorder %v100, %v115
    %vm229 = vcmp.eq.s32.totalorder %v101, %v115
    %vm230 = vcmp.eq.s32.totalorder %v102, %v115
    %vm231 = vcmp.eq.s32.totalorder %v103, %v115
    %vm232 = vcmp.eq.s32.totalorder %v96, %v118
    %vm233 = vcmp.eq.s32.totalorder %v97, %v118
    %vm234 = vcmp.eq.s32.totalorder %v98, %v118
    %vm235 = vcmp.eq.s32.totalorder %v99, %v118
    %vm236 = vcmp.eq.s32.totalorder %v100, %v118
    %vm237 = vcmp.eq.s32.totalorder %v101, %v118
    %vm238 = vcmp.eq.s32.totalorder %v102, %v118
    %vm239 = vcmp.eq.s32.totalorder %v103, %v118
    %vm240 = vcmp.eq.s32.totalorder %v96, %v121
    %vm241 = vcmp.eq.s32.totalorder %v97, %v121
    %vm242 = vcmp.eq.s32.totalorder %v98, %v121
    %vm243 = vcmp.eq.s32.totalorder %v99, %v121
    %vm244 = vcmp.eq.s32.totalorder %v100, %v121
    %vm245 = vcmp.eq.s32.totalorder %v101, %v121
    %vm246 = vcmp.eq.s32.totalorder %v102, %v121
    %vm247 = vcmp.eq.s32.totalorder %v103, %v121
    %vm248 = vcmp.eq.s32.totalorder %v96, %v124
    %vm249 = vcmp.eq.s32.totalorder %v97, %v124
    %vm250 = vcmp.eq.s32.totalorder %v98, %v124
    %vm251 = vcmp.eq.s32.totalorder %v99, %v124
    %vm252 = vcmp.eq.s32.totalorder %v100, %v124
    %vm253 = vcmp.eq.s32.totalorder %v101, %v124
    %vm254 = vcmp.eq.s32.totalorder %v102, %v124
    %vm255 = vcmp.eq.s32.totalorder %v103, %v124
    %vm256 = vcmp.eq.s32.totalorder %v96, %v127
    %vm257 = vcmp.eq.s32.totalorder %v97, %v127
    %vm258 = vcmp.eq.s32.totalorder %v98, %v127
    %vm259 = vcmp.eq.s32.totalorder %v99, %v127
    %vm260 = vcmp.eq.s32.totalorder %v100, %v127
    %vm261 = vcmp.eq.s32.totalorder %v101, %v127
    %vm262 = vcmp.eq.s32.totalorder %v102, %v127
    %vm263 = vcmp.eq.s32.totalorder %v103, %v127
    %vm264 = vcmp.eq.s32.totalorder %v96, %v130
    %vm265 = vcmp.eq.s32.totalorder %v97, %v130
    %vm266 = vcmp.eq.s32.totalorder %v98, %v130
    %vm267 = vcmp.eq.s32.totalorder %v99, %v130
    %vm268 = vcmp.eq.s32.totalorder %v100, %v130
    %vm269 = vcmp.eq.s32.totalorder %v101, %v130
    %vm270 = vcmp.eq.s32.totalorder %v102, %v130
    %vm271 = vcmp.eq.s32.totalorder %v103, %v130
    %vm272 = vcmp.eq.s32.totalorder %v96, %v133
    %vm273 = vcmp.eq.s32.totalorder %v97, %v133
    %vm274 = vcmp.eq.s32.totalorder %v98, %v133
    %vm275 = vcmp.eq.s32.totalorder %v99, %v133
    %vm276 = vcmp.eq.s32.totalorder %v100, %v133
    %vm277 = vcmp.eq.s32.totalorder %v101, %v133
    %vm278 = vcmp.eq.s32.totalorder %v102, %v133
    %vm279 = vcmp.eq.s32.totalorder %v103, %v133
    %vm280 = vcmp.eq.s32.totalorder %v96, %v136
    %vm281 = vcmp.eq.s32.totalorder %v97, %v136
    %vm282 = vcmp.eq.s32.totalorder %v98, %v136
    %vm283 = vcmp.eq.s32.totalorder %v99, %v136
    %vm284 = vcmp.eq.s32.totalorder %v100, %v136
    %vm285 = vcmp.eq.s32.totalorder %v101, %v136
    %vm286 = vcmp.eq.s32.totalorder %v102, %v136
    %vm287 = vcmp.eq.s32.totalorder %v103, %v136
    %vm288 = vcmp.eq.s32.totalorder %v96, %v139
    %vm289 = vcmp.eq.s32.totalorder %v97, %v139
    %vm290 = vcmp.eq.s32.totalorder %v98, %v139
    %vm291 = vcmp.eq.s32.totalorder %v99, %v139
    %vm292 = vcmp.eq.s32.totalorder %v100, %v139
    %vm293 = vcmp.eq.s32.totalorder %v101, %v139
    %vm294 = vcmp.eq.s32.totalorder %v102, %v139
    %vm295 = vcmp.eq.s32.totalorder %v103, %v139
    %vm296 = vcmp.eq.s32.totalorder %v96, %v142
    %vm297 = vcmp.eq.s32.totalorder %v97, %v142
    %vm298 = vcmp.eq.s32.totalorder %v98, %v142
    %vm299 = vcmp.eq.s32.totalorder %v99, %v142
    %vm300 = vcmp.eq.s32.totalorder %v100, %v142
    %vm301 = vcmp.eq.s32.totalorder %v101, %v142
    %vm302 = vcmp.eq.s32.totalorder %v102, %v142
    %vm303 = vcmp.eq.s32.totalorder %v103, %v142
    %vm304 = vcmp.eq.s32.totalorder %v96, %v145
    %vm305 = vcmp.eq.s32.totalorder %v97, %v145
    %vm306 = vcmp.eq.s32.totalorder %v98, %v145
    %vm307 = vcmp.eq.s32.totalorder %v99, %v145
    %vm308 = vcmp.eq.s32.totalorder %v100, %v145
    %vm309 = vcmp.eq.s32.totalorder %v101, %v145
    %vm310 = vcmp.eq.s32.totalorder %v102, %v145
    %vm311 = vcmp.eq.s32.totalorder %v103, %v145
    %vm312 = vcmp.eq.s32.totalorder %v96, %v148
    %vm313 = vcmp.eq.s32.totalorder %v97, %v148
    %vm314 = vcmp.eq.s32.totalorder %v98, %v148
    %vm315 = vcmp.eq.s32.totalorder %v99, %v148
    %vm316 = vcmp.eq.s32.totalorder %v100, %v148
    %vm317 = vcmp.eq.s32.totalorder %v101, %v148
    %vm318 = vcmp.eq.s32.totalorder %v102, %v148
    %vm319 = vcmp.eq.s32.totalorder %v103, %v148
    %vm320 = vcmp.eq.s32.totalorder %v96, %v151
    %vm321 = vcmp.eq.s32.totalorder %v97, %v151
    %vm322 = vcmp.eq.s32.totalorder %v98, %v151
    %vm323 = vcmp.eq.s32.totalorder %v99, %v151
    %vm324 = vcmp.eq.s32.totalorder %v100, %v151
    %vm325 = vcmp.eq.s32.totalorder %v101, %v151
    %vm326 = vcmp.eq.s32.totalorder %v102, %v151
    %vm327 = vcmp.eq.s32.totalorder %v103, %v151
    %vm328 = vcmp.eq.s32.totalorder %v96, %v154
    %vm329 = vcmp.eq.s32.totalorder %v97, %v154
    %vm330 = vcmp.eq.s32.totalorder %v98, %v154
    %vm331 = vcmp.eq.s32.totalorder %v99, %v154
    %vm332 = vcmp.eq.s32.totalorder %v100, %v154
    %vm333 = vcmp.eq.s32.totalorder %v101, %v154
    %vm334 = vcmp.eq.s32.totalorder %v102, %v154
    %vm335 = vcmp.eq.s32.totalorder %v103, %v154
    %vm336 = vcmp.eq.s32.totalorder %v96, %v157
    %vm337 = vcmp.eq.s32.totalorder %v97, %v157
    %vm338 = vcmp.eq.s32.totalorder %v98, %v157
    %vm339 = vcmp.eq.s32.totalorder %v99, %v157
    %vm340 = vcmp.eq.s32.totalorder %v100, %v157
    %vm341 = vcmp.eq.s32.totalorder %v101, %v157
    %vm342 = vcmp.eq.s32.totalorder %v102, %v157
    %vm343 = vcmp.eq.s32.totalorder %v103, %v157
    %vm344 = vcmp.eq.s32.totalorder %v96, %v160
    %vm345 = vcmp.eq.s32.totalorder %v97, %v160
    %vm346 = vcmp.eq.s32.totalorder %v98, %v160
    %vm347 = vcmp.eq.s32.totalorder %v99, %v160
    %vm348 = vcmp.eq.s32.totalorder %v100, %v160
    %vm349 = vcmp.eq.s32.totalorder %v101, %v160
    %vm350 = vcmp.eq.s32.totalorder %v102, %v160
    %vm351 = vcmp.eq.s32.totalorder %v103, %v160
    %vm352 = vcmp.eq.s32.totalorder %v96, %v163
    %vm353 = vcmp.eq.s32.totalorder %v97, %v163
    %vm354 = vcmp.eq.s32.totalorder %v98, %v163
    %vm355 = vcmp.eq.s32.totalorder %v99, %v163
    %vm356 = vcmp.eq.s32.totalorder %v100, %v163
    %vm357 = vcmp.eq.s32.totalorder %v101, %v163
    %vm358 = vcmp.eq.s32.totalorder %v102, %v163
    %vm359 = vcmp.eq.s32.totalorder %v103, %v163
    %vm360 = vcmp.eq.s32.totalorder %v96, %v166
    %vm361 = vcmp.eq.s32.totalorder %v97, %v166
    %vm362 = vcmp.eq.s32.totalorder %v98, %v166
    %vm363 = vcmp.eq.s32.totalorder %v99, %v166
    %vm364 = vcmp.eq.s32.totalorder %v100, %v166
    %vm365 = vcmp.eq.s32.totalorder %v101, %v166
    %vm366 = vcmp.eq.s32.totalorder %v102, %v166
    %vm367 = vcmp.eq.s32.totalorder %v103, %v166
    %vm368 = vcmp.eq.s32.totalorder %v96, %v169
    %vm369 = vcmp.eq.s32.totalorder %v97, %v169
    %vm370 = vcmp.eq.s32.totalorder %v98, %v169
    %vm371 = vcmp.eq.s32.totalorder %v99, %v169
    %vm372 = vcmp.eq.s32.totalorder %v100, %v169
    %vm373 = vcmp.eq.s32.totalorder %v101, %v169
    %vm374 = vcmp.eq.s32.totalorder %v102, %v169
    %vm375 = vcmp.eq.s32.totalorder %v103, %v169
    %vm376 = vcmp.eq.s32.totalorder %v96, %v172
    %vm377 = vcmp.eq.s32.totalorder %v97, %v172
    %vm378 = vcmp.eq.s32.totalorder %v98, %v172
    %vm379 = vcmp.eq.s32.totalorder %v99, %v172
    %vm380 = vcmp.eq.s32.totalorder %v100, %v172
    %vm381 = vcmp.eq.s32.totalorder %v101, %v172
    %vm382 = vcmp.eq.s32.totalorder %v102, %v172
    %vm383 = vcmp.eq.s32.totalorder %v103, %v172
    %vm384 = vcmp.eq.s32.totalorder %v96, %v175
    %vm385 = vcmp.eq.s32.totalorder %v97, %v175
    %vm386 = vcmp.eq.s32.totalorder %v98, %v175
    %vm387 = vcmp.eq.s32.totalorder %v99, %v175
    %vm388 = vcmp.eq.s32.totalorder %v100, %v175
    %vm389 = vcmp.eq.s32.totalorder %v101, %v175
    %vm390 = vcmp.eq.s32.totalorder %v102, %v175
    %vm391 = vcmp.eq.s32.totalorder %v103, %v175
    %vm392 = vcmp.eq.s32.totalorder %v96, %v178
    %vm393 = vcmp.eq.s32.totalorder %v97, %v178
    %vm394 = vcmp.eq.s32.totalorder %v98, %v178
    %vm395 = vcmp.eq.s32.totalorder %v99, %v178
    %vm396 = vcmp.eq.s32.totalorder %v100, %v178
    %vm397 = vcmp.eq.s32.totalorder %v101, %v178
    %vm398 = vcmp.eq.s32.totalorder %v102, %v178
    %vm399 = vcmp.eq.s32.totalorder %v103, %v178
    %vm400 = vcmp.eq.s32.totalorder %v96, %v181
    %vm401 = vcmp.eq.s32.totalorder %v97, %v181
    %vm402 = vcmp.eq.s32.totalorder %v98, %v181
    %vm403 = vcmp.eq.s32.totalorder %v99, %v181
    %vm404 = vcmp.eq.s32.totalorder %v100, %v181
    %vm405 = vcmp.eq.s32.totalorder %v101, %v181
    %vm406 = vcmp.eq.s32.totalorder %v102, %v181
    %vm407 = vcmp.eq.s32.totalorder %v103, %v181
    %vm408 = vcmp.eq.s32.totalorder %v96, %v184
    %vm409 = vcmp.eq.s32.totalorder %v97, %v184
    %vm410 = vcmp.eq.s32.totalorder %v98, %v184
    %vm411 = vcmp.eq.s32.totalorder %v99, %v184
    %vm412 = vcmp.eq.s32.totalorder %v100, %v184
    %vm413 = vcmp.eq.s32.totalorder %v101, %v184
    %vm414 = vcmp.eq.s32.totalorder %v102, %v184
    %vm415 = vcmp.eq.s32.totalorder %v103, %v184
    %vm416 = vcmp.eq.s32.totalorder %v96, %v187
    %vm417 = vcmp.eq.s32.totalorder %v97, %v187
    %vm418 = vcmp.eq.s32.totalorder %v98, %v187
    %vm419 = vcmp.eq.s32.totalorder %v99, %v187
    %vm420 = vcmp.eq.s32.totalorder %v100, %v187
    %vm421 = vcmp.eq.s32.totalorder %v101, %v187
    %vm422 = vcmp.eq.s32.totalorder %v102, %v187
    %vm423 = vcmp.eq.s32.totalorder %v103, %v187
    %vm424 = vcmp.eq.s32.totalorder %v96, %v190
    %vm425 = vcmp.eq.s32.totalorder %v97, %v190
    %vm426 = vcmp.eq.s32.totalorder %v98, %v190
    %vm427 = vcmp.eq.s32.totalorder %v99, %v190
    %vm428 = vcmp.eq.s32.totalorder %v100, %v190
    %vm429 = vcmp.eq.s32.totalorder %v101, %v190
    %vm430 = vcmp.eq.s32.totalorder %v102, %v190
    %vm431 = vcmp.eq.s32.totalorder %v103, %v190
    %vm432 = vcmp.eq.s32.totalorder %v96, %v193
    %vm433 = vcmp.eq.s32.totalorder %v97, %v193
    %vm434 = vcmp.eq.s32.totalorder %v98, %v193
    %vm435 = vcmp.eq.s32.totalorder %v99, %v193
    %vm436 = vcmp.eq.s32.totalorder %v100, %v193
    %vm437 = vcmp.eq.s32.totalorder %v101, %v193
    %vm438 = vcmp.eq.s32.totalorder %v102, %v193
    %vm439 = vcmp.eq.s32.totalorder %v103, %v193
    %vm440 = vcmp.eq.s32.totalorder %v96, %v196
    %vm441 = vcmp.eq.s32.totalorder %v97, %v196
    %vm442 = vcmp.eq.s32.totalorder %v98, %v196
    %vm443 = vcmp.eq.s32.totalorder %v99, %v196
    %vm444 = vcmp.eq.s32.totalorder %v100, %v196
    %vm445 = vcmp.eq.s32.totalorder %v101, %v196
    %vm446 = vcmp.eq.s32.totalorder %v102, %v196
    %vm447 = vcmp.eq.s32.totalorder %v103, %v196
    %vm448 = vcmp.eq.s32.totalorder %v96, %v199
    %vm449 = vcmp.eq.s32.totalorder %v97, %v199
    %vm450 = vcmp.eq.s32.totalorder %v98, %v199
    %vm451 = vcmp.eq.s32.totalorder %v99, %v199
    %vm452 = vcmp.eq.s32.totalorder %v100, %v199
    %vm453 = vcmp.eq.s32.totalorder %v101, %v199
    %vm454 = vcmp.eq.s32.totalorder %v102, %v199
    %vm455 = vcmp.eq.s32.totalorder %v103, %v199
    %v456 = vsel %vm200, 1, 0
    %v457 = vsel %vm201, 1, 0
    %v458 = vsel %vm202, 1, 0
    %v459 = vsel %vm203, 1, 0
    %v460 = vsel %vm204, 1, 0
    %v461 = vsel %vm205, 1, 0
    %v462 = vsel %vm206, 1, 0
    %v463 = vsel %vm207, 1, 0
    %v464 = vsel %vm208, 1, 0
    %v465 = vsel %vm209, 1, 0
    %v466 = vsel %vm210, 1, 0
    %v467 = vsel %vm211, 1, 0
    %v468 = vsel %vm212, 1, 0
    %v469 = vsel %vm213, 1, 0
    %v470 = vsel %vm214, 1, 0
    %v471 = vsel %vm215, 1, 0
    %v472 = vsel %vm216, 1, 0
    %v473 = vsel %vm217, 1, 0
    %v474 = vsel %vm218, 1, 0
    %v475 = vsel %vm219, 1, 0
    %v476 = vsel %vm220, 1, 0
    %v477 = vsel %vm221, 1, 0
    %v478 = vsel %vm222, 1, 0
    %v479 = vsel %vm223, 1, 0
    %v480 = vsel %vm224, 1, 0
    %v481 = vsel %vm225, 1, 0
    %v482 = vsel %vm226, 1, 0
    %v483 = vsel %vm227, 1, 0
    %v484 = vsel %vm228, 1, 0
    %v485 = vsel %vm229, 1, 0
    %v486 = vsel %vm230, 1, 0
    %v487 = vsel %vm231, 1, 0
    %v488 = vsel %vm232, 1, 0
    %v489 = vsel %vm233, 1, 0
    %v490 = vsel %vm234, 1, 0
    %v491 = vsel %vm235, 1, 0
    %v492 = vsel %vm236, 1, 0
    %v493 = vsel %vm237, 1, 0
    %v494 = vsel %vm238, 1, 0
    %v495 = vsel %vm239, 1, 0
    %v496 = vsel %vm240, 1, 0
    %v497 = vsel %vm241, 1, 0
    %v498 = vsel %vm242, 1, 0
    %v499 = vsel %vm243, 1, 0
    %v500 = vsel %vm244, 1, 0
    %v501 = vsel %vm245, 1, 0
    %v502 = vsel %vm246, 1, 0
    %v503 = vsel %vm247, 1, 0
    %v504 = vsel %vm248, 1, 0
    %v505 = vsel %vm249, 1, 0
    %v506 = vsel %vm250, 1, 0
    %v507 = vsel %vm251, 1, 0
    %v508 = vsel %vm252, 1, 0
    %v509 = vsel %vm253, 1, 0
    %v510 = vsel %vm254, 1, 0
    %v511 = vsel %vm255, 1, 0
    %v512 = vsel %vm256, 1, 0
    %v513 = vsel %vm257, 1, 0
    %v514 = vsel %vm258, 1, 0
    %v515 = vsel %vm259, 1, 0
    %v516 = vsel %vm260, 1, 0
    %v517 = vsel %vm261, 1, 0
    %v518 = vsel %vm262, 1, 0
    %v519 = vsel %vm263, 1, 0
    %v520 = vsel %vm264, 1, 0
    %v521 = vsel %vm265, 1, 0
    %v522 = vsel %vm266, 1, 0
    %v523 = vsel %vm267, 1, 0
    %v524 = vsel %vm268, 1, 0
    %v525 = vsel %vm269, 1, 0
    %v526 = vsel %vm270, 1, 0
    %v527 = vsel %vm271, 1, 0
    %v528 = vsel %vm272, 1, 0
    %v529 = vsel %vm273, 1, 0
    %v530 = vsel %vm274, 1, 0
    %v531 = vsel %vm275, 1, 0
    %v532 = vsel %vm276, 1, 0
    %v533 = vsel %vm277, 1, 0
    %v534 = vsel %vm278, 1, 0
    %v535 = vsel %vm279, 1, 0
    %v536 = vsel %vm280, 1, 0
    %v537 = vsel %vm281, 1, 0
    %v538 = vsel %vm282, 1, 0
    %v539 = vsel %vm283, 1, 0
    %v540 = vsel %vm284, 1, 0
    %v541 = vsel %vm285, 1, 0
    %v542 = vsel %vm286, 1, 0
    %v543 = vsel %vm287, 1, 0
    %v544 = vsel %vm288, 1, 0
    %v545 = vsel %vm289, 1, 0
    %v546 = vsel %vm290, 1, 0
    %v547 = vsel %vm291, 1, 0
    %v548 = vsel %vm292, 1, 0
    %v549 = vsel %vm293, 1, 0
    %v550 = vsel %vm294, 1, 0
    %v551 = vsel %vm295, 1, 0
    %v552 = vsel %vm296, 1, 0
    %v553 = vsel %vm297, 1, 0
    %v554 = vsel %vm298, 1, 0
    %v555 = vsel %vm299, 1, 0
    %v556 = vsel %vm300, 1, 0
    %v557 = vsel %vm301, 1, 0
    %v558 = vsel %vm302, 1, 0
    %v559 = vsel %vm303, 1, 0
    %v560 = vsel %vm304, 1, 0
    %v561 = vsel %vm305, 1, 0
    %v562 = vsel %vm306, 1, 0
    %v563 = vsel %vm307, 1, 0
    %v564 = vsel %vm308, 1, 0
    %v565 = vsel %vm309, 1, 0
    %v566 = vsel %vm310, 1, 0
    %v567 = vsel %vm311, 1, 0
    %v568 = vsel %vm312, 1, 0
    %v569 = vsel %vm313, 1, 0
    %v570 = vsel %vm314, 1, 0
    %v571 = vsel %vm315, 1, 0
    %v572 = vsel %vm316, 1, 0
    %v573 = vsel %vm317, 1, 0
    %v574 = vsel %vm318, 1, 0
    %v575 = vsel %vm319, 1, 0
    %v576 = vsel %vm320, 1, 0
    %v577 = vsel %vm321, 1, 0
    %v578 = vsel %vm322, 1, 0
    %v579 = vsel %vm323, 1, 0
    %v580 = vsel %vm324, 1, 0
    %v581 = vsel %vm325, 1, 0
    %v582 = vsel %vm326, 1, 0
    %v583 = vsel %vm327, 1, 0
    %v584 = vsel %vm328, 1, 0
    %v585 = vsel %vm329, 1, 0
    %v586 = vsel %vm330, 1, 0
    %v587 = vsel %vm331, 1, 0
    %v588 = vsel %vm332, 1, 0
    %v589 = vsel %vm333, 1, 0
    %v590 = vsel %vm334, 1, 0
    %v591 = vsel %vm335, 1, 0
    %v592 = vsel %vm336, 1, 0
    %v593 = vsel %vm337, 1, 0
    %v594 = vsel %vm338, 1, 0
    %v595 = vsel %vm339, 1, 0
    %v596 = vsel %vm340, 1, 0
    %v597 = vsel %vm341, 1, 0
    %v598 = vsel %vm342, 1, 0
    %v599 = vsel %vm343, 1, 0
    %v600 = vsel %vm344, 1, 0
    %v601 = vsel %vm345, 1, 0
    %v602 = vsel %vm346, 1, 0
    %v603 = vsel %vm347, 1, 0
    %v604 = vsel %vm348, 1, 0
    %v605 = vsel %vm349, 1, 0
    %v606 = vsel %vm350, 1, 0
    %v607 = vsel %vm351, 1, 0
    %v608 = vsel %vm352, 1, 0
    %v609 = vsel %vm353, 1, 0
    %v610 = vsel %vm354, 1, 0
    %v611 = vsel %vm355, 1, 0
    %v612 = vsel %vm356, 1, 0
    %v613 = vsel %vm357, 1, 0
    %v614 = vsel %vm358, 1, 0
    %v615 = vsel %vm359, 1, 0
    %v616 = vsel %vm360, 1, 0
    %v617 = vsel %vm361, 1, 0
    %v618 = vsel %vm362, 1, 0
    %v619 = vsel %vm363, 1, 0
    %v620 = vsel %vm364, 1, 0
    %v621 = vsel %vm365, 1, 0
    %v622 = vsel %vm366, 1, 0
    %v623 = vsel %vm367, 1, 0
    %v624 = vsel %vm368, 1, 0
    %v625 = vsel %vm369, 1, 0
    %v626 = vsel %vm370, 1, 0
    %v627 = vsel %vm371, 1, 0
    %v628 = vsel %vm372, 1, 0
    %v629 = vsel %vm373, 1, 0
    %v630 = vsel %vm374, 1, 0
    %v631 = vsel %vm375, 1, 0
    %v632 = vsel %vm376, 1, 0
    %v633 = vsel %vm377, 1, 0
    %v634 = vsel %vm378, 1, 0
    %v635 = vsel %vm379, 1, 0
    %v636 = vsel %vm380, 1, 0
    %v637 = vsel %vm381, 1, 0
    %v638 = vsel %vm382, 1, 0
    %v639 = vsel %vm383, 1, 0
    %v640 = vsel %vm384, 1, 0
    %v641 = vsel %vm385, 1, 0
    %v642 = vsel %vm386, 1, 0
    %v643 = vsel %vm387, 1, 0
    %v644 = vsel %vm388, 1, 0
    %v645 = vsel %vm389, 1, 0
    %v646 = vsel %vm390, 1, 0
    %v647 = vsel %vm391, 1, 0
    %v648 = vsel %vm392, 1, 0
    %v649 = vsel %vm393, 1, 0
    %v650 = vsel %vm394, 1, 0
    %v651 = vsel %vm395, 1, 0
    %v652 = vsel %vm396, 1, 0
    %v653 = vsel %vm397, 1, 0
    %v654 = vsel %vm398, 1, 0
    %v655 = vsel %vm399, 1, 0
    %v656 = vsel %vm400, 1, 0
    %v657 = vsel %vm401, 1, 0
    %v658 = vsel %vm402, 1, 0
    %v659 = vsel %vm403, 1, 0
    %v660 = vsel %vm404, 1, 0
    %v661 = vsel %vm405, 1, 0
    %v662 = vsel %vm406, 1, 0
    %v663 = vsel %vm407, 1, 0
    %v664 = vsel %vm408, 1, 0
    %v665 = vsel %vm409, 1, 0
    %v666 = vsel %vm410, 1, 0
    %v667 = vsel %vm411, 1, 0
    %v668 = vsel %vm412, 1, 0
    %v669 = vsel %vm413, 1, 0
    %v670 = vsel %vm414, 1, 0
    %v671 = vsel %vm415, 1, 0
    %v672 = vsel %vm416, 1, 0
    %v673 = vsel %vm417, 1, 0
    %v674 = vsel %vm418, 1, 0
    %v675 = vsel %vm419, 1, 0
    %v676 = vsel %vm420, 1, 0
    %v677 = vsel %vm421, 1, 0
    %v678 = vsel %vm422, 1, 0
    %v679 = vsel %vm423, 1, 0
    %v680 = vsel %vm424, 1, 0
    %v681 = vsel %vm425, 1, 0
    %v682 = vsel %vm426, 1, 0
    %v683 = vsel %vm427, 1, 0
    %v684 = vsel %vm428, 1, 0
    %v685 = vsel %vm429, 1, 0
    %v686 = vsel %vm430, 1, 0
    %v687 = vsel %vm431, 1, 0
    %v688 = vsel %vm432, 1, 0
    %v689 = vsel %vm433, 1, 0
    %v690 = vsel %vm434, 1, 0
    %v691 = vsel %vm435, 1, 0
    %v692 = vsel %vm436, 1, 0
    %v693 = vsel %vm437, 1, 0
    %v694 = vsel %vm438, 1, 0
    %v695 = vsel %vm439, 1, 0
    %v696 = vsel %vm440, 1, 0
    %v697 = vsel %vm441, 1, 0
    %v698 = vsel %vm442, 1, 0
    %v699 = vsel %vm443, 1, 0
    %v700 = vsel %vm444, 1, 0
    %v701 = vsel %vm445, 1, 0
    %v702 = vsel %vm446, 1, 0
    %v703 = vsel %vm447, 1, 0
    %v704 = vsel %vm448, 1, 0
    %v705 = vsel %vm449, 1, 0
    %v706 = vsel %vm450, 1, 0
    %v707 = vsel %vm451, 1, 0
    %v708 = vsel %vm452, 1, 0
    %v709 = vsel %vm453, 1, 0
    %v710 = vsel %vm454, 1, 0
    %v711 = vsel %vm455, 1, 0
    %v712 = vcvt.s32.f32 %v456
    %v713 = vcvt.s32.f32 %v457
    %v714 = vcvt.s32.f32 %v458
    %v715 = vcvt.s32.f32 %v459
    %v716 = vcvt.s32.f32 %v460
    %v717 = vcvt.s32.f32 %v461
    %v718 = vcvt.s32.f32 %v462
    %v719 = vcvt.s32.f32 %v463
    %v720 = vcvt.s32.f32 %v464
    %v721 = vcvt.s32.f32 %v465
    %v722 = vcvt.s32.f32 %v466
    %v723 = vcvt.s32.f32 %v467
    %v724 = vcvt.s32.f32 %v468
    %v725 = vcvt.s32.f32 %v469
    %v726 = vcvt.s32.f32 %v470
    %v727 = vcvt.s32.f32 %v471
    %v728 = vcvt.s32.f32 %v472
    %v729 = vcvt.s32.f32 %v473
    %v730 = vcvt.s32.f32 %v474
    %v731 = vcvt.s32.f32 %v475
    %v732 = vcvt.s32.f32 %v476
    %v733 = vcvt.s32.f32 %v477
    %v734 = vcvt.s32.f32 %v478
    %v735 = vcvt.s32.f32 %v479
    %v736 = vcvt.s32.f32 %v480
    %v737 = vcvt.s32.f32 %v481
    %v738 = vcvt.s32.f32 %v482
    %v739 = vcvt.s32.f32 %v483
    %v740 = vcvt.s32.f32 %v484
    %v741 = vcvt.s32.f32 %v485
    %v742 = vcvt.s32.f32 %v486
    %v743 = vcvt.s32.f32 %v487
    %v744 = vcvt.s32.f32 %v488
    %v745 = vcvt.s32.f32 %v489
    %v746 = vcvt.s32.f32 %v490
    %v747 = vcvt.s32.f32 %v491
    %v748 = vcvt.s32.f32 %v492
    %v749 = vcvt.s32.f32 %v493
    %v750 = vcvt.s32.f32 %v494
    %v751 = vcvt.s32.f32 %v495
    %v752 = vcvt.s32.f32 %v496
    %v753 = vcvt.s32.f32 %v497
    %v754 = vcvt.s32.f32 %v498
    %v755 = vcvt.s32.f32 %v499
    %v756 = vcvt.s32.f32 %v500
    %v757 = vcvt.s32.f32 %v501
    %v758 = vcvt.s32.f32 %v502
    %v759 = vcvt.s32.f32 %v503
    %v760 = vcvt.s32.f32 %v504
    %v761 = vcvt.s32.f32 %v505
    %v762 = vcvt.s32.f32 %v506
    %v763 = vcvt.s32.f32 %v507
    %v764 = vcvt.s32.f32 %v508
    %v765 = vcvt.s32.f32 %v509
    %v766 = vcvt.s32.f32 %v510
    %v767 = vcvt.s32.f32 %v511
    %v768 = vcvt.s32.f32 %v512
    %v769 = vcvt.s32.f32 %v513
    %v770 = vcvt.s32.f32 %v514
    %v771 = vcvt.s32.f32 %v515
    %v772 = vcvt.s32.f32 %v516
    %v773 = vcvt.s32.f32 %v517
    %v774 = vcvt.s32.f32 %v518
    %v775 = vcvt.s32.f32 %v519
    %v776 = vcvt.s32.f32 %v520
    %v777 = vcvt.s32.f32 %v521
    %v778 = vcvt.s32.f32 %v522
    %v779 = vcvt.s32.f32 %v523
    %v780 = vcvt.s32.f32 %v524
    %v781 = vcvt.s32.f32 %v525
    %v782 = vcvt.s32.f32 %v526
    %v783 = vcvt.s32.f32 %v527
    %v784 = vcvt.s32.f32 %v528
    %v785 = vcvt.s32.f32 %v529
    %v786 = vcvt.s32.f32 %v530
    %v787 = vcvt.s32.f32 %v531
    %v788 = vcvt.s32.f32 %v532
    %v789 = vcvt.s32.f32 %v533
    %v790 = vcvt.s32.f32 %v534
    %v791 = vcvt.s32.f32 %v535
    %v792 = vcvt.s32.f32 %v536
    %v793 = vcvt.s32.f32 %v537
    %v794 = vcvt.s32.f32 %v538
    %v795 = vcvt.s32.f32 %v539
    %v796 = vcvt.s32.f32 %v540
    %v797 = vcvt.s32.f32 %v541
    %v798 = vcvt.s32.f32 %v542
    %v799 = vcvt.s32.f32 %v543
    %v800 = vcvt.s32.f32 %v544
    %v801 = vcvt.s32.f32 %v545
    %v802 = vcvt.s32.f32 %v546
    %v803 = vcvt.s32.f32 %v547
    %v804 = vcvt.s32.f32 %v548
    %v805 = vcvt.s32.f32 %v549
    %v806 = vcvt.s32.f32 %v550
    %v807 = vcvt.s32.f32 %v551
    %v808 = vcvt.s32.f32 %v552
    %v809 = vcvt.s32.f32 %v553
    %v810 = vcvt.s32.f32 %v554
    %v811 = vcvt.s32.f32 %v555
    %v812 = vcvt.s32.f32 %v556
    %v813 = vcvt.s32.f32 %v557
    %v814 = vcvt.s32.f32 %v558
    %v815 = vcvt.s32.f32 %v559
    %v816 = vcvt.s32.f32 %v560
    %v817 = vcvt.s32.f32 %v561
    %v818 = vcvt.s32.f32 %v562
    %v819 = vcvt.s32.f32 %v563
    %v820 = vcvt.s32.f32 %v564
    %v821 = vcvt.s32.f32 %v565
    %v822 = vcvt.s32.f32 %v566
    %v823 = vcvt.s32.f32 %v567
    %v824 = vcvt.s32.f32 %v568
    %v825 = vcvt.s32.f32 %v569
    %v826 = vcvt.s32.f32 %v570
    %v827 = vcvt.s32.f32 %v571
    %v828 = vcvt.s32.f32 %v572
    %v829 = vcvt.s32.f32 %v573
    %v830 = vcvt.s32.f32 %v574
    %v831 = vcvt.s32.f32 %v575
    %v832 = vcvt.s32.f32 %v576
    %v833 = vcvt.s32.f32 %v577
    %v834 = vcvt.s32.f32 %v578
    %v835 = vcvt.s32.f32 %v579
    %v836 = vcvt.s32.f32 %v580
    %v837 = vcvt.s32.f32 %v581
    %v838 = vcvt.s32.f32 %v582
    %v839 = vcvt.s32.f32 %v583
    %v840 = vcvt.s32.f32 %v584
    %v841 = vcvt.s32.f32 %v585
    %v842 = vcvt.s32.f32 %v586
    %v843 = vcvt.s32.f32 %v587
    %v844 = vcvt.s32.f32 %v588
    %v845 = vcvt.s32.f32 %v589
    %v846 = vcvt.s32.f32 %v590
    %v847 = vcvt.s32.f32 %v591
    %v848 = vcvt.s32.f32 %v592
    %v849 = vcvt.s32.f32 %v593
    %v850 = vcvt.s32.f32 %v594
    %v851 = vcvt.s32.f32 %v595
    %v852 = vcvt.s32.f32 %v596
    %v853 = vcvt.s32.f32 %v597
    %v854 = vcvt.s32.f32 %v598
    %v855 = vcvt.s32.f32 %v599
    %v856 = vcvt.s32.f32 %v600
    %v857 = vcvt.s32.f32 %v601
    %v858 = vcvt.s32.f32 %v602
    %v859 = vcvt.s32.f32 %v603
    %v860 = vcvt.s32.f32 %v604
    %v861 = vcvt.s32.f32 %v605
    %v862 = vcvt.s32.f32 %v606
    %v863 = vcvt.s32.f32 %v607
    %v864 = vcvt.s32.f32 %v608
    %v865 = vcvt.s32.f32 %v609
    %v866 = vcvt.s32.f32 %v610
    %v867 = vcvt.s32.f32 %v611
    %v868 = vcvt.s32.f32 %v612
    %v869 = vcvt.s32.f32 %v613
    %v870 = vcvt.s32.f32 %v614
    %v871 = vcvt.s32.f32 %v615
    %v872 = vcvt.s32.f32 %v616
    %v873 = vcvt.s32.f32 %v617
    %v874 = vcvt.s32.f32 %v618
    %v875 = vcvt.s32.f32 %v619
    %v876 = vcvt.s32.f32 %v620
    %v877 = vcvt.s32.f32 %v621
    %v878 = vcvt.s32.f32 %v622
    %v879 = vcvt.s32.f32 %v623
    %v880 = vcvt.s32.f32 %v624
    %v881 = vcvt.s32.f32 %v625
    %v882 = vcvt.s32.f32 %v626
    %v883 = vcvt.s32.f32 %v627
    %v884 = vcvt.s32.f32 %v628
    %v885 = vcvt.s32.f32 %v629
    %v886 = vcvt.s32.f32 %v630
    %v887 = vcvt.s32.f32 %v631
    %v888 = vcvt.s32.f32 %v632
    %v889 = vcvt.s32.f32 %v633
    %v890 = vcvt.s32.f32 %v634
    %v891 = vcvt.s32.f32 %v635
    %v892 = vcvt.s32.f32 %v636
    %v893 = vcvt.s32.f32 %v637
    %v894 = vcvt.s32.f32 %v638
    %v895 = vcvt.s32.f32 %v639
    %v896 = vcvt.s32.f32 %v640
    %v897 = vcvt.s32.f32 %v641
    %v898 = vcvt.s32.f32 %v642
    %v899 = vcvt.s32.f32 %v643
    %v900 = vcvt.s32.f32 %v644
    %v901 = vcvt.s32.f32 %v645
    %v902 = vcvt.s32.f32 %v646
    %v903 = vcvt.s32.f32 %v647
    %v904 = vcvt.s32.f32 %v648
    %v905 = vcvt.s32.f32 %v649
    %v906 = vcvt.s32.f32 %v650
    %v907 = vcvt.s32.f32 %v651
    %v908 = vcvt.s32.f32 %v652
    %v909 = vcvt.s32.f32 %v653
    %v910 = vcvt.s32.f32 %v654
    %v911 = vcvt.s32.f32 %v655
    %v912 = vcvt.s32.f32 %v656
    %v913 = vcvt.s32.f32 %v657
    %v914 = vcvt.s32.f32 %v658
    %v915 = vcvt.s32.f32 %v659
    %v916 = vcvt.s32.f32 %v660
    %v917 = vcvt.s32.f32 %v661
    %v918 = vcvt.s32.f32 %v662
    %v919 = vcvt.s32.f32 %v663
    %v920 = vcvt.s32.f32 %v664
    %v921 = vcvt.s32.f32 %v665
    %v922 = vcvt.s32.f32 %v666
    %v923 = vcvt.s32.f32 %v667
    %v924 = vcvt.s32.f32 %v668
    %v925 = vcvt.s32.f32 %v669
    %v926 = vcvt.s32.f32 %v670
    %v927 = vcvt.s32.f32 %v671
    %v928 = vcvt.s32.f32 %v672
    %v929 = vcvt.s32.f32 %v673
    %v930 = vcvt.s32.f32 %v674
    %v931 = vcvt.s32.f32 %v675
    %v932 = vcvt.s32.f32 %v676
    %v933 = vcvt.s32.f32 %v677
    %v934 = vcvt.s32.f32 %v678
    %v935 = vcvt.s32.f32 %v679
    %v936 = vcvt.s32.f32 %v680
    %v937 = vcvt.s32.f32 %v681
    %v938 = vcvt.s32.f32 %v682
    %v939 = vcvt.s32.f32 %v683
    %v940 = vcvt.s32.f32 %v684
    %v941 = vcvt.s32.f32 %v685
    %v942 = vcvt.s32.f32 %v686
    %v943 = vcvt.s32.f32 %v687
    %v944 = vcvt.s32.f32 %v688
    %v945 = vcvt.s32.f32 %v689
    %v946 = vcvt.s32.f32 %v690
    %v947 = vcvt.s32.f32 %v691
    %v948 = vcvt.s32.f32 %v692
    %v949 = vcvt.s32.f32 %v693
    %v950 = vcvt.s32.f32 %v694
    %v951 = vcvt.s32.f32 %v695
    %v952 = vcvt.s32.f32 %v696
    %v953 = vcvt.s32.f32 %v697
    %v954 = vcvt.s32.f32 %v698
    %v955 = vcvt.s32.f32 %v699
    %v956 = vcvt.s32.f32 %v700
    %v957 = vcvt.s32.f32 %v701
    %v958 = vcvt.s32.f32 %v702
    %v959 = vcvt.s32.f32 %v703
    %v960 = vcvt.s32.f32 %v704
    %v961 = vcvt.s32.f32 %v705
    %v962 = vcvt.s32.f32 %v706
    %v963 = vcvt.s32.f32 %v707
    %v964 = vcvt.s32.f32 %v708
    %v965 = vcvt.s32.f32 %v709
    %v966 = vcvt.s32.f32 %v710
    %v967 = vcvt.s32.f32 %v711
    %v968 = vpack.c.bf16 %v720, %v712
    %v969 = vpack.c.bf16 %v721, %v713
    %v970 = vpack.c.bf16 %v722, %v714
    %v971 = vpack.c.bf16 %v723, %v715
    %v972 = vpack.c.bf16 %v724, %v716
    %v973 = vpack.c.bf16 %v725, %v717
    %v974 = vpack.c.bf16 %v726, %v718
    %v975 = vpack.c.bf16 %v727, %v719
    %v976 = vpack.c.bf16 %v736, %v728
    %v977 = vpack.c.bf16 %v737, %v729
    %v978 = vpack.c.bf16 %v738, %v730
    %v979 = vpack.c.bf16 %v739, %v731
    %v980 = vpack.c.bf16 %v740, %v732
    %v981 = vpack.c.bf16 %v741, %v733
    %v982 = vpack.c.bf16 %v742, %v734
    %v983 = vpack.c.bf16 %v743, %v735
    %v984 = vpack.c.bf16 %v752, %v744
    %v985 = vpack.c.bf16 %v753, %v745
    %v986 = vpack.c.bf16 %v754, %v746
    %v987 = vpack.c.bf16 %v755, %v747
    %v988 = vpack.c.bf16 %v756, %v748
    %v989 = vpack.c.bf16 %v757, %v749
    %v990 = vpack.c.bf16 %v758, %v750
    %v991 = vpack.c.bf16 %v759, %v751
    %v992 = vpack.c.bf16 %v768, %v760
    %v993 = vpack.c.bf16 %v769, %v761
    %v994 = vpack.c.bf16 %v770, %v762
    %v995 = vpack.c.bf16 %v771, %v763
    %v996 = vpack.c.bf16 %v772, %v764
    %v997 = vpack.c.bf16 %v773, %v765
    %v998 = vpack.c.bf16 %v774, %v766
    %v999 = vpack.c.bf16 %v775, %v767
    %v1000 = vpack.c.bf16 %v784, %v776
    %v1001 = vpack.c.bf16 %v785, %v777
    %v1002 = vpack.c.bf16 %v786, %v778
    %v1003 = vpack.c.bf16 %v787, %v779
    %v1004 = vpack.c.bf16 %v788, %v780
    %v1005 = vpack.c.bf16 %v789, %v781
    %v1006 = vpack.c.bf16 %v790, %v782
    %v1007 = vpack.c.bf16 %v791, %v783
    %v1008 = vpack.c.bf16 %v800, %v792
    %v1009 = vpack.c.bf16 %v801, %v793
    %v1010 = vpack.c.bf16 %v802, %v794
    %v1011 = vpack.c.bf16 %v803, %v795
    %v1012 = vpack.c.bf16 %v804, %v796
    %v1013 = vpack.c.bf16 %v805, %v797
    %v1014 = vpack.c.bf16 %v806, %v798
    %v1015 = vpack.c.bf16 %v807, %v799
    %v1016 = vpack.c.bf16 %v816, %v808
    %v1017 = vpack.c.bf16 %v817, %v809
    %v1018 = vpack.c.bf16 %v818, %v810
    %v1019 = vpack.c.bf16 %v819, %v811
    %v1020 = vpack.c.bf16 %v820, %v812
    %v1021 = vpack.c.bf16 %v821, %v813
    %v1022 = vpack.c.bf16 %v822, %v814
    %v1023 = vpack.c.bf16 %v823, %v815
    %v1024 = vpack.c.bf16 %v832, %v824
    %v1025 = vpack.c.bf16 %v833, %v825
    %v1026 = vpack.c.bf16 %v834, %v826
    %v1027 = vpack.c.bf16 %v835, %v827
    %v1028 = vpack.c.bf16 %v836, %v828
    %v1029 = vpack.c.bf16 %v837, %v829
    %v1030 = vpack.c.bf16 %v838, %v830
    %v1031 = vpack.c.bf16 %v839, %v831
    %v1032 = vpack.c.bf16 %v848, %v840
    %v1033 = vpack.c.bf16 %v849, %v841
    %v1034 = vpack.c.bf16 %v850, %v842
    %v1035 = vpack.c.bf16 %v851, %v843
    %v1036 = vpack.c.bf16 %v852, %v844
    %v1037 = vpack.c.bf16 %v853, %v845
    %v1038 = vpack.c.bf16 %v854, %v846
    %v1039 = vpack.c.bf16 %v855, %v847
    %v1040 = vpack.c.bf16 %v864, %v856
    %v1041 = vpack.c.bf16 %v865, %v857
    %v1042 = vpack.c.bf16 %v866, %v858
    %v1043 = vpack.c.bf16 %v867, %v859
    %v1044 = vpack.c.bf16 %v868, %v860
    %v1045 = vpack.c.bf16 %v869, %v861
    %v1046 = vpack.c.bf16 %v870, %v862
    %v1047 = vpack.c.bf16 %v871, %v863
    %v1048 = vpack.c.bf16 %v880, %v872
    %v1049 = vpack.c.bf16 %v881, %v873
    %v1050 = vpack.c.bf16 %v882, %v874
    %v1051 = vpack.c.bf16 %v883, %v875
    %v1052 = vpack.c.bf16 %v884, %v876
    %v1053 = vpack.c.bf16 %v885, %v877
    %v1054 = vpack.c.bf16 %v886, %v878
    %v1055 = vpack.c.bf16 %v887, %v879
    %v1056 = vpack.c.bf16 %v896, %v888
    %v1057 = vpack.c.bf16 %v897, %v889
    %v1058 = vpack.c.bf16 %v898, %v890
    %v1059 = vpack.c.bf16 %v899, %v891
    %v1060 = vpack.c.bf16 %v900, %v892
    %v1061 = vpack.c.bf16 %v901, %v893
    %v1062 = vpack.c.bf16 %v902, %v894
    %v1063 = vpack.c.bf16 %v903, %v895
    %v1064 = vpack.c.bf16 %v912, %v904
    %v1065 = vpack.c.bf16 %v913, %v905
    %v1066 = vpack.c.bf16 %v914, %v906
    %v1067 = vpack.c.bf16 %v915, %v907
    %v1068 = vpack.c.bf16 %v916, %v908
    %v1069 = vpack.c.bf16 %v917, %v909
    %v1070 = vpack.c.bf16 %v918, %v910
    %v1071 = vpack.c.bf16 %v919, %v911
    %v1072 = vpack.c.bf16 %v928, %v920
    %v1073 = vpack.c.bf16 %v929, %v921
    %v1074 = vpack.c.bf16 %v930, %v922
    %v1075 = vpack.c.bf16 %v931, %v923
    %v1076 = vpack.c.bf16 %v932, %v924
    %v1077 = vpack.c.bf16 %v933, %v925
    %v1078 = vpack.c.bf16 %v934, %v926
    %v1079 = vpack.c.bf16 %v935, %v927
    %v1080 = vpack.c.bf16 %v944, %v936
    %v1081 = vpack.c.bf16 %v945, %v937
    %v1082 = vpack.c.bf16 %v946, %v938
    %v1083 = vpack.c.bf16 %v947, %v939
    %v1084 = vpack.c.bf16 %v948, %v940
    %v1085 = vpack.c.bf16 %v949, %v941
    %v1086 = vpack.c.bf16 %v950, %v942
    %v1087 = vpack.c.bf16 %v951, %v943
    %v1088 = vpack.c.bf16 %v960, %v952
    %v1089 = vpack.c.bf16 %v961, %v953
    %v1090 = vpack.c.bf16 %v962, %v954
    %v1091 = vpack.c.bf16 %v963, %v955
    %v1092 = vpack.c.bf16 %v964, %v956
    %v1093 = vpack.c.bf16 %v965, %v957
    %v1094 = vpack.c.bf16 %v966, %v958
    %v1095 = vpack.c.bf16 %v967, %v959
    %v1096 = vld [vmem:[#allocation2] sm:$0xf]
    %v1097 = vld [vmem:[#allocation2 + $0x4] sm:$0xf]
    %v1098 = vld [vmem:[#allocation2 + $0x8] sm:$0xf]
    %v1099 = vld [vmem:[#allocation2 + $0xc] sm:$0xf]
    %v1100 = vld [vmem:[#allocation2 + $0x10] sm:$0xf]
    %v1101 = vld [vmem:[#allocation2 + $0x14] sm:$0xf]
    %v1102 = vld [vmem:[#allocation2 + $0x18] sm:$0xf]
    %v1103 = vld [vmem:[#allocation2 + $0x1c] sm:$0xf]
    %v1104 = vld [vmem:[#allocation2 + $0x20] sm:$0xf]
    %v1105 = vld [vmem:[#allocation2 + $0x24] sm:$0xf]
    %v1106 = vld [vmem:[#allocation2 + $0x28] sm:$0xf]
    %v1107 = vld [vmem:[#allocation2 + $0x2c] sm:$0xf]
    %v1108 = vld [vmem:[#allocation2 + $0x30] sm:$0xf]
    %v1109 = vld [vmem:[#allocation2 + $0x34] sm:$0xf]
    %v1110 = vld [vmem:[#allocation2 + $0x38] sm:$0xf]
    %v1111 = vld [vmem:[#allocation2 + $0x3c] sm:$0xf]
    %v1112 = vld [vmem:[#allocation2 + $0x40] sm:$0xf]
    %v1113 = vld [vmem:[#allocation2 + $0x44] sm:$0xf]
    %v1114 = vld [vmem:[#allocation2 + $0x48] sm:$0xf]
    %v1115 = vld [vmem:[#allocation2 + $0x4c] sm:$0xf]
    %v1116 = vld [vmem:[#allocation2 + $0x50] sm:$0xf]
    %v1117 = vld [vmem:[#allocation2 + $0x54] sm:$0xf]
    %v1118 = vld [vmem:[#allocation2 + $0x58] sm:$0xf]
    %v1119 = vld [vmem:[#allocation2 + $0x5c] sm:$0xf]
    %v1120 = vld [vmem:[#allocation2 + $0x60] sm:$0xf]
    %v1121 = vld [vmem:[#allocation2 + $0x64] sm:$0xf]
    %v1122 = vld [vmem:[#allocation2 + $0x68] sm:$0xf]
    %v1123 = vld [vmem:[#allocation2 + $0x6c] sm:$0xf]
    %v1124 = vld [vmem:[#allocation2 + $0x70] sm:$0xf]
    %v1125 = vld [vmem:[#allocation2 + $0x74] sm:$0xf]
    %v1126 = vld [vmem:[#allocation2 + $0x78] sm:$0xf]
    %v1127 = vld [vmem:[#allocation2 + $0x7c] sm:$0xf]
    %v1128 = vld [vmem:[#allocation2 + $0x80] sm:$0xf]
    %v1129 = vld [vmem:[#allocation2 + $0x84] sm:$0xf]
    %v1130 = vld [vmem:[#allocation2 + $0x88] sm:$0xf]
    %v1131 = vld [vmem:[#allocation2 + $0x8c] sm:$0xf]
    %v1132 = vld [vmem:[#allocation2 + $0x90] sm:$0xf]
    %v1133 = vld [vmem:[#allocation2 + $0x94] sm:$0xf]
    %v1134 = vld [vmem:[#allocation2 + $0x98] sm:$0xf]
    %v1135 = vld [vmem:[#allocation2 + $0x9c] sm:$0xf]
    %v1136 = vld [vmem:[#allocation2 + $0xa0] sm:$0xf]
    %v1137 = vld [vmem:[#allocation2 + $0xa4] sm:$0xf]
    %v1138 = vld [vmem:[#allocation2 + $0xa8] sm:$0xf]
    %v1139 = vld [vmem:[#allocation2 + $0xac] sm:$0xf]
    %v1140 = vld [vmem:[#allocation2 + $0xb0] sm:$0xf]
    %v1141 = vld [vmem:[#allocation2 + $0xb4] sm:$0xf]
    %v1142 = vld [vmem:[#allocation2 + $0xb8] sm:$0xf]
    %v1143 = vld [vmem:[#allocation2 + $0xbc] sm:$0xf]
    %v1144 = vld [vmem:[#allocation2 + $0xc0] sm:$0xf]
    %v1145 = vld [vmem:[#allocation2 + $0xc4] sm:$0xf]
    %v1146 = vld [vmem:[#allocation2 + $0xc8] sm:$0xf]
    %v1147 = vld [vmem:[#allocation2 + $0xcc] sm:$0xf]
    %v1148 = vld [vmem:[#allocation2 + $0xd0] sm:$0xf]
    %v1149 = vld [vmem:[#allocation2 + $0xd4] sm:$0xf]
    %v1150 = vld [vmem:[#allocation2 + $0xd8] sm:$0xf]
    %v1151 = vld [vmem:[#allocation2 + $0xdc] sm:$0xf]
    %v1152 = vld [vmem:[#allocation2 + $0xe0] sm:$0xf]
    %v1153 = vld [vmem:[#allocation2 + $0xe4] sm:$0xf]
    %v1154 = vld [vmem:[#allocation2 + $0xe8] sm:$0xf]
    %v1155 = vld [vmem:[#allocation2 + $0xec] sm:$0xf]
    %v1156 = vld [vmem:[#allocation2 + $0xf0] sm:$0xf]
    %v1157 = vld [vmem:[#allocation2 + $0xf4] sm:$0xf]
    %v1158 = vld [vmem:[#allocation2 + $0xf8] sm:$0xf]
    %v1159 = vld [vmem:[#allocation2 + $0xfc] sm:$0xf]
    %v1160 = vld [vmem:[#allocation2 + $0x100] sm:$0xf]
    %v1161 = vld [vmem:[#allocation2 + $0x104] sm:$0xf]
    %v1162 = vld [vmem:[#allocation2 + $0x108] sm:$0xf]
    %v1163 = vld [vmem:[#allocation2 + $0x10c] sm:$0xf]
    %v1164 = vld [vmem:[#allocation2 + $0x110] sm:$0xf]
    %v1165 = vld [vmem:[#allocation2 + $0x114] sm:$0xf]
    %v1166 = vld [vmem:[#allocation2 + $0x118] sm:$0xf]
    %v1167 = vld [vmem:[#allocation2 + $0x11c] sm:$0xf]
    %v1168 = vld [vmem:[#allocation2 + $0x120] sm:$0xf]
    %v1169 = vld [vmem:[#allocation2 + $0x124] sm:$0xf]
    %v1170 = vld [vmem:[#allocation2 + $0x128] sm:$0xf]
    %v1171 = vld [vmem:[#allocation2 + $0x12c] sm:$0xf]
    %v1172 = vld [vmem:[#allocation2 + $0x130] sm:$0xf]
    %v1173 = vld [vmem:[#allocation2 + $0x134] sm:$0xf]
    %v1174 = vld [vmem:[#allocation2 + $0x138] sm:$0xf]
    %v1175 = vld [vmem:[#allocation2 + $0x13c] sm:$0xf]
    %v1176 = vld [vmem:[#allocation2 + $0x140] sm:$0xf]
    %v1177 = vld [vmem:[#allocation2 + $0x144] sm:$0xf]
    %v1178 = vld [vmem:[#allocation2 + $0x148] sm:$0xf]
    %v1179 = vld [vmem:[#allocation2 + $0x14c] sm:$0xf]
    %v1180 = vld [vmem:[#allocation2 + $0x150] sm:$0xf]
    %v1181 = vld [vmem:[#allocation2 + $0x154] sm:$0xf]
    %v1182 = vld [vmem:[#allocation2 + $0x158] sm:$0xf]
    %v1183 = vld [vmem:[#allocation2 + $0x15c] sm:$0xf]
    %v1184 = vld [vmem:[#allocation2 + $0x160] sm:$0xf]
    %v1185 = vld [vmem:[#allocation2 + $0x164] sm:$0xf]
    %v1186 = vld [vmem:[#allocation2 + $0x168] sm:$0xf]
    %v1187 = vld [vmem:[#allocation2 + $0x16c] sm:$0xf]
    %v1188 = vld [vmem:[#allocation2 + $0x170] sm:$0xf]
    %v1189 = vld [vmem:[#allocation2 + $0x174] sm:$0xf]
    %v1190 = vld [vmem:[#allocation2 + $0x178] sm:$0xf]
    %v1191 = vld [vmem:[#allocation2 + $0x17c] sm:$0xf]
    %v1192 = vld [vmem:[#allocation2 + $0x180] sm:$0xf]
    %v1193 = vld [vmem:[#allocation2 + $0x184] sm:$0xf]
    %v1194 = vld [vmem:[#allocation2 + $0x188] sm:$0xf]
    %v1195 = vld [vmem:[#allocation2 + $0x18c] sm:$0xf]
    %v1196 = vld [vmem:[#allocation2 + $0x190] sm:$0xf]
    %v1197 = vld [vmem:[#allocation2 + $0x194] sm:$0xf]
    %v1198 = vld [vmem:[#allocation2 + $0x198] sm:$0xf]
    %v1199 = vld [vmem:[#allocation2 + $0x19c] sm:$0xf]
    %v1200 = vld [vmem:[#allocation2 + $0x1a0] sm:$0xf]
    %v1201 = vld [vmem:[#allocation2 + $0x1a4] sm:$0xf]
    %v1202 = vld [vmem:[#allocation2 + $0x1a8] sm:$0xf]
    %v1203 = vld [vmem:[#allocation2 + $0x1ac] sm:$0xf]
    %v1204 = vld [vmem:[#allocation2 + $0x1b0] sm:$0xf]
    %v1205 = vld [vmem:[#allocation2 + $0x1b4] sm:$0xf]
    %v1206 = vld [vmem:[#allocation2 + $0x1b8] sm:$0xf]
    %v1207 = vld [vmem:[#allocation2 + $0x1bc] sm:$0xf]
    %v1208 = vld [vmem:[#allocation2 + $0x1c0] sm:$0xf]
    %v1209 = vld [vmem:[#allocation2 + $0x1c4] sm:$0xf]
    %v1210 = vld [vmem:[#allocation2 + $0x1c8] sm:$0xf]
    %v1211 = vld [vmem:[#allocation2 + $0x1cc] sm:$0xf]
    %v1212 = vld [vmem:[#allocation2 + $0x1d0] sm:$0xf]
    %v1213 = vld [vmem:[#allocation2 + $0x1d4] sm:$0xf]
    %v1214 = vld [vmem:[#allocation2 + $0x1d8] sm:$0xf]
    %v1215 = vld [vmem:[#allocation2 + $0x1dc] sm:$0xf]
    %v1216 = vld [vmem:[#allocation2 + $0x1e0] sm:$0xf]
    %v1217 = vld [vmem:[#allocation2 + $0x1e4] sm:$0xf]
    %v1218 = vld [vmem:[#allocation2 + $0x1e8] sm:$0xf]
    %v1219 = vld [vmem:[#allocation2 + $0x1ec] sm:$0xf]
    %v1220 = vld [vmem:[#allocation2 + $0x1f0] sm:$0xf]
    %v1221 = vld [vmem:[#allocation2 + $0x1f4] sm:$0xf]
    %v1222 = vld [vmem:[#allocation2 + $0x1f8] sm:$0xf]
    %v1223 = vld [vmem:[#allocation2 + $0x1fc] sm:$0xf]
    %v1224 = vld [vmem:[#allocation5] sm:$0xf]
    %v1225 = vld [vmem:[#allocation5 + $0x4] sm:$0xf]
    %v1226 = vld [vmem:[#allocation5 + $0x8] sm:$0xf]
    %v1227 = vld [vmem:[#allocation5 + $0xc] sm:$0xf]
    %v1228 = vld [vmem:[#allocation5 + $0x10] sm:$0xf]
    %v1229 = vld [vmem:[#allocation5 + $0x14] sm:$0xf]
    %v1230 = vld [vmem:[#allocation5 + $0x18] sm:$0xf]
    %v1231 = vld [vmem:[#allocation5 + $0x1c] sm:$0xf]
    %v1232 = vld [vmem:[#allocation5 + $0x20] sm:$0xf]
    %v1233 = vld [vmem:[#allocation5 + $0x24] sm:$0xf]
    %v1234 = vld [vmem:[#allocation5 + $0x28] sm:$0xf]
    %v1235 = vld [vmem:[#allocation5 + $0x2c] sm:$0xf]
    %v1236 = vld [vmem:[#allocation5 + $0x30] sm:$0xf]
    %v1237 = vld [vmem:[#allocation5 + $0x34] sm:$0xf]
    %v1238 = vld [vmem:[#allocation5 + $0x38] sm:$0xf]
    %v1239 = vld [vmem:[#allocation5 + $0x3c] sm:$0xf]
    %v1240 = vld [vmem:[#allocation5 + $0x40] sm:$0xf]
    %v1241 = vld [vmem:[#allocation5 + $0x44] sm:$0xf]
    %v1242 = vld [vmem:[#allocation5 + $0x48] sm:$0xf]
    %v1243 = vld [vmem:[#allocation5 + $0x4c] sm:$0xf]
    %v1244 = vld [vmem:[#allocation5 + $0x50] sm:$0xf]
    %v1245 = vld [vmem:[#allocation5 + $0x54] sm:$0xf]
    %v1246 = vld [vmem:[#allocation5 + $0x58] sm:$0xf]
    %v1247 = vld [vmem:[#allocation5 + $0x5c] sm:$0xf]
    %v1248 = vld [vmem:[#allocation5 + $0x60] sm:$0xf]
    %v1249 = vld [vmem:[#allocation5 + $0x64] sm:$0xf]
    %v1250 = vld [vmem:[#allocation5 + $0x68] sm:$0xf]
    %v1251 = vld [vmem:[#allocation5 + $0x6c] sm:$0xf]
    %v1252 = vld [vmem:[#allocation5 + $0x70] sm:$0xf]
    %v1253 = vld [vmem:[#allocation5 + $0x74] sm:$0xf]
    %v1254 = vld [vmem:[#allocation5 + $0x78] sm:$0xf]
    %v1255 = vld [vmem:[#allocation5 + $0x7c] sm:$0xf]
    %v1256 = vld [vmem:[#allocation5 + $0x80] sm:$0xf]
    %v1257 = vld [vmem:[#allocation5 + $0x84] sm:$0xf]
    %v1258 = vld [vmem:[#allocation5 + $0x88] sm:$0xf]
    %v1259 = vld [vmem:[#allocation5 + $0x8c] sm:$0xf]
    %v1260 = vld [vmem:[#allocation5 + $0x90] sm:$0xf]
    %v1261 = vld [vmem:[#allocation5 + $0x94] sm:$0xf]
    %v1262 = vld [vmem:[#allocation5 + $0x98] sm:$0xf]
    %v1263 = vld [vmem:[#allocation5 + $0x9c] sm:$0xf]
    %v1264 = vld [vmem:[#allocation5 + $0xa0] sm:$0xf]
    %v1265 = vld [vmem:[#allocation5 + $0xa4] sm:$0xf]
    %v1266 = vld [vmem:[#allocation5 + $0xa8] sm:$0xf]
    %v1267 = vld [vmem:[#allocation5 + $0xac] sm:$0xf]
    %v1268 = vld [vmem:[#allocation5 + $0xb0] sm:$0xf]
    %v1269 = vld [vmem:[#allocation5 + $0xb4] sm:$0xf]
    %v1270 = vld [vmem:[#allocation5 + $0xb8] sm:$0xf]
    %v1271 = vld [vmem:[#allocation5 + $0xbc] sm:$0xf]
    %v1272 = vld [vmem:[#allocation5 + $0xc0] sm:$0xf]
    %v1273 = vld [vmem:[#allocation5 + $0xc4] sm:$0xf]
    %v1274 = vld [vmem:[#allocation5 + $0xc8] sm:$0xf]
    %v1275 = vld [vmem:[#allocation5 + $0xcc] sm:$0xf]
    %v1276 = vld [vmem:[#allocation5 + $0xd0] sm:$0xf]
    %v1277 = vld [vmem:[#allocation5 + $0xd4] sm:$0xf]
    %v1278 = vld [vmem:[#allocation5 + $0xd8] sm:$0xf]
    %v1279 = vld [vmem:[#allocation5 + $0xdc] sm:$0xf]
    %v1280 = vld [vmem:[#allocation5 + $0xe0] sm:$0xf]
    %v1281 = vld [vmem:[#allocation5 + $0xe4] sm:$0xf]
    %v1282 = vld [vmem:[#allocation5 + $0xe8] sm:$0xf]
    %v1283 = vld [vmem:[#allocation5 + $0xec] sm:$0xf]
    %v1284 = vld [vmem:[#allocation5 + $0xf0] sm:$0xf]
    %v1285 = vld [vmem:[#allocation5 + $0xf4] sm:$0xf]
    %v1286 = vld [vmem:[#allocation5 + $0xf8] sm:$0xf]
    %v1287 = vld [vmem:[#allocation5 + $0xfc] sm:$0xf]
    %v1288 = vld [vmem:[#allocation5 + $0x100] sm:$0xf]
    %v1289 = vld [vmem:[#allocation5 + $0x104] sm:$0xf]
    %v1290 = vld [vmem:[#allocation5 + $0x108] sm:$0xf]
    %v1291 = vld [vmem:[#allocation5 + $0x10c] sm:$0xf]
    %v1292 = vld [vmem:[#allocation5 + $0x110] sm:$0xf]
    %v1293 = vld [vmem:[#allocation5 + $0x114] sm:$0xf]
    %v1294 = vld [vmem:[#allocation5 + $0x118] sm:$0xf]
    %v1295 = vld [vmem:[#allocation5 + $0x11c] sm:$0xf]
    %v1296 = vld [vmem:[#allocation5 + $0x120] sm:$0xf]
    %v1297 = vld [vmem:[#allocation5 + $0x124] sm:$0xf]
    %v1298 = vld [vmem:[#allocation5 + $0x128] sm:$0xf]
    %v1299 = vld [vmem:[#allocation5 + $0x12c] sm:$0xf]
    %v1300 = vld [vmem:[#allocation5 + $0x130] sm:$0xf]
    %v1301 = vld [vmem:[#allocation5 + $0x134] sm:$0xf]
    %v1302 = vld [vmem:[#allocation5 + $0x138] sm:$0xf]
    %v1303 = vld [vmem:[#allocation5 + $0x13c] sm:$0xf]
    %v1304 = vld [vmem:[#allocation5 + $0x140] sm:$0xf]
    %v1305 = vld [vmem:[#allocation5 + $0x144] sm:$0xf]
    %v1306 = vld [vmem:[#allocation5 + $0x148] sm:$0xf]
    %v1307 = vld [vmem:[#allocation5 + $0x14c] sm:$0xf]
    %v1308 = vld [vmem:[#allocation5 + $0x150] sm:$0xf]
    %v1309 = vld [vmem:[#allocation5 + $0x154] sm:$0xf]
    %v1310 = vld [vmem:[#allocation5 + $0x158] sm:$0xf]
    %v1311 = vld [vmem:[#allocation5 + $0x15c] sm:$0xf]
    %v1312 = vld [vmem:[#allocation5 + $0x160] sm:$0xf]
    %v1313 = vld [vmem:[#allocation5 + $0x164] sm:$0xf]
    %v1314 = vld [vmem:[#allocation5 + $0x168] sm:$0xf]
    %v1315 = vld [vmem:[#allocation5 + $0x16c] sm:$0xf]
    %v1316 = vld [vmem:[#allocation5 + $0x170] sm:$0xf]
    %v1317 = vld [vmem:[#allocation5 + $0x174] sm:$0xf]
    %v1318 = vld [vmem:[#allocation5 + $0x178] sm:$0xf]
    %v1319 = vld [vmem:[#allocation5 + $0x17c] sm:$0xf]
    %v1320 = vld [vmem:[#allocation5 + $0x180] sm:$0xf]
    %v1321 = vld [vmem:[#allocation5 + $0x184] sm:$0xf]
    %v1322 = vld [vmem:[#allocation5 + $0x188] sm:$0xf]
    %v1323 = vld [vmem:[#allocation5 + $0x18c] sm:$0xf]
    %v1324 = vld [vmem:[#allocation5 + $0x190] sm:$0xf]
    %v1325 = vld [vmem:[#allocation5 + $0x194] sm:$0xf]
    %v1326 = vld [vmem:[#allocation5 + $0x198] sm:$0xf]
    %v1327 = vld [vmem:[#allocation5 + $0x19c] sm:$0xf]
    %v1328 = vld [vmem:[#allocation5 + $0x1a0] sm:$0xf]
    %v1329 = vld [vmem:[#allocation5 + $0x1a4] sm:$0xf]
    %v1330 = vld [vmem:[#allocation5 + $0x1a8] sm:$0xf]
    %v1331 = vld [vmem:[#allocation5 + $0x1ac] sm:$0xf]
    %v1332 = vld [vmem:[#allocation5 + $0x1b0] sm:$0xf]
    %v1333 = vld [vmem:[#allocation5 + $0x1b4] sm:$0xf]
    %v1334 = vld [vmem:[#allocation5 + $0x1b8] sm:$0xf]
    %v1335 = vld [vmem:[#allocation5 + $0x1bc] sm:$0xf]
    %v1336 = vld [vmem:[#allocation5 + $0x1c0] sm:$0xf]
    %v1337 = vld [vmem:[#allocation5 + $0x1c4] sm:$0xf]
    %v1338 = vld [vmem:[#allocation5 + $0x1c8] sm:$0xf]
    %v1339 = vld [vmem:[#allocation5 + $0x1cc] sm:$0xf]
    %v1340 = vld [vmem:[#allocation5 + $0x1d0] sm:$0xf]
    %v1341 = vld [vmem:[#allocation5 + $0x1d4] sm:$0xf]
    %v1342 = vld [vmem:[#allocation5 + $0x1d8] sm:$0xf]
    %v1343 = vld [vmem:[#allocation5 + $0x1dc] sm:$0xf]
    %v1344 = vld [vmem:[#allocation5 + $0x1e0] sm:$0xf]
    %v1345 = vld [vmem:[#allocation5 + $0x1e4] sm:$0xf]
    %v1346 = vld [vmem:[#allocation5 + $0x1e8] sm:$0xf]
    %v1347 = vld [vmem:[#allocation5 + $0x1ec] sm:$0xf]
    %v1348 = vld [vmem:[#allocation5 + $0x1f0] sm:$0xf]
    %v1349 = vld [vmem:[#allocation5 + $0x1f4] sm:$0xf]
    %v1350 = vld [vmem:[#allocation5 + $0x1f8] sm:$0xf]
    %v1351 = vld [vmem:[#allocation5 + $0x1fc] sm:$0xf]
    %v1480 = vunpack.c.l.b16 %v1224
    %v1481 = vunpack.c.l.b16 %v1225
    %v1482 = vunpack.c.l.b16 %v1226
    %v1483 = vunpack.c.l.b16 %v1227
    %v1484 = vunpack.c.l.b16 %v1228
    %v1485 = vunpack.c.l.b16 %v1229
    %v1486 = vunpack.c.l.b16 %v1230
    %v1487 = vunpack.c.l.b16 %v1231
    %v1488 = vunpack.c.l.b16 %v1232
    %v1489 = vunpack.c.l.b16 %v1233
    %v1490 = vunpack.c.l.b16 %v1234
    %v1491 = vunpack.c.l.b16 %v1235
    %v1492 = vunpack.c.l.b16 %v1236
    %v1493 = vunpack.c.l.b16 %v1237
    %v1494 = vunpack.c.l.b16 %v1238
    %v1495 = vunpack.c.l.b16 %v1239
    %v1496 = vunpack.c.l.b16 %v1240
    %v1497 = vunpack.c.l.b16 %v1241
    %v1498 = vunpack.c.l.b16 %v1242
    %v1499 = vunpack.c.l.b16 %v1243
    %v1500 = vunpack.c.l.b16 %v1244
    %v1501 = vunpack.c.l.b16 %v1245
    %v1502 = vunpack.c.l.b16 %v1246
    %v1503 = vunpack.c.l.b16 %v1247
    %v1504 = vunpack.c.l.b16 %v1248
    %v1505 = vunpack.c.l.b16 %v1249
    %v1506 = vunpack.c.l.b16 %v1250
    %v1507 = vunpack.c.l.b16 %v1251
    %v1508 = vunpack.c.l.b16 %v1252
    %v1509 = vunpack.c.l.b16 %v1253
    %v1510 = vunpack.c.l.b16 %v1254
    %v1511 = vunpack.c.l.b16 %v1255
    %v1512 = vunpack.c.l.b16 %v1256
    %v1513 = vunpack.c.l.b16 %v1257
    %v1514 = vunpack.c.l.b16 %v1258
    %v1515 = vunpack.c.l.b16 %v1259
    %v1516 = vunpack.c.l.b16 %v1260
    %v1517 = vunpack.c.l.b16 %v1261
    %v1518 = vunpack.c.l.b16 %v1262
    %v1519 = vunpack.c.l.b16 %v1263
    %v1520 = vunpack.c.l.b16 %v1264
    %v1521 = vunpack.c.l.b16 %v1265
    %v1522 = vunpack.c.l.b16 %v1266
    %v1523 = vunpack.c.l.b16 %v1267
    %v1524 = vunpack.c.l.b16 %v1268
    %v1525 = vunpack.c.l.b16 %v1269
    %v1526 = vunpack.c.l.b16 %v1270
    %v1527 = vunpack.c.l.b16 %v1271
    %v1528 = vunpack.c.l.b16 %v1272
    %v1529 = vunpack.c.l.b16 %v1273
    %v1530 = vunpack.c.l.b16 %v1274
    %v1531 = vunpack.c.l.b16 %v1275
    %v1532 = vunpack.c.l.b16 %v1276
    %v1533 = vunpack.c.l.b16 %v1277
    %v1534 = vunpack.c.l.b16 %v1278
    %v1535 = vunpack.c.l.b16 %v1279
    %v1536 = vunpack.c.l.b16 %v1280
    %v1537 = vunpack.c.l.b16 %v1281
    %v1538 = vunpack.c.l.b16 %v1282
    %v1539 = vunpack.c.l.b16 %v1283
    %v1540 = vunpack.c.l.b16 %v1284
    %v1541 = vunpack.c.l.b16 %v1285
    %v1542 = vunpack.c.l.b16 %v1286
    %v1543 = vunpack.c.l.b16 %v1287
    %v1544 = vunpack.c.l.b16 %v1288
    %v1545 = vunpack.c.l.b16 %v1289
    %v1546 = vunpack.c.l.b16 %v1290
    %v1547 = vunpack.c.l.b16 %v1291
    %v1548 = vunpack.c.l.b16 %v1292
    %v1549 = vunpack.c.l.b16 %v1293
    %v1550 = vunpack.c.l.b16 %v1294
    %v1551 = vunpack.c.l.b16 %v1295
    %v1552 = vunpack.c.l.b16 %v1296
    %v1553 = vunpack.c.l.b16 %v1297
    %v1554 = vunpack.c.l.b16 %v1298
    %v1555 = vunpack.c.l.b16 %v1299
    %v1556 = vunpack.c.l.b16 %v1300
    %v1557 = vunpack.c.l.b16 %v1301
    %v1558 = vunpack.c.l.b16 %v1302
    %v1559 = vunpack.c.l.b16 %v1303
    %v1560 = vunpack.c.l.b16 %v1304
    %v1561 = vunpack.c.l.b16 %v1305
    %v1562 = vunpack.c.l.b16 %v1306
    %v1563 = vunpack.c.l.b16 %v1307
    %v1564 = vunpack.c.l.b16 %v1308
    %v1565 = vunpack.c.l.b16 %v1309
    %v1566 = vunpack.c.l.b16 %v1310
    %v1567 = vunpack.c.l.b16 %v1311
    %v1568 = vunpack.c.l.b16 %v1312
    %v1569 = vunpack.c.l.b16 %v1313
    %v1570 = vunpack.c.l.b16 %v1314
    %v1571 = vunpack.c.l.b16 %v1315
    %v1572 = vunpack.c.l.b16 %v1316
    %v1573 = vunpack.c.l.b16 %v1317
    %v1574 = vunpack.c.l.b16 %v1318
    %v1575 = vunpack.c.l.b16 %v1319
    %v1576 = vunpack.c.l.b16 %v1320
    %v1577 = vunpack.c.l.b16 %v1321
    %v1578 = vunpack.c.l.b16 %v1322
    %v1579 = vunpack.c.l.b16 %v1323
    %v1580 = vunpack.c.l.b16 %v1324
    %v1581 = vunpack.c.l.b16 %v1325
    %v1582 = vunpack.c.l.b16 %v1326
    %v1583 = vunpack.c.l.b16 %v1327
    %v1584 = vunpack.c.l.b16 %v1328
    %v1585 = vunpack.c.l.b16 %v1329
    %v1586 = vunpack.c.l.b16 %v1330
    %v1587 = vunpack.c.l.b16 %v1331
    %v1588 = vunpack.c.l.b16 %v1332
    %v1589 = vunpack.c.l.b16 %v1333
    %v1590 = vunpack.c.l.b16 %v1334
    %v1591 = vunpack.c.l.b16 %v1335
    %v1592 = vunpack.c.l.b16 %v1336
    %v1593 = vunpack.c.l.b16 %v1337
    %v1594 = vunpack.c.l.b16 %v1338
    %v1595 = vunpack.c.l.b16 %v1339
    %v1596 = vunpack.c.l.b16 %v1340
    %v1597 = vunpack.c.l.b16 %v1341
    %v1598 = vunpack.c.l.b16 %v1342
    %v1599 = vunpack.c.l.b16 %v1343
    %v1600 = vunpack.c.l.b16 %v1344
    %v1601 = vunpack.c.l.b16 %v1345
    %v1602 = vunpack.c.l.b16 %v1346
    %v1603 = vunpack.c.l.b16 %v1347
    %v1604 = vunpack.c.l.b16 %v1348
    %v1605 = vunpack.c.l.b16 %v1349
    %v1606 = vunpack.c.l.b16 %v1350
    %v1607 = vunpack.c.l.b16 %v1351
    %v1608 = vpack.c.b16 %v1481, %v1480
    %v1609 = vpack.c.b16 %v1483, %v1482
    %v1610 = vpack.c.b16 %v1485, %v1484
    %v1611 = vpack.c.b16 %v1487, %v1486
    %v1612 = vpack.c.b16 %v1489, %v1488
    %v1613 = vpack.c.b16 %v1491, %v1490
    %v1614 = vpack.c.b16 %v1493, %v1492
    %v1615 = vpack.c.b16 %v1495, %v1494
    %v1616 = vpack.c.b16 %v1497, %v1496
    %v1617 = vpack.c.b16 %v1499, %v1498
    %v1618 = vpack.c.b16 %v1501, %v1500
    %v1619 = vpack.c.b16 %v1503, %v1502
    %v1620 = vpack.c.b16 %v1505, %v1504
    %v1621 = vpack.c.b16 %v1507, %v1506
    %v1622 = vpack.c.b16 %v1509, %v1508
    %v1623 = vpack.c.b16 %v1511, %v1510
    %v1624 = vpack.c.b16 %v1513, %v1512
    %v1625 = vpack.c.b16 %v1515, %v1514
    %v1626 = vpack.c.b16 %v1517, %v1516
    %v1627 = vpack.c.b16 %v1519, %v1518
    %v1628 = vpack.c.b16 %v1521, %v1520
    %v1629 = vpack.c.b16 %v1523, %v1522
    %v1630 = vpack.c.b16 %v1525, %v1524
    %v1631 = vpack.c.b16 %v1527, %v1526
    %v1632 = vpack.c.b16 %v1529, %v1528
    %v1633 = vpack.c.b16 %v1531, %v1530
    %v1634 = vpack.c.b16 %v1533, %v1532
    %v1635 = vpack.c.b16 %v1535, %v1534
    %v1636 = vpack.c.b16 %v1537, %v1536
    %v1637 = vpack.c.b16 %v1539, %v1538
    %v1638 = vpack.c.b16 %v1541, %v1540
    %v1639 = vpack.c.b16 %v1543, %v1542
    %v1640 = vpack.c.b16 %v1545, %v1544
    %v1641 = vpack.c.b16 %v1547, %v1546
    %v1642 = vpack.c.b16 %v1549, %v1548
    %v1643 = vpack.c.b16 %v1551, %v1550
    %v1644 = vpack.c.b16 %v1553, %v1552
    %v1645 = vpack.c.b16 %v1555, %v1554
    %v1646 = vpack.c.b16 %v1557, %v1556
    %v1647 = vpack.c.b16 %v1559, %v1558
    %v1648 = vpack.c.b16 %v1561, %v1560
    %v1649 = vpack.c.b16 %v1563, %v1562
    %v1650 = vpack.c.b16 %v1565, %v1564
    %v1651 = vpack.c.b16 %v1567, %v1566
    %v1652 = vpack.c.b16 %v1569, %v1568
    %v1653 = vpack.c.b16 %v1571, %v1570
    %v1654 = vpack.c.b16 %v1573, %v1572
    %v1655 = vpack.c.b16 %v1575, %v1574
    %v1656 = vpack.c.b16 %v1577, %v1576
    %v1657 = vpack.c.b16 %v1579, %v1578
    %v1658 = vpack.c.b16 %v1581, %v1580
    %v1659 = vpack.c.b16 %v1583, %v1582
    %v1660 = vpack.c.b16 %v1585, %v1584
    %v1661 = vpack.c.b16 %v1587, %v1586
    %v1662 = vpack.c.b16 %v1589, %v1588
    %v1663 = vpack.c.b16 %v1591, %v1590
    %v1664 = vpack.c.b16 %v1593, %v1592
    %v1665 = vpack.c.b16 %v1595, %v1594
    %v1666 = vpack.c.b16 %v1597, %v1596
    %v1667 = vpack.c.b16 %v1599, %v1598
    %v1668 = vpack.c.b16 %v1601, %v1600
    %v1669 = vpack.c.b16 %v1603, %v1602
    %v1670 = vpack.c.b16 %v1605, %v1604
    %v1671 = vpack.c.b16 %v1607, %v1606
    %1736 = vmatprep.subr.bf16.mxu0 0
    %1737 = vmatpush1.bf16.msra.mxu0 %v1615
    %1738 = vmatprep.subr.bf16.mxu0 0
    %1739 = vmatpush1.bf16.msra.mxu0 %v1614
    %1740 = vmatprep.subr.bf16.mxu0 0
    %1741 = vmatpush1.bf16.msra.mxu0 %v1613
    %1742 = vmatprep.subr.bf16.mxu0 0
    %1743 = vmatpush1.bf16.msra.mxu0 %v1612
    %1744 = vmatprep.subr.bf16.mxu0 0
    %1745 = vmatpush1.bf16.msra.mxu0 %v1611
    %1746 = vmatprep.subr.bf16.mxu0 0
    %1747 = vmatpush1.bf16.msra.mxu0 %v1610
    %1748 = vmatprep.subr.bf16.mxu0 0
    %1749 = vmatpush1.bf16.msra.mxu0 %v1609
    %1750 = vmatprep.subr.bf16.mxu0 0
    %1751 = vmatpush1.bf16.msra.mxu0 %v1608
    %1752 = vmatprep.subr.bf16.mxu0 0
    %1753 = vmatpush2.bf16.msra.mxu0 %v1623
    %1754 = vmatprep.subr.bf16.mxu0 0
    %1755 = vmatpush2.bf16.msra.mxu0 %v1622
    %1756 = vmatprep.subr.bf16.mxu0 0
    %1757 = vmatpush2.bf16.msra.mxu0 %v1621
    %1758 = vmatprep.subr.bf16.mxu0 0
    %1759 = vmatpush2.bf16.msra.mxu0 %v1620
    %1760 = vmatprep.subr.bf16.mxu0 0
    %1761 = vmatpush2.bf16.msra.mxu0 %v1619
    %1762 = vmatprep.subr.bf16.mxu0 0
    %1763 = vmatpush2.bf16.msra.mxu0 %v1618
    %1764 = vmatprep.subr.bf16.mxu0 0
    %1765 = vmatpush2.bf16.msra.mxu0 %v1617
    %1766 = vmatprep.subr.bf16.mxu0 0
    %1767 = vmatpush2.bf16.msra.mxu0 %v1616
    %1768 = vmatprep.mubr.bf16.mxu0 %v969
    %1769 = vmatmul.mubr.bf16.gmra.mxu0 %v968
    %v1770 = vpop.f32.mrf.mxu0
    %v1771 = vadd.f32 0.0, %v1770
    %v1772 = vpop.f32.mrf.mxu0
    %v1773 = vpop.f32.mrf.mxu0
    %v1774 = vadd.f32 0.0, %v1773
    %v1775 = vpop.f32.mrf.mxu0
    %1776 = vmatprep.mubr.bf16.mxu0 %v977
    %1777 = vmatmul.mubr.bf16.gmra.mxu0 %v976
    %v1778 = vpop.f32.mrf.mxu0
    %v1779 = vadd.f32 0.0, %v1778
    %v1780 = vpop.f32.mrf.mxu0
    %v1781 = vpop.f32.mrf.mxu0
    %v1782 = vadd.f32 0.0, %v1781
    %v1783 = vpop.f32.mrf.mxu0
    %1784 = vmatprep.mubr.bf16.mxu0 %v985
    %1785 = vmatmul.mubr.bf16.gmra.mxu0 %v984
    %v1786 = vpop.f32.mrf.mxu0
    %v1787 = vadd.f32 0.0, %v1786
    %v1788 = vpop.f32.mrf.mxu0
    %v1789 = vpop.f32.mrf.mxu0
    %v1790 = vadd.f32 0.0, %v1789
    %v1791 = vpop.f32.mrf.mxu0
    %1792 = vmatprep.mubr.bf16.mxu0 %v993
    %1793 = vmatmul.mubr.bf16.gmra.mxu0 %v992
    %v1794 = vpop.f32.mrf.mxu0
    %v1795 = vadd.f32 0.0, %v1794
    %v1796 = vpop.f32.mrf.mxu0
    %v1797 = vpop.f32.mrf.mxu0
    %v1798 = vadd.f32 0.0, %v1797
    %v1799 = vpop.f32.mrf.mxu0
    %1800 = vmatprep.mubr.bf16.mxu0 %v1001
    %1801 = vmatmul.mubr.bf16.gmra.mxu0 %v1000
    %v1802 = vpop.f32.mrf.mxu0
    %v1803 = vadd.f32 0.0, %v1802
    %v1804 = vpop.f32.mrf.mxu0
    %v1805 = vpop.f32.mrf.mxu0
    %v1806 = vadd.f32 0.0, %v1805
    %v1807 = vpop.f32.mrf.mxu0
    %1808 = vmatprep.mubr.bf16.mxu0 %v1009
    %1809 = vmatmul.mubr.bf16.gmra.mxu0 %v1008
    %v1810 = vpop.f32.mrf.mxu0
    %v1811 = vadd.f32 0.0, %v1810
    %v1812 = vpop.f32.mrf.mxu0
    %v1813 = vpop.f32.mrf.mxu0
    %v1814 = vadd.f32 0.0, %v1813
    %v1815 = vpop.f32.mrf.mxu0
    %1816 = vmatprep.mubr.bf16.mxu0 %v1017
    %1817 = vmatmul.mubr.bf16.gmra.mxu0 %v1016
    %v1818 = vpop.f32.mrf.mxu0
    %v1819 = vadd.f32 0.0, %v1818
    %v1820 = vpop.f32.mrf.mxu0
    %v1821 = vpop.f32.mrf.mxu0
    %v1822 = vadd.f32 0.0, %v1821
    %v1823 = vpop.f32.mrf.mxu0
    %1824 = vmatprep.mubr.bf16.mxu0 %v1025
    %1825 = vmatmul.mubr.bf16.gmra.mxu0 %v1024
    %v1826 = vpop.f32.mrf.mxu0
    %v1827 = vadd.f32 0.0, %v1826
    %v1828 = vpop.f32.mrf.mxu0
    %v1829 = vpop.f32.mrf.mxu0
    %v1830 = vadd.f32 0.0, %v1829
    %v1831 = vpop.f32.mrf.mxu0
    %1832 = vmatprep.mubr.bf16.mxu0 %v1033
    %1833 = vmatmul.mubr.bf16.gmra.mxu0 %v1032
    %v1834 = vpop.f32.mrf.mxu0
    %v1835 = vadd.f32 0.0, %v1834
    %v1836 = vpop.f32.mrf.mxu0
    %v1837 = vpop.f32.mrf.mxu0
    %v1838 = vadd.f32 0.0, %v1837
    %v1839 = vpop.f32.mrf.mxu0
    %1840 = vmatprep.mubr.bf16.mxu0 %v1041
    %1841 = vmatmul.mubr.bf16.gmra.mxu0 %v1040
    %v1842 = vpop.f32.mrf.mxu0
    %v1843 = vadd.f32 0.0, %v1842
    %v1844 = vpop.f32.mrf.mxu0
    %v1845 = vpop.f32.mrf.mxu0
    %v1846 = vadd.f32 0.0, %v1845
    %v1847 = vpop.f32.mrf.mxu0
    %1848 = vmatprep.mubr.bf16.mxu0 %v1049
    %1849 = vmatmul.mubr.bf16.gmra.mxu0 %v1048
    %v1850 = vpop.f32.mrf.mxu0
    %v1851 = vadd.f32 0.0, %v1850
    %v1852 = vpop.f32.mrf.mxu0
    %v1853 = vpop.f32.mrf.mxu0
    %v1854 = vadd.f32 0.0, %v1853
    %v1855 = vpop.f32.mrf.mxu0
    %1856 = vmatprep.mubr.bf16.mxu0 %v1057
    %1857 = vmatmul.mubr.bf16.gmra.mxu0 %v1056
    %v1858 = vpop.f32.mrf.mxu0
    %v1859 = vadd.f32 0.0, %v1858
    %v1860 = vpop.f32.mrf.mxu0
    %v1861 = vpop.f32.mrf.mxu0
    %v1862 = vadd.f32 0.0, %v1861
    %v1863 = vpop.f32.mrf.mxu0
    %1864 = vmatprep.mubr.bf16.mxu0 %v1065
    %1865 = vmatmul.mubr.bf16.gmra.mxu0 %v1064
    %v1866 = vpop.f32.mrf.mxu0
    %v1867 = vadd.f32 0.0, %v1866
    %v1868 = vpop.f32.mrf.mxu0
    %v1869 = vpop.f32.mrf.mxu0
    %v1870 = vadd.f32 0.0, %v1869
    %v1871 = vpop.f32.mrf.mxu0
    %1872 = vmatprep.mubr.bf16.mxu0 %v1073
    %1873 = vmatmul.mubr.bf16.gmra.mxu0 %v1072
    %v1874 = vpop.f32.mrf.mxu0
    %v1875 = vadd.f32 0.0, %v1874
    %v1876 = vpop.f32.mrf.mxu0
    %v1877 = vpop.f32.mrf.mxu0
    %v1878 = vadd.f32 0.0, %v1877
    %v1879 = vpop.f32.mrf.mxu0
    %1880 = vmatprep.mubr.bf16.mxu0 %v1081
    %1881 = vmatmul.mubr.bf16.gmra.mxu0 %v1080
    %v1882 = vpop.f32.mrf.mxu0
    %v1883 = vadd.f32 0.0, %v1882
    %v1884 = vpop.f32.mrf.mxu0
    %v1885 = vpop.f32.mrf.mxu0
    %v1886 = vadd.f32 0.0, %v1885
    %v1887 = vpop.f32.mrf.mxu0
    %1888 = vmatprep.mubr.bf16.mxu0 %v1089
    %1889 = vmatmul.mubr.bf16.gmra.mxu0 %v1088
    %v1890 = vpop.f32.mrf.mxu0
    %v1891 = vadd.f32 0.0, %v1890
    %v1892 = vpop.f32.mrf.mxu0
    %v1893 = vpop.f32.mrf.mxu0
    %v1894 = vadd.f32 0.0, %v1893
    %v1895 = vpop.f32.mrf.mxu0
    %1896 = vdwg.mxu0
    %1897 = vmatprep.subr.bf16.mxu0 0
    %1898 = vmatpush1.bf16.msra.mxu0 %v1631
    %1899 = vmatprep.subr.bf16.mxu0 0
    %1900 = vmatpush1.bf16.msra.mxu0 %v1630
    %1901 = vmatprep.subr.bf16.mxu0 0
    %1902 = vmatpush1.bf16.msra.mxu0 %v1629
    %1903 = vmatprep.subr.bf16.mxu0 0
    %1904 = vmatpush1.bf16.msra.mxu0 %v1628
    %1905 = vmatprep.subr.bf16.mxu0 0
    %1906 = vmatpush1.bf16.msra.mxu0 %v1627
    %1907 = vmatprep.subr.bf16.mxu0 0
    %1908 = vmatpush1.bf16.msra.mxu0 %v1626
    %1909 = vmatprep.subr.bf16.mxu0 0
    %1910 = vmatpush1.bf16.msra.mxu0 %v1625
    %1911 = vmatprep.subr.bf16.mxu0 0
    %1912 = vmatpush1.bf16.msra.mxu0 %v1624
    %1913 = vmatprep.subr.bf16.mxu0 0
    %1914 = vmatpush2.bf16.msra.mxu0 %v1639
    %1915 = vmatprep.subr.bf16.mxu0 0
    %1916 = vmatpush2.bf16.msra.mxu0 %v1638
    %1917 = vmatprep.subr.bf16.mxu0 0
    %1918 = vmatpush2.bf16.msra.mxu0 %v1637
    %1919 = vmatprep.subr.bf16.mxu0 0
    %1920 = vmatpush2.bf16.msra.mxu0 %v1636
    %1921 = vmatprep.subr.bf16.mxu0 0
    %1922 = vmatpush2.bf16.msra.mxu0 %v1635
    %1923 = vmatprep.subr.bf16.mxu0 0
    %1924 = vmatpush2.bf16.msra.mxu0 %v1634
    %1925 = vmatprep.subr.bf16.mxu0 0
    %1926 = vmatpush2.bf16.msra.mxu0 %v1633
    %1927 = vmatprep.subr.bf16.mxu0 0
    %1928 = vmatpush2.bf16.msra.mxu0 %v1632
    %1929 = vmatprep.mubr.bf16.mxu0 %v971
    %1930 = vmatmul.mubr.bf16.gmra.mxu0 %v970
    %v1931 = vpop.f32.mrf.mxu0
    %v1932 = vadd.f32 %v1771, %v1931
    %v1933 = vpop.f32.mrf.mxu0
    %v1934 = vpop.f32.mrf.mxu0
    %v1935 = vadd.f32 %v1774, %v1934
    %v1936 = vpop.f32.mrf.mxu0
    %1937 = vmatprep.mubr.bf16.mxu0 %v979
    %1938 = vmatmul.mubr.bf16.gmra.mxu0 %v978
    %v1939 = vpop.f32.mrf.mxu0
    %v1940 = vadd.f32 %v1779, %v1939
    %v1941 = vpop.f32.mrf.mxu0
    %v1942 = vpop.f32.mrf.mxu0
    %v1943 = vadd.f32 %v1782, %v1942
    %v1944 = vpop.f32.mrf.mxu0
    %1945 = vmatprep.mubr.bf16.mxu0 %v987
    %1946 = vmatmul.mubr.bf16.gmra.mxu0 %v986
    %v1947 = vpop.f32.mrf.mxu0
    %v1948 = vadd.f32 %v1787, %v1947
    %v1949 = vpop.f32.mrf.mxu0
    %v1950 = vpop.f32.mrf.mxu0
    %v1951 = vadd.f32 %v1790, %v1950
    %v1952 = vpop.f32.mrf.mxu0
    %1953 = vmatprep.mubr.bf16.mxu0 %v995
    %1954 = vmatmul.mubr.bf16.gmra.mxu0 %v994
    %v1955 = vpop.f32.mrf.mxu0
    %v1956 = vadd.f32 %v1795, %v1955
    %v1957 = vpop.f32.mrf.mxu0
    %v1958 = vpop.f32.mrf.mxu0
    %v1959 = vadd.f32 %v1798, %v1958
    %v1960 = vpop.f32.mrf.mxu0
    %1961 = vmatprep.mubr.bf16.mxu0 %v1003
    %1962 = vmatmul.mubr.bf16.gmra.mxu0 %v1002
    %v1963 = vpop.f32.mrf.mxu0
    %v1964 = vadd.f32 %v1803, %v1963
    %v1965 = vpop.f32.mrf.mxu0
    %v1966 = vpop.f32.mrf.mxu0
    %v1967 = vadd.f32 %v1806, %v1966
    %v1968 = vpop.f32.mrf.mxu0
    %1969 = vmatprep.mubr.bf16.mxu0 %v1011
    %1970 = vmatmul.mubr.bf16.gmra.mxu0 %v1010
    %v1971 = vpop.f32.mrf.mxu0
    %v1972 = vadd.f32 %v1811, %v1971
    %v1973 = vpop.f32.mrf.mxu0
    %v1974 = vpop.f32.mrf.mxu0
    %v1975 = vadd.f32 %v1814, %v1974
    %v1976 = vpop.f32.mrf.mxu0
    %1977 = vmatprep.mubr.bf16.mxu0 %v1019
    %1978 = vmatmul.mubr.bf16.gmra.mxu0 %v1018
    %v1979 = vpop.f32.mrf.mxu0
    %v1980 = vadd.f32 %v1819, %v1979
    %v1981 = vpop.f32.mrf.mxu0
    %v1982 = vpop.f32.mrf.mxu0
    %v1983 = vadd.f32 %v1822, %v1982
    %v1984 = vpop.f32.mrf.mxu0
    %1985 = vmatprep.mubr.bf16.mxu0 %v1027
    %1986 = vmatmul.mubr.bf16.gmra.mxu0 %v1026
    %v1987 = vpop.f32.mrf.mxu0
    %v1988 = vadd.f32 %v1827, %v1987
    %v1989 = vpop.f32.mrf.mxu0
    %v1990 = vpop.f32.mrf.mxu0
    %v1991 = vadd.f32 %v1830, %v1990
    %v1992 = vpop.f32.mrf.mxu0
    %1993 = vmatprep.mubr.bf16.mxu0 %v1035
    %1994 = vmatmul.mubr.bf16.gmra.mxu0 %v1034
    %v1995 = vpop.f32.mrf.mxu0
    %v1996 = vadd.f32 %v1835, %v1995
    %v1997 = vpop.f32.mrf.mxu0
    %v1998 = vpop.f32.mrf.mxu0
    %v1999 = vadd.f32 %v1838, %v1998
    %v2000 = vpop.f32.mrf.mxu0
    %2001 = vmatprep.mubr.bf16.mxu0 %v1043
    %2002 = vmatmul.mubr.bf16.gmra.mxu0 %v1042
    %v2003 = vpop.f32.mrf.mxu0
    %v2004 = vadd.f32 %v1843, %v2003
    %v2005 = vpop.f32.mrf.mxu0
    %v2006 = vpop.f32.mrf.mxu0
    %v2007 = vadd.f32 %v1846, %v2006
    %v2008 = vpop.f32.mrf.mxu0
    %2009 = vmatprep.mubr.bf16.mxu0 %v1051
    %2010 = vmatmul.mubr.bf16.gmra.mxu0 %v1050
    %v2011 = vpop.f32.mrf.mxu0
    %v2012 = vadd.f32 %v1851, %v2011
    %v2013 = vpop.f32.mrf.mxu0
    %v2014 = vpop.f32.mrf.mxu0
    %v2015 = vadd.f32 %v1854, %v2014
    %v2016 = vpop.f32.mrf.mxu0
    %2017 = vmatprep.mubr.bf16.mxu0 %v1059
    %2018 = vmatmul.mubr.bf16.gmra.mxu0 %v1058
    %v2019 = vpop.f32.mrf.mxu0
    %v2020 = vadd.f32 %v1859, %v2019
    %v2021 = vpop.f32.mrf.mxu0
    %v2022 = vpop.f32.mrf.mxu0
    %v2023 = vadd.f32 %v1862, %v2022
    %v2024 = vpop.f32.mrf.mxu0
    %2025 = vmatprep.mubr.bf16.mxu0 %v1067
    %2026 = vmatmul.mubr.bf16.gmra.mxu0 %v1066
    %v2027 = vpop.f32.mrf.mxu0
    %v2028 = vadd.f32 %v1867, %v2027
    %v2029 = vpop.f32.mrf.mxu0
    %v2030 = vpop.f32.mrf.mxu0
    %v2031 = vadd.f32 %v1870, %v2030
    %v2032 = vpop.f32.mrf.mxu0
    %2033 = vmatprep.mubr.bf16.mxu0 %v1075
    %2034 = vmatmul.mubr.bf16.gmra.mxu0 %v1074
    %v2035 = vpop.f32.mrf.mxu0
    %v2036 = vadd.f32 %v1875, %v2035
    %v2037 = vpop.f32.mrf.mxu0
    %v2038 = vpop.f32.mrf.mxu0
    %v2039 = vadd.f32 %v1878, %v2038
    %v2040 = vpop.f32.mrf.mxu0
    %2041 = vmatprep.mubr.bf16.mxu0 %v1083
    %2042 = vmatmul.mubr.bf16.gmra.mxu0 %v1082
    %v2043 = vpop.f32.mrf.mxu0
    %v2044 = vadd.f32 %v1883, %v2043
    %v2045 = vpop.f32.mrf.mxu0
    %v2046 = vpop.f32.mrf.mxu0
    %v2047 = vadd.f32 %v1886, %v2046
    %v2048 = vpop.f32.mrf.mxu0
    %2049 = vmatprep.mubr.bf16.mxu0 %v1091
    %2050 = vmatmul.mubr.bf16.gmra.mxu0 %v1090
    %v2051 = vpop.f32.mrf.mxu0
    %v2052 = vadd.f32 %v1891, %v2051
    %v2053 = vpop.f32.mrf.mxu0
    %v2054 = vpop.f32.mrf.mxu0
    %v2055 = vadd.f32 %v1894, %v2054
    %v2056 = vpop.f32.mrf.mxu0
    %2057 = vdwg.mxu0
    %2058 = vmatprep.subr.bf16.mxu0 0
    %2059 = vmatpush1.bf16.msra.mxu0 %v1647
    %2060 = vmatprep.subr.bf16.mxu0 0
    %2061 = vmatpush1.bf16.msra.mxu0 %v1646
    %2062 = vmatprep.subr.bf16.mxu0 0
    %2063 = vmatpush1.bf16.msra.mxu0 %v1645
    %2064 = vmatprep.subr.bf16.mxu0 0
    %2065 = vmatpush1.bf16.msra.mxu0 %v1644
    %2066 = vmatprep.subr.bf16.mxu0 0
    %2067 = vmatpush1.bf16.msra.mxu0 %v1643
    %2068 = vmatprep.subr.bf16.mxu0 0
    %2069 = vmatpush1.bf16.msra.mxu0 %v1642
    %2070 = vmatprep.subr.bf16.mxu0 0
    %2071 = vmatpush1.bf16.msra.mxu0 %v1641
    %2072 = vmatprep.subr.bf16.mxu0 0
    %2073 = vmatpush1.bf16.msra.mxu0 %v1640
    %2074 = vmatprep.subr.bf16.mxu0 0
    %2075 = vmatpush2.bf16.msra.mxu0 %v1655
    %2076 = vmatprep.subr.bf16.mxu0 0
    %2077 = vmatpush2.bf16.msra.mxu0 %v1654
    %2078 = vmatprep.subr.bf16.mxu0 0
    %2079 = vmatpush2.bf16.msra.mxu0 %v1653
    %2080 = vmatprep.subr.bf16.mxu0 0
    %2081 = vmatpush2.bf16.msra.mxu0 %v1652
    %2082 = vmatprep.subr.bf16.mxu0 0
    %2083 = vmatpush2.bf16.msra.mxu0 %v1651
    %2084 = vmatprep.subr.bf16.mxu0 0
    %2085 = vmatpush2.bf16.msra.mxu0 %v1650
    %2086 = vmatprep.subr.bf16.mxu0 0
    %2087 = vmatpush2.bf16.msra.mxu0 %v1649
    %2088 = vmatprep.subr.bf16.mxu0 0
    %2089 = vmatpush2.bf16.msra.mxu0 %v1648
    %2090 = vmatprep.mubr.bf16.mxu0 %v973
    %2091 = vmatmul.mubr.bf16.gmra.mxu0 %v972
    %v2092 = vpop.f32.mrf.mxu0
    %v2093 = vadd.f32 %v1932, %v2092
    %v2094 = vpop.f32.mrf.mxu0
    %v2095 = vpop.f32.mrf.mxu0
    %v2096 = vadd.f32 %v1935, %v2095
    %v2097 = vpop.f32.mrf.mxu0
    %2098 = vmatprep.mubr.bf16.mxu0 %v981
    %2099 = vmatmul.mubr.bf16.gmra.mxu0 %v980
    %v2100 = vpop.f32.mrf.mxu0
    %v2101 = vadd.f32 %v1940, %v2100
    %v2102 = vpop.f32.mrf.mxu0
    %v2103 = vpop.f32.mrf.mxu0
    %v2104 = vadd.f32 %v1943, %v2103
    %v2105 = vpop.f32.mrf.mxu0
    %2106 = vmatprep.mubr.bf16.mxu0 %v989
    %2107 = vmatmul.mubr.bf16.gmra.mxu0 %v988
    %v2108 = vpop.f32.mrf.mxu0
    %v2109 = vadd.f32 %v1948, %v2108
    %v2110 = vpop.f32.mrf.mxu0
    %v2111 = vpop.f32.mrf.mxu0
    %v2112 = vadd.f32 %v1951, %v2111
    %v2113 = vpop.f32.mrf.mxu0
    %2114 = vmatprep.mubr.bf16.mxu0 %v997
    %2115 = vmatmul.mubr.bf16.gmra.mxu0 %v996
    %v2116 = vpop.f32.mrf.mxu0
    %v2117 = vadd.f32 %v1956, %v2116
    %v2118 = vpop.f32.mrf.mxu0
    %v2119 = vpop.f32.mrf.mxu0
    %v2120 = vadd.f32 %v1959, %v2119
    %v2121 = vpop.f32.mrf.mxu0
    %2122 = vmatprep.mubr.bf16.mxu0 %v1005
    %2123 = vmatmul.mubr.bf16.gmra.mxu0 %v1004
    %v2124 = vpop.f32.mrf.mxu0
    %v2125 = vadd.f32 %v1964, %v2124
    %v2126 = vpop.f32.mrf.mxu0
    %v2127 = vpop.f32.mrf.mxu0
    %v2128 = vadd.f32 %v1967, %v2127
    %v2129 = vpop.f32.mrf.mxu0
    %2130 = vmatprep.mubr.bf16.mxu0 %v1013
    %2131 = vmatmul.mubr.bf16.gmra.mxu0 %v1012
    %v2132 = vpop.f32.mrf.mxu0
    %v2133 = vadd.f32 %v1972, %v2132
    %v2134 = vpop.f32.mrf.mxu0
    %v2135 = vpop.f32.mrf.mxu0
    %v2136 = vadd.f32 %v1975, %v2135
    %v2137 = vpop.f32.mrf.mxu0
    %2138 = vmatprep.mubr.bf16.mxu0 %v1021
    %2139 = vmatmul.mubr.bf16.gmra.mxu0 %v1020
    %v2140 = vpop.f32.mrf.mxu0
    %v2141 = vadd.f32 %v1980, %v2140
    %v2142 = vpop.f32.mrf.mxu0
    %v2143 = vpop.f32.mrf.mxu0
    %v2144 = vadd.f32 %v1983, %v2143
    %v2145 = vpop.f32.mrf.mxu0
    %2146 = vmatprep.mubr.bf16.mxu0 %v1029
    %2147 = vmatmul.mubr.bf16.gmra.mxu0 %v1028
    %v2148 = vpop.f32.mrf.mxu0
    %v2149 = vadd.f32 %v1988, %v2148
    %v2150 = vpop.f32.mrf.mxu0
    %v2151 = vpop.f32.mrf.mxu0
    %v2152 = vadd.f32 %v1991, %v2151
    %v2153 = vpop.f32.mrf.mxu0
    %2154 = vmatprep.mubr.bf16.mxu0 %v1037
    %2155 = vmatmul.mubr.bf16.gmra.mxu0 %v1036
    %v2156 = vpop.f32.mrf.mxu0
    %v2157 = vadd.f32 %v1996, %v2156
    %v2158 = vpop.f32.mrf.mxu0
    %v2159 = vpop.f32.mrf.mxu0
    %v2160 = vadd.f32 %v1999, %v2159
    %v2161 = vpop.f32.mrf.mxu0
    %2162 = vmatprep.mubr.bf16.mxu0 %v1045
    %2163 = vmatmul.mubr.bf16.gmra.mxu0 %v1044
    %v2164 = vpop.f32.mrf.mxu0
    %v2165 = vadd.f32 %v2004, %v2164
    %v2166 = vpop.f32.mrf.mxu0
    %v2167 = vpop.f32.mrf.mxu0
    %v2168 = vadd.f32 %v2007, %v2167
    %v2169 = vpop.f32.mrf.mxu0
    %2170 = vmatprep.mubr.bf16.mxu0 %v1053
    %2171 = vmatmul.mubr.bf16.gmra.mxu0 %v1052
    %v2172 = vpop.f32.mrf.mxu0
    %v2173 = vadd.f32 %v2012, %v2172
    %v2174 = vpop.f32.mrf.mxu0
    %v2175 = vpop.f32.mrf.mxu0
    %v2176 = vadd.f32 %v2015, %v2175
    %v2177 = vpop.f32.mrf.mxu0
    %2178 = vmatprep.mubr.bf16.mxu0 %v1061
    %2179 = vmatmul.mubr.bf16.gmra.mxu0 %v1060
    %v2180 = vpop.f32.mrf.mxu0
    %v2181 = vadd.f32 %v2020, %v2180
    %v2182 = vpop.f32.mrf.mxu0
    %v2183 = vpop.f32.mrf.mxu0
    %v2184 = vadd.f32 %v2023, %v2183
    %v2185 = vpop.f32.mrf.mxu0
    %2186 = vmatprep.mubr.bf16.mxu0 %v1069
    %2187 = vmatmul.mubr.bf16.gmra.mxu0 %v1068
    %v2188 = vpop.f32.mrf.mxu0
    %v2189 = vadd.f32 %v2028, %v2188
    %v2190 = vpop.f32.mrf.mxu0
    %v2191 = vpop.f32.mrf.mxu0
    %v2192 = vadd.f32 %v2031, %v2191
    %v2193 = vpop.f32.mrf.mxu0
    %2194 = vmatprep.mubr.bf16.mxu0 %v1077
    %2195 = vmatmul.mubr.bf16.gmra.mxu0 %v1076
    %v2196 = vpop.f32.mrf.mxu0
    %v2197 = vadd.f32 %v2036, %v2196
    %v2198 = vpop.f32.mrf.mxu0
    %v2199 = vpop.f32.mrf.mxu0
    %v2200 = vadd.f32 %v2039, %v2199
    %v2201 = vpop.f32.mrf.mxu0
    %2202 = vmatprep.mubr.bf16.mxu0 %v1085
    %2203 = vmatmul.mubr.bf16.gmra.mxu0 %v1084
    %v2204 = vpop.f32.mrf.mxu0
    %v2205 = vadd.f32 %v2044, %v2204
    %v2206 = vpop.f32.mrf.mxu0
    %v2207 = vpop.f32.mrf.mxu0
    %v2208 = vadd.f32 %v2047, %v2207
    %v2209 = vpop.f32.mrf.mxu0
    %2210 = vmatprep.mubr.bf16.mxu0 %v1093
    %2211 = vmatmul.mubr.bf16.gmra.mxu0 %v1092
    %v2212 = vpop.f32.mrf.mxu0
    %v2213 = vadd.f32 %v2052, %v2212
    %v2214 = vpop.f32.mrf.mxu0
    %v2215 = vpop.f32.mrf.mxu0
    %v2216 = vadd.f32 %v2055, %v2215
    %v2217 = vpop.f32.mrf.mxu0
    %2218 = vdwg.mxu0
    %2219 = vmatprep.subr.bf16.mxu0 0
    %2220 = vmatpush1.bf16.msra.mxu0 %v1663
    %2221 = vmatprep.subr.bf16.mxu0 0
    %2222 = vmatpush1.bf16.msra.mxu0 %v1662
    %2223 = vmatprep.subr.bf16.mxu0 0
    %2224 = vmatpush1.bf16.msra.mxu0 %v1661
    %2225 = vmatprep.subr.bf16.mxu0 0
    %2226 = vmatpush1.bf16.msra.mxu0 %v1660
    %2227 = vmatprep.subr.bf16.mxu0 0
    %2228 = vmatpush1.bf16.msra.mxu0 %v1659
    %2229 = vmatprep.subr.bf16.mxu0 0
    %2230 = vmatpush1.bf16.msra.mxu0 %v1658
    %2231 = vmatprep.subr.bf16.mxu0 0
    %2232 = vmatpush1.bf16.msra.mxu0 %v1657
    %2233 = vmatprep.subr.bf16.mxu0 0
    %2234 = vmatpush1.bf16.msra.mxu0 %v1656
    %2235 = vmatprep.subr.bf16.mxu0 0
    %2236 = vmatpush2.bf16.msra.mxu0 %v1671
    %2237 = vmatprep.subr.bf16.mxu0 0
    %2238 = vmatpush2.bf16.msra.mxu0 %v1670
    %2239 = vmatprep.subr.bf16.mxu0 0
    %2240 = vmatpush2.bf16.msra.mxu0 %v1669
    %2241 = vmatprep.subr.bf16.mxu0 0
    %2242 = vmatpush2.bf16.msra.mxu0 %v1668
    %2243 = vmatprep.subr.bf16.mxu0 0
    %2244 = vmatpush2.bf16.msra.mxu0 %v1667
    %2245 = vmatprep.subr.bf16.mxu0 0
    %2246 = vmatpush2.bf16.msra.mxu0 %v1666
    %2247 = vmatprep.subr.bf16.mxu0 0
    %2248 = vmatpush2.bf16.msra.mxu0 %v1665
    %2249 = vmatprep.subr.bf16.mxu0 0
    %2250 = vmatpush2.bf16.msra.mxu0 %v1664
    %2251 = vmatprep.mubr.bf16.mxu0 %v975
    %2252 = vmatmul.mubr.bf16.gmra.mxu0 %v974
    %v2253 = vpop.f32.mrf.mxu0
    %v2254 = vadd.f32 %v2093, %v2253
    %v2255 = vpop.f32.mrf.mxu0
    %v2256 = vpop.f32.mrf.mxu0
    %v2257 = vadd.f32 %v2096, %v2256
    %v2258 = vpop.f32.mrf.mxu0
    %2259 = vmatprep.mubr.bf16.mxu0 %v983
    %2260 = vmatmul.mubr.bf16.gmra.mxu0 %v982
    %v2261 = vpop.f32.mrf.mxu0
    %v2262 = vadd.f32 %v2101, %v2261
    %v2263 = vpop.f32.mrf.mxu0
    %v2264 = vpop.f32.mrf.mxu0
    %v2265 = vadd.f32 %v2104, %v2264
    %v2266 = vpop.f32.mrf.mxu0
    %2267 = vmatprep.mubr.bf16.mxu0 %v991
    %2268 = vmatmul.mubr.bf16.gmra.mxu0 %v990
    %v2269 = vpop.f32.mrf.mxu0
    %v2270 = vadd.f32 %v2109, %v2269
    %v2271 = vpop.f32.mrf.mxu0
    %v2272 = vpop.f32.mrf.mxu0
    %v2273 = vadd.f32 %v2112, %v2272
    %v2274 = vpop.f32.mrf.mxu0
    %2275 = vmatprep.mubr.bf16.mxu0 %v999
    %2276 = vmatmul.mubr.bf16.gmra.mxu0 %v998
    %v2277 = vpop.f32.mrf.mxu0
    %v2278 = vadd.f32 %v2117, %v2277
    %v2279 = vpop.f32.mrf.mxu0
    %v2280 = vpop.f32.mrf.mxu0
    %v2281 = vadd.f32 %v2120, %v2280
    %v2282 = vpop.f32.mrf.mxu0
    %2283 = vmatprep.mubr.bf16.mxu0 %v1007
    %2284 = vmatmul.mubr.bf16.gmra.mxu0 %v1006
    %v2285 = vpop.f32.mrf.mxu0
    %v2286 = vadd.f32 %v2125, %v2285
    %v2287 = vpop.f32.mrf.mxu0
    %v2288 = vpop.f32.mrf.mxu0
    %v2289 = vadd.f32 %v2128, %v2288
    %v2290 = vpop.f32.mrf.mxu0
    %2291 = vmatprep.mubr.bf16.mxu0 %v1015
    %2292 = vmatmul.mubr.bf16.gmra.mxu0 %v1014
    %v2293 = vpop.f32.mrf.mxu0
    %v2294 = vadd.f32 %v2133, %v2293
    %v2295 = vpop.f32.mrf.mxu0
    %v2296 = vpop.f32.mrf.mxu0
    %v2297 = vadd.f32 %v2136, %v2296
    %v2298 = vpop.f32.mrf.mxu0
    %2299 = vmatprep.mubr.bf16.mxu0 %v1023
    %2300 = vmatmul.mubr.bf16.gmra.mxu0 %v1022
    %v2301 = vpop.f32.mrf.mxu0
    %v2302 = vadd.f32 %v2141, %v2301
    %v2303 = vpop.f32.mrf.mxu0
    %v2304 = vpop.f32.mrf.mxu0
    %v2305 = vadd.f32 %v2144, %v2304
    %v2306 = vpop.f32.mrf.mxu0
    %2307 = vmatprep.mubr.bf16.mxu0 %v1031
    %2308 = vmatmul.mubr.bf16.gmra.mxu0 %v1030
    %v2309 = vpop.f32.mrf.mxu0
    %v2310 = vadd.f32 %v2149, %v2309
    %v2311 = vpop.f32.mrf.mxu0
    %v2312 = vpop.f32.mrf.mxu0
    %v2313 = vadd.f32 %v2152, %v2312
    %v2314 = vpop.f32.mrf.mxu0
    %2315 = vmatprep.mubr.bf16.mxu0 %v1039
    %2316 = vmatmul.mubr.bf16.gmra.mxu0 %v1038
    %v2317 = vpop.f32.mrf.mxu0
    %v2318 = vadd.f32 %v2157, %v2317
    %v2319 = vpop.f32.mrf.mxu0
    %v2320 = vpop.f32.mrf.mxu0
    %v2321 = vadd.f32 %v2160, %v2320
    %v2322 = vpop.f32.mrf.mxu0
    %2323 = vmatprep.mubr.bf16.mxu0 %v1047
    %2324 = vmatmul.mubr.bf16.gmra.mxu0 %v1046
    %v2325 = vpop.f32.mrf.mxu0
    %v2326 = vadd.f32 %v2165, %v2325
    %v2327 = vpop.f32.mrf.mxu0
    %v2328 = vpop.f32.mrf.mxu0
    %v2329 = vadd.f32 %v2168, %v2328
    %v2330 = vpop.f32.mrf.mxu0
    %2331 = vmatprep.mubr.bf16.mxu0 %v1055
    %2332 = vmatmul.mubr.bf16.gmra.mxu0 %v1054
    %v2333 = vpop.f32.mrf.mxu0
    %v2334 = vadd.f32 %v2173, %v2333
    %v2335 = vpop.f32.mrf.mxu0
    %v2336 = vpop.f32.mrf.mxu0
    %v2337 = vadd.f32 %v2176, %v2336
    %v2338 = vpop.f32.mrf.mxu0
    %2339 = vmatprep.mubr.bf16.mxu0 %v1063
    %2340 = vmatmul.mubr.bf16.gmra.mxu0 %v1062
    %v2341 = vpop.f32.mrf.mxu0
    %v2342 = vadd.f32 %v2181, %v2341
    %v2343 = vpop.f32.mrf.mxu0
    %v2344 = vpop.f32.mrf.mxu0
    %v2345 = vadd.f32 %v2184, %v2344
    %v2346 = vpop.f32.mrf.mxu0
    %2347 = vmatprep.mubr.bf16.mxu0 %v1071
    %2348 = vmatmul.mubr.bf16.gmra.mxu0 %v1070
    %v2349 = vpop.f32.mrf.mxu0
    %v2350 = vadd.f32 %v2189, %v2349
    %v2351 = vpop.f32.mrf.mxu0
    %v2352 = vpop.f32.mrf.mxu0
    %v2353 = vadd.f32 %v2192, %v2352
    %v2354 = vpop.f32.mrf.mxu0
    %2355 = vmatprep.mubr.bf16.mxu0 %v1079
    %2356 = vmatmul.mubr.bf16.gmra.mxu0 %v1078
    %v2357 = vpop.f32.mrf.mxu0
    %v2358 = vadd.f32 %v2197, %v2357
    %v2359 = vpop.f32.mrf.mxu0
    %v2360 = vpop.f32.mrf.mxu0
    %v2361 = vadd.f32 %v2200, %v2360
    %v2362 = vpop.f32.mrf.mxu0
    %2363 = vmatprep.mubr.bf16.mxu0 %v1087
    %2364 = vmatmul.mubr.bf16.gmra.mxu0 %v1086
    %v2365 = vpop.f32.mrf.mxu0
    %v2366 = vadd.f32 %v2205, %v2365
    %v2367 = vpop.f32.mrf.mxu0
    %v2368 = vpop.f32.mrf.mxu0
    %v2369 = vadd.f32 %v2208, %v2368
    %v2370 = vpop.f32.mrf.mxu0
    %2371 = vmatprep.mubr.bf16.mxu0 %v1095
    %2372 = vmatmul.mubr.bf16.gmra.mxu0 %v1094
    %v2373 = vpop.f32.mrf.mxu0
    %v2374 = vadd.f32 %v2213, %v2373
    %v2375 = vpop.f32.mrf.mxu0
    %v2376 = vpop.f32.mrf.mxu0
    %v2377 = vadd.f32 %v2216, %v2376
    %v2378 = vpop.f32.mrf.mxu0
    %2379 = vdwg.mxu0
    %v2508 = vunpack.c.l.b16 %v1096
    %v2509 = vunpack.c.l.b16 %v1097
    %v2510 = vunpack.c.l.b16 %v1098
    %v2511 = vunpack.c.l.b16 %v1099
    %v2512 = vunpack.c.l.b16 %v1100
    %v2513 = vunpack.c.l.b16 %v1101
    %v2514 = vunpack.c.l.b16 %v1102
    %v2515 = vunpack.c.l.b16 %v1103
    %v2516 = vunpack.c.l.b16 %v1104
    %v2517 = vunpack.c.l.b16 %v1105
    %v2518 = vunpack.c.l.b16 %v1106
    %v2519 = vunpack.c.l.b16 %v1107
    %v2520 = vunpack.c.l.b16 %v1108
    %v2521 = vunpack.c.l.b16 %v1109
    %v2522 = vunpack.c.l.b16 %v1110
    %v2523 = vunpack.c.l.b16 %v1111
    %v2524 = vunpack.c.l.b16 %v1112
    %v2525 = vunpack.c.l.b16 %v1113
    %v2526 = vunpack.c.l.b16 %v1114
    %v2527 = vunpack.c.l.b16 %v1115
    %v2528 = vunpack.c.l.b16 %v1116
    %v2529 = vunpack.c.l.b16 %v1117
    %v2530 = vunpack.c.l.b16 %v1118
    %v2531 = vunpack.c.l.b16 %v1119
    %v2532 = vunpack.c.l.b16 %v1120
    %v2533 = vunpack.c.l.b16 %v1121
    %v2534 = vunpack.c.l.b16 %v1122
    %v2535 = vunpack.c.l.b16 %v1123
    %v2536 = vunpack.c.l.b16 %v1124
    %v2537 = vunpack.c.l.b16 %v1125
    %v2538 = vunpack.c.l.b16 %v1126
    %v2539 = vunpack.c.l.b16 %v1127
    %v2540 = vunpack.c.l.b16 %v1128
    %v2541 = vunpack.c.l.b16 %v1129
    %v2542 = vunpack.c.l.b16 %v1130
    %v2543 = vunpack.c.l.b16 %v1131
    %v2544 = vunpack.c.l.b16 %v1132
    %v2545 = vunpack.c.l.b16 %v1133
    %v2546 = vunpack.c.l.b16 %v1134
    %v2547 = vunpack.c.l.b16 %v1135
    %v2548 = vunpack.c.l.b16 %v1136
    %v2549 = vunpack.c.l.b16 %v1137
    %v2550 = vunpack.c.l.b16 %v1138
    %v2551 = vunpack.c.l.b16 %v1139
    %v2552 = vunpack.c.l.b16 %v1140
    %v2553 = vunpack.c.l.b16 %v1141
    %v2554 = vunpack.c.l.b16 %v1142
    %v2555 = vunpack.c.l.b16 %v1143
    %v2556 = vunpack.c.l.b16 %v1144
    %v2557 = vunpack.c.l.b16 %v1145
    %v2558 = vunpack.c.l.b16 %v1146
    %v2559 = vunpack.c.l.b16 %v1147
    %v2560 = vunpack.c.l.b16 %v1148
    %v2561 = vunpack.c.l.b16 %v1149
    %v2562 = vunpack.c.l.b16 %v1150
    %v2563 = vunpack.c.l.b16 %v1151
    %v2564 = vunpack.c.l.b16 %v1152
    %v2565 = vunpack.c.l.b16 %v1153
    %v2566 = vunpack.c.l.b16 %v1154
    %v2567 = vunpack.c.l.b16 %v1155
    %v2568 = vunpack.c.l.b16 %v1156
    %v2569 = vunpack.c.l.b16 %v1157
    %v2570 = vunpack.c.l.b16 %v1158
    %v2571 = vunpack.c.l.b16 %v1159
    %v2572 = vunpack.c.l.b16 %v1160
    %v2573 = vunpack.c.l.b16 %v1161
    %v2574 = vunpack.c.l.b16 %v1162
    %v2575 = vunpack.c.l.b16 %v1163
    %v2576 = vunpack.c.l.b16 %v1164
    %v2577 = vunpack.c.l.b16 %v1165
    %v2578 = vunpack.c.l.b16 %v1166
    %v2579 = vunpack.c.l.b16 %v1167
    %v2580 = vunpack.c.l.b16 %v1168
    %v2581 = vunpack.c.l.b16 %v1169
    %v2582 = vunpack.c.l.b16 %v1170
    %v2583 = vunpack.c.l.b16 %v1171
    %v2584 = vunpack.c.l.b16 %v1172
    %v2585 = vunpack.c.l.b16 %v1173
    %v2586 = vunpack.c.l.b16 %v1174
    %v2587 = vunpack.c.l.b16 %v1175
    %v2588 = vunpack.c.l.b16 %v1176
    %v2589 = vunpack.c.l.b16 %v1177
    %v2590 = vunpack.c.l.b16 %v1178
    %v2591 = vunpack.c.l.b16 %v1179
    %v2592 = vunpack.c.l.b16 %v1180
    %v2593 = vunpack.c.l.b16 %v1181
    %v2594 = vunpack.c.l.b16 %v1182
    %v2595 = vunpack.c.l.b16 %v1183
    %v2596 = vunpack.c.l.b16 %v1184
    %v2597 = vunpack.c.l.b16 %v1185
    %v2598 = vunpack.c.l.b16 %v1186
    %v2599 = vunpack.c.l.b16 %v1187
    %v2600 = vunpack.c.l.b16 %v1188
    %v2601 = vunpack.c.l.b16 %v1189
    %v2602 = vunpack.c.l.b16 %v1190
    %v2603 = vunpack.c.l.b16 %v1191
    %v2604 = vunpack.c.l.b16 %v1192
    %v2605 = vunpack.c.l.b16 %v1193
    %v2606 = vunpack.c.l.b16 %v1194
    %v2607 = vunpack.c.l.b16 %v1195
    %v2608 = vunpack.c.l.b16 %v1196
    %v2609 = vunpack.c.l.b16 %v1197
    %v2610 = vunpack.c.l.b16 %v1198
    %v2611 = vunpack.c.l.b16 %v1199
    %v2612 = vunpack.c.l.b16 %v1200
    %v2613 = vunpack.c.l.b16 %v1201
    %v2614 = vunpack.c.l.b16 %v1202
    %v2615 = vunpack.c.l.b16 %v1203
    %v2616 = vunpack.c.l.b16 %v1204
    %v2617 = vunpack.c.l.b16 %v1205
    %v2618 = vunpack.c.l.b16 %v1206
    %v2619 = vunpack.c.l.b16 %v1207
    %v2620 = vunpack.c.l.b16 %v1208
    %v2621 = vunpack.c.l.b16 %v1209
    %v2622 = vunpack.c.l.b16 %v1210
    %v2623 = vunpack.c.l.b16 %v1211
    %v2624 = vunpack.c.l.b16 %v1212
    %v2625 = vunpack.c.l.b16 %v1213
    %v2626 = vunpack.c.l.b16 %v1214
    %v2627 = vunpack.c.l.b16 %v1215
    %v2628 = vunpack.c.l.b16 %v1216
    %v2629 = vunpack.c.l.b16 %v1217
    %v2630 = vunpack.c.l.b16 %v1218
    %v2631 = vunpack.c.l.b16 %v1219
    %v2632 = vunpack.c.l.b16 %v1220
    %v2633 = vunpack.c.l.b16 %v1221
    %v2634 = vunpack.c.l.b16 %v1222
    %v2635 = vunpack.c.l.b16 %v1223
    %v2636 = vpack.c.b16 %v2509, %v2508
    %v2637 = vpack.c.b16 %v2511, %v2510
    %v2638 = vpack.c.b16 %v2513, %v2512
    %v2639 = vpack.c.b16 %v2515, %v2514
    %v2640 = vpack.c.b16 %v2517, %v2516
    %v2641 = vpack.c.b16 %v2519, %v2518
    %v2642 = vpack.c.b16 %v2521, %v2520
    %v2643 = vpack.c.b16 %v2523, %v2522
    %v2644 = vpack.c.b16 %v2525, %v2524
    %v2645 = vpack.c.b16 %v2527, %v2526
    %v2646 = vpack.c.b16 %v2529, %v2528
    %v2647 = vpack.c.b16 %v2531, %v2530
    %v2648 = vpack.c.b16 %v2533, %v2532
    %v2649 = vpack.c.b16 %v2535, %v2534
    %v2650 = vpack.c.b16 %v2537, %v2536
    %v2651 = vpack.c.b16 %v2539, %v2538
    %v2652 = vpack.c.b16 %v2541, %v2540
    %v2653 = vpack.c.b16 %v2543, %v2542
    %v2654 = vpack.c.b16 %v2545, %v2544
    %v2655 = vpack.c.b16 %v2547, %v2546
    %v2656 = vpack.c.b16 %v2549, %v2548
    %v2657 = vpack.c.b16 %v2551, %v2550
    %v2658 = vpack.c.b16 %v2553, %v2552
    %v2659 = vpack.c.b16 %v2555, %v2554
    %v2660 = vpack.c.b16 %v2557, %v2556
    %v2661 = vpack.c.b16 %v2559, %v2558
    %v2662 = vpack.c.b16 %v2561, %v2560
    %v2663 = vpack.c.b16 %v2563, %v2562
    %v2664 = vpack.c.b16 %v2565, %v2564
    %v2665 = vpack.c.b16 %v2567, %v2566
    %v2666 = vpack.c.b16 %v2569, %v2568
    %v2667 = vpack.c.b16 %v2571, %v2570
    %v2668 = vpack.c.b16 %v2573, %v2572
    %v2669 = vpack.c.b16 %v2575, %v2574
    %v2670 = vpack.c.b16 %v2577, %v2576
    %v2671 = vpack.c.b16 %v2579, %v2578
    %v2672 = vpack.c.b16 %v2581, %v2580
    %v2673 = vpack.c.b16 %v2583, %v2582
    %v2674 = vpack.c.b16 %v2585, %v2584
    %v2675 = vpack.c.b16 %v2587, %v2586
    %v2676 = vpack.c.b16 %v2589, %v2588
    %v2677 = vpack.c.b16 %v2591, %v2590
    %v2678 = vpack.c.b16 %v2593, %v2592
    %v2679 = vpack.c.b16 %v2595, %v2594
    %v2680 = vpack.c.b16 %v2597, %v2596
    %v2681 = vpack.c.b16 %v2599, %v2598
    %v2682 = vpack.c.b16 %v2601, %v2600
    %v2683 = vpack.c.b16 %v2603, %v2602
    %v2684 = vpack.c.b16 %v2605, %v2604
    %v2685 = vpack.c.b16 %v2607, %v2606
    %v2686 = vpack.c.b16 %v2609, %v2608
    %v2687 = vpack.c.b16 %v2611, %v2610
    %v2688 = vpack.c.b16 %v2613, %v2612
    %v2689 = vpack.c.b16 %v2615, %v2614
    %v2690 = vpack.c.b16 %v2617, %v2616
    %v2691 = vpack.c.b16 %v2619, %v2618
    %v2692 = vpack.c.b16 %v2621, %v2620
    %v2693 = vpack.c.b16 %v2623, %v2622
    %v2694 = vpack.c.b16 %v2625, %v2624
    %v2695 = vpack.c.b16 %v2627, %v2626
    %v2696 = vpack.c.b16 %v2629, %v2628
    %v2697 = vpack.c.b16 %v2631, %v2630
    %v2698 = vpack.c.b16 %v2633, %v2632
    %v2699 = vpack.c.b16 %v2635, %v2634
    %2764 = vmatprep.subr.bf16.mxu0 0
    %2765 = vmatpush1.bf16.msra.mxu0 %v2643
    %2766 = vmatprep.subr.bf16.mxu0 0
    %2767 = vmatpush1.bf16.msra.mxu0 %v2642
    %2768 = vmatprep.subr.bf16.mxu0 0
    %2769 = vmatpush1.bf16.msra.mxu0 %v2641
    %2770 = vmatprep.subr.bf16.mxu0 0
    %2771 = vmatpush1.bf16.msra.mxu0 %v2640
    %2772 = vmatprep.subr.bf16.mxu0 0
    %2773 = vmatpush1.bf16.msra.mxu0 %v2639
    %2774 = vmatprep.subr.bf16.mxu0 0
    %2775 = vmatpush1.bf16.msra.mxu0 %v2638
    %2776 = vmatprep.subr.bf16.mxu0 0
    %2777 = vmatpush1.bf16.msra.mxu0 %v2637
    %2778 = vmatprep.subr.bf16.mxu0 0
    %2779 = vmatpush1.bf16.msra.mxu0 %v2636
    %2780 = vmatprep.subr.bf16.mxu0 0
    %2781 = vmatpush2.bf16.msra.mxu0 %v2651
    %2782 = vmatprep.subr.bf16.mxu0 0
    %2783 = vmatpush2.bf16.msra.mxu0 %v2650
    %2784 = vmatprep.subr.bf16.mxu0 0
    %2785 = vmatpush2.bf16.msra.mxu0 %v2649
    %2786 = vmatprep.subr.bf16.mxu0 0
    %2787 = vmatpush2.bf16.msra.mxu0 %v2648
    %2788 = vmatprep.subr.bf16.mxu0 0
    %2789 = vmatpush2.bf16.msra.mxu0 %v2647
    %2790 = vmatprep.subr.bf16.mxu0 0
    %2791 = vmatpush2.bf16.msra.mxu0 %v2646
    %2792 = vmatprep.subr.bf16.mxu0 0
    %2793 = vmatpush2.bf16.msra.mxu0 %v2645
    %2794 = vmatprep.subr.bf16.mxu0 0
    %2795 = vmatpush2.bf16.msra.mxu0 %v2644
    %2796 = vmatprep.mubr.bf16.mxu0 %v969
    %2797 = vmatmul.mubr.bf16.gmra.mxu0 %v968
    %v2798 = vpop.f32.mrf.mxu0
    %v2799 = vadd.f32 %v2254, %v2798
    %v2800 = vpop.f32.mrf.mxu0
    %v2801 = vpop.f32.mrf.mxu0
    %v2802 = vadd.f32 %v2257, %v2801
    %v2803 = vpop.f32.mrf.mxu0
    %2804 = vmatprep.mubr.bf16.mxu0 %v977
    %2805 = vmatmul.mubr.bf16.gmra.mxu0 %v976
    %v2806 = vpop.f32.mrf.mxu0
    %v2807 = vadd.f32 %v2262, %v2806
    %v2808 = vpop.f32.mrf.mxu0
    %v2809 = vpop.f32.mrf.mxu0
    %v2810 = vadd.f32 %v2265, %v2809
    %v2811 = vpop.f32.mrf.mxu0
    %2812 = vmatprep.mubr.bf16.mxu0 %v985
    %2813 = vmatmul.mubr.bf16.gmra.mxu0 %v984
    %v2814 = vpop.f32.mrf.mxu0
    %v2815 = vadd.f32 %v2270, %v2814
    %v2816 = vpop.f32.mrf.mxu0
    %v2817 = vpop.f32.mrf.mxu0
    %v2818 = vadd.f32 %v2273, %v2817
    %v2819 = vpop.f32.mrf.mxu0
    %2820 = vmatprep.mubr.bf16.mxu0 %v993
    %2821 = vmatmul.mubr.bf16.gmra.mxu0 %v992
    %v2822 = vpop.f32.mrf.mxu0
    %v2823 = vadd.f32 %v2278, %v2822
    %v2824 = vpop.f32.mrf.mxu0
    %v2825 = vpop.f32.mrf.mxu0
    %v2826 = vadd.f32 %v2281, %v2825
    %v2827 = vpop.f32.mrf.mxu0
    %2828 = vmatprep.mubr.bf16.mxu0 %v1001
    %2829 = vmatmul.mubr.bf16.gmra.mxu0 %v1000
    %v2830 = vpop.f32.mrf.mxu0
    %v2831 = vadd.f32 %v2286, %v2830
    %v2832 = vpop.f32.mrf.mxu0
    %v2833 = vpop.f32.mrf.mxu0
    %v2834 = vadd.f32 %v2289, %v2833
    %v2835 = vpop.f32.mrf.mxu0
    %2836 = vmatprep.mubr.bf16.mxu0 %v1009
    %2837 = vmatmul.mubr.bf16.gmra.mxu0 %v1008
    %v2838 = vpop.f32.mrf.mxu0
    %v2839 = vadd.f32 %v2294, %v2838
    %v2840 = vpop.f32.mrf.mxu0
    %v2841 = vpop.f32.mrf.mxu0
    %v2842 = vadd.f32 %v2297, %v2841
    %v2843 = vpop.f32.mrf.mxu0
    %2844 = vmatprep.mubr.bf16.mxu0 %v1017
    %2845 = vmatmul.mubr.bf16.gmra.mxu0 %v1016
    %v2846 = vpop.f32.mrf.mxu0
    %v2847 = vadd.f32 %v2302, %v2846
    %v2848 = vpop.f32.mrf.mxu0
    %v2849 = vpop.f32.mrf.mxu0
    %v2850 = vadd.f32 %v2305, %v2849
    %v2851 = vpop.f32.mrf.mxu0
    %2852 = vmatprep.mubr.bf16.mxu0 %v1025
    %2853 = vmatmul.mubr.bf16.gmra.mxu0 %v1024
    %v2854 = vpop.f32.mrf.mxu0
    %v2855 = vadd.f32 %v2310, %v2854
    %v2856 = vpop.f32.mrf.mxu0
    %v2857 = vpop.f32.mrf.mxu0
    %v2858 = vadd.f32 %v2313, %v2857
    %v2859 = vpop.f32.mrf.mxu0
    %2860 = vmatprep.mubr.bf16.mxu0 %v1033
    %2861 = vmatmul.mubr.bf16.gmra.mxu0 %v1032
    %v2862 = vpop.f32.mrf.mxu0
    %v2863 = vadd.f32 %v2318, %v2862
    %v2864 = vpop.f32.mrf.mxu0
    %v2865 = vpop.f32.mrf.mxu0
    %v2866 = vadd.f32 %v2321, %v2865
    %v2867 = vpop.f32.mrf.mxu0
    %2868 = vmatprep.mubr.bf16.mxu0 %v1041
    %2869 = vmatmul.mubr.bf16.gmra.mxu0 %v1040
    %v2870 = vpop.f32.mrf.mxu0
    %v2871 = vadd.f32 %v2326, %v2870
    %v2872 = vpop.f32.mrf.mxu0
    %v2873 = vpop.f32.mrf.mxu0
    %v2874 = vadd.f32 %v2329, %v2873
    %v2875 = vpop.f32.mrf.mxu0
    %2876 = vmatprep.mubr.bf16.mxu0 %v1049
    %2877 = vmatmul.mubr.bf16.gmra.mxu0 %v1048
    %v2878 = vpop.f32.mrf.mxu0
    %v2879 = vadd.f32 %v2334, %v2878
    %v2880 = vpop.f32.mrf.mxu0
    %v2881 = vpop.f32.mrf.mxu0
    %v2882 = vadd.f32 %v2337, %v2881
    %v2883 = vpop.f32.mrf.mxu0
    %2884 = vmatprep.mubr.bf16.mxu0 %v1057
    %2885 = vmatmul.mubr.bf16.gmra.mxu0 %v1056
    %v2886 = vpop.f32.mrf.mxu0
    %v2887 = vadd.f32 %v2342, %v2886
    %v2888 = vpop.f32.mrf.mxu0
    %v2889 = vpop.f32.mrf.mxu0
    %v2890 = vadd.f32 %v2345, %v2889
    %v2891 = vpop.f32.mrf.mxu0
    %2892 = vmatprep.mubr.bf16.mxu0 %v1065
    %2893 = vmatmul.mubr.bf16.gmra.mxu0 %v1064
    %v2894 = vpop.f32.mrf.mxu0
    %v2895 = vadd.f32 %v2350, %v2894
    %v2896 = vpop.f32.mrf.mxu0
    %v2897 = vpop.f32.mrf.mxu0
    %v2898 = vadd.f32 %v2353, %v2897
    %v2899 = vpop.f32.mrf.mxu0
    %2900 = vmatprep.mubr.bf16.mxu0 %v1073
    %2901 = vmatmul.mubr.bf16.gmra.mxu0 %v1072
    %v2902 = vpop.f32.mrf.mxu0
    %v2903 = vadd.f32 %v2358, %v2902
    %v2904 = vpop.f32.mrf.mxu0
    %v2905 = vpop.f32.mrf.mxu0
    %v2906 = vadd.f32 %v2361, %v2905
    %v2907 = vpop.f32.mrf.mxu0
    %2908 = vmatprep.mubr.bf16.mxu0 %v1081
    %2909 = vmatmul.mubr.bf16.gmra.mxu0 %v1080
    %v2910 = vpop.f32.mrf.mxu0
    %v2911 = vadd.f32 %v2366, %v2910
    %v2912 = vpop.f32.mrf.mxu0
    %v2913 = vpop.f32.mrf.mxu0
    %v2914 = vadd.f32 %v2369, %v2913
    %v2915 = vpop.f32.mrf.mxu0
    %2916 = vmatprep.mubr.bf16.mxu0 %v1089
    %2917 = vmatmul.mubr.bf16.gmra.mxu0 %v1088
    %v2918 = vpop.f32.mrf.mxu0
    %v2919 = vadd.f32 %v2374, %v2918
    %v2920 = vpop.f32.mrf.mxu0
    %v2921 = vpop.f32.mrf.mxu0
    %v2922 = vadd.f32 %v2377, %v2921
    %v2923 = vpop.f32.mrf.mxu0
    %2924 = vdwg.mxu0
    %2925 = vmatprep.subr.bf16.mxu0 0
    %2926 = vmatpush1.bf16.msra.mxu0 %v2659
    %2927 = vmatprep.subr.bf16.mxu0 0
    %2928 = vmatpush1.bf16.msra.mxu0 %v2658
    %2929 = vmatprep.subr.bf16.mxu0 0
    %2930 = vmatpush1.bf16.msra.mxu0 %v2657
    %2931 = vmatprep.subr.bf16.mxu0 0
    %2932 = vmatpush1.bf16.msra.mxu0 %v2656
    %2933 = vmatprep.subr.bf16.mxu0 0
    %2934 = vmatpush1.bf16.msra.mxu0 %v2655
    %2935 = vmatprep.subr.bf16.mxu0 0
    %2936 = vmatpush1.bf16.msra.mxu0 %v2654
    %2937 = vmatprep.subr.bf16.mxu0 0
    %2938 = vmatpush1.bf16.msra.mxu0 %v2653
    %2939 = vmatprep.subr.bf16.mxu0 0
    %2940 = vmatpush1.bf16.msra.mxu0 %v2652
    %2941 = vmatprep.subr.bf16.mxu0 0
    %2942 = vmatpush2.bf16.msra.mxu0 %v2667
    %2943 = vmatprep.subr.bf16.mxu0 0
    %2944 = vmatpush2.bf16.msra.mxu0 %v2666
    %2945 = vmatprep.subr.bf16.mxu0 0
    %2946 = vmatpush2.bf16.msra.mxu0 %v2665
    %2947 = vmatprep.subr.bf16.mxu0 0
    %2948 = vmatpush2.bf16.msra.mxu0 %v2664
    %2949 = vmatprep.subr.bf16.mxu0 0
    %2950 = vmatpush2.bf16.msra.mxu0 %v2663
    %2951 = vmatprep.subr.bf16.mxu0 0
    %2952 = vmatpush2.bf16.msra.mxu0 %v2662
    %2953 = vmatprep.subr.bf16.mxu0 0
    %2954 = vmatpush2.bf16.msra.mxu0 %v2661
    %2955 = vmatprep.subr.bf16.mxu0 0
    %2956 = vmatpush2.bf16.msra.mxu0 %v2660
    %2957 = vmatprep.mubr.bf16.mxu0 %v971
    %2958 = vmatmul.mubr.bf16.gmra.mxu0 %v970
    %v2959 = vpop.f32.mrf.mxu0
    %v2960 = vadd.f32 %v2799, %v2959
    %v2961 = vpop.f32.mrf.mxu0
    %v2962 = vpop.f32.mrf.mxu0
    %v2963 = vadd.f32 %v2802, %v2962
    %v2964 = vpop.f32.mrf.mxu0
    %2965 = vmatprep.mubr.bf16.mxu0 %v979
    %2966 = vmatmul.mubr.bf16.gmra.mxu0 %v978
    %v2967 = vpop.f32.mrf.mxu0
    %v2968 = vadd.f32 %v2807, %v2967
    %v2969 = vpop.f32.mrf.mxu0
    %v2970 = vpop.f32.mrf.mxu0
    %v2971 = vadd.f32 %v2810, %v2970
    %v2972 = vpop.f32.mrf.mxu0
    %2973 = vmatprep.mubr.bf16.mxu0 %v987
    %2974 = vmatmul.mubr.bf16.gmra.mxu0 %v986
    %v2975 = vpop.f32.mrf.mxu0
    %v2976 = vadd.f32 %v2815, %v2975
    %v2977 = vpop.f32.mrf.mxu0
    %v2978 = vpop.f32.mrf.mxu0
    %v2979 = vadd.f32 %v2818, %v2978
    %v2980 = vpop.f32.mrf.mxu0
    %2981 = vmatprep.mubr.bf16.mxu0 %v995
    %2982 = vmatmul.mubr.bf16.gmra.mxu0 %v994
    %v2983 = vpop.f32.mrf.mxu0
    %v2984 = vadd.f32 %v2823, %v2983
    %v2985 = vpop.f32.mrf.mxu0
    %v2986 = vpop.f32.mrf.mxu0
    %v2987 = vadd.f32 %v2826, %v2986
    %v2988 = vpop.f32.mrf.mxu0
    %2989 = vmatprep.mubr.bf16.mxu0 %v1003
    %2990 = vmatmul.mubr.bf16.gmra.mxu0 %v1002
    %v2991 = vpop.f32.mrf.mxu0
    %v2992 = vadd.f32 %v2831, %v2991
    %v2993 = vpop.f32.mrf.mxu0
    %v2994 = vpop.f32.mrf.mxu0
    %v2995 = vadd.f32 %v2834, %v2994
    %v2996 = vpop.f32.mrf.mxu0
    %2997 = vmatprep.mubr.bf16.mxu0 %v1011
    %2998 = vmatmul.mubr.bf16.gmra.mxu0 %v1010
    %v2999 = vpop.f32.mrf.mxu0
    %v3000 = vadd.f32 %v2839, %v2999
    %v3001 = vpop.f32.mrf.mxu0
    %v3002 = vpop.f32.mrf.mxu0
    %v3003 = vadd.f32 %v2842, %v3002
    %v3004 = vpop.f32.mrf.mxu0
    %3005 = vmatprep.mubr.bf16.mxu0 %v1019
    %3006 = vmatmul.mubr.bf16.gmra.mxu0 %v1018
    %v3007 = vpop.f32.mrf.mxu0
    %v3008 = vadd.f32 %v2847, %v3007
    %v3009 = vpop.f32.mrf.mxu0
    %v3010 = vpop.f32.mrf.mxu0
    %v3011 = vadd.f32 %v2850, %v3010
    %v3012 = vpop.f32.mrf.mxu0
    %3013 = vmatprep.mubr.bf16.mxu0 %v1027
    %3014 = vmatmul.mubr.bf16.gmra.mxu0 %v1026
    %v3015 = vpop.f32.mrf.mxu0
    %v3016 = vadd.f32 %v2855, %v3015
    %v3017 = vpop.f32.mrf.mxu0
    %v3018 = vpop.f32.mrf.mxu0
    %v3019 = vadd.f32 %v2858, %v3018
    %v3020 = vpop.f32.mrf.mxu0
    %3021 = vmatprep.mubr.bf16.mxu0 %v1035
    %3022 = vmatmul.mubr.bf16.gmra.mxu0 %v1034
    %v3023 = vpop.f32.mrf.mxu0
    %v3024 = vadd.f32 %v2863, %v3023
    %v3025 = vpop.f32.mrf.mxu0
    %v3026 = vpop.f32.mrf.mxu0
    %v3027 = vadd.f32 %v2866, %v3026
    %v3028 = vpop.f32.mrf.mxu0
    %3029 = vmatprep.mubr.bf16.mxu0 %v1043
    %3030 = vmatmul.mubr.bf16.gmra.mxu0 %v1042
    %v3031 = vpop.f32.mrf.mxu0
    %v3032 = vadd.f32 %v2871, %v3031
    %v3033 = vpop.f32.mrf.mxu0
    %v3034 = vpop.f32.mrf.mxu0
    %v3035 = vadd.f32 %v2874, %v3034
    %v3036 = vpop.f32.mrf.mxu0
    %3037 = vmatprep.mubr.bf16.mxu0 %v1051
    %3038 = vmatmul.mubr.bf16.gmra.mxu0 %v1050
    %v3039 = vpop.f32.mrf.mxu0
    %v3040 = vadd.f32 %v2879, %v3039
    %v3041 = vpop.f32.mrf.mxu0
    %v3042 = vpop.f32.mrf.mxu0
    %v3043 = vadd.f32 %v2882, %v3042
    %v3044 = vpop.f32.mrf.mxu0
    %3045 = vmatprep.mubr.bf16.mxu0 %v1059
    %3046 = vmatmul.mubr.bf16.gmra.mxu0 %v1058
    %v3047 = vpop.f32.mrf.mxu0
    %v3048 = vadd.f32 %v2887, %v3047
    %v3049 = vpop.f32.mrf.mxu0
    %v3050 = vpop.f32.mrf.mxu0
    %v3051 = vadd.f32 %v2890, %v3050
    %v3052 = vpop.f32.mrf.mxu0
    %3053 = vmatprep.mubr.bf16.mxu0 %v1067
    %3054 = vmatmul.mubr.bf16.gmra.mxu0 %v1066
    %v3055 = vpop.f32.mrf.mxu0
    %v3056 = vadd.f32 %v2895, %v3055
    %v3057 = vpop.f32.mrf.mxu0
    %v3058 = vpop.f32.mrf.mxu0
    %v3059 = vadd.f32 %v2898, %v3058
    %v3060 = vpop.f32.mrf.mxu0
    %3061 = vmatprep.mubr.bf16.mxu0 %v1075
    %3062 = vmatmul.mubr.bf16.gmra.mxu0 %v1074
    %v3063 = vpop.f32.mrf.mxu0
    %v3064 = vadd.f32 %v2903, %v3063
    %v3065 = vpop.f32.mrf.mxu0
    %v3066 = vpop.f32.mrf.mxu0
    %v3067 = vadd.f32 %v2906, %v3066
    %v3068 = vpop.f32.mrf.mxu0
    %3069 = vmatprep.mubr.bf16.mxu0 %v1083
    %3070 = vmatmul.mubr.bf16.gmra.mxu0 %v1082
    %v3071 = vpop.f32.mrf.mxu0
    %v3072 = vadd.f32 %v2911, %v3071
    %v3073 = vpop.f32.mrf.mxu0
    %v3074 = vpop.f32.mrf.mxu0
    %v3075 = vadd.f32 %v2914, %v3074
    %v3076 = vpop.f32.mrf.mxu0
    %3077 = vmatprep.mubr.bf16.mxu0 %v1091
    %3078 = vmatmul.mubr.bf16.gmra.mxu0 %v1090
    %v3079 = vpop.f32.mrf.mxu0
    %v3080 = vadd.f32 %v2919, %v3079
    %v3081 = vpop.f32.mrf.mxu0
    %v3082 = vpop.f32.mrf.mxu0
    %v3083 = vadd.f32 %v2922, %v3082
    %v3084 = vpop.f32.mrf.mxu0
    %3085 = vdwg.mxu0
    %3086 = vmatprep.subr.bf16.mxu0 0
    %3087 = vmatpush1.bf16.msra.mxu0 %v2675
    %3088 = vmatprep.subr.bf16.mxu0 0
    %3089 = vmatpush1.bf16.msra.mxu0 %v2674
    %3090 = vmatprep.subr.bf16.mxu0 0
    %3091 = vmatpush1.bf16.msra.mxu0 %v2673
    %3092 = vmatprep.subr.bf16.mxu0 0
    %3093 = vmatpush1.bf16.msra.mxu0 %v2672
    %3094 = vmatprep.subr.bf16.mxu0 0
    %3095 = vmatpush1.bf16.msra.mxu0 %v2671
    %3096 = vmatprep.subr.bf16.mxu0 0
    %3097 = vmatpush1.bf16.msra.mxu0 %v2670
    %3098 = vmatprep.subr.bf16.mxu0 0
    %3099 = vmatpush1.bf16.msra.mxu0 %v2669
    %3100 = vmatprep.subr.bf16.mxu0 0
    %3101 = vmatpush1.bf16.msra.mxu0 %v2668
    %3102 = vmatprep.subr.bf16.mxu0 0
    %3103 = vmatpush2.bf16.msra.mxu0 %v2683
    %3104 = vmatprep.subr.bf16.mxu0 0
    %3105 = vmatpush2.bf16.msra.mxu0 %v2682
    %3106 = vmatprep.subr.bf16.mxu0 0
    %3107 = vmatpush2.bf16.msra.mxu0 %v2681
    %3108 = vmatprep.subr.bf16.mxu0 0
    %3109 = vmatpush2.bf16.msra.mxu0 %v2680
    %3110 = vmatprep.subr.bf16.mxu0 0
    %3111 = vmatpush2.bf16.msra.mxu0 %v2679
    %3112 = vmatprep.subr.bf16.mxu0 0
    %3113 = vmatpush2.bf16.msra.mxu0 %v2678
    %3114 = vmatprep.subr.bf16.mxu0 0
    %3115 = vmatpush2.bf16.msra.mxu0 %v2677
    %3116 = vmatprep.subr.bf16.mxu0 0
    %3117 = vmatpush2.bf16.msra.mxu0 %v2676
    %3118 = vmatprep.mubr.bf16.mxu0 %v973
    %3119 = vmatmul.mubr.bf16.gmra.mxu0 %v972
    %v3120 = vpop.f32.mrf.mxu0
    %v3121 = vadd.f32 %v2960, %v3120
    %v3122 = vpop.f32.mrf.mxu0
    %v3123 = vpop.f32.mrf.mxu0
    %v3124 = vadd.f32 %v2963, %v3123
    %v3125 = vpop.f32.mrf.mxu0
    %3126 = vmatprep.mubr.bf16.mxu0 %v981
    %3127 = vmatmul.mubr.bf16.gmra.mxu0 %v980
    %v3128 = vpop.f32.mrf.mxu0
    %v3129 = vadd.f32 %v2968, %v3128
    %v3130 = vpop.f32.mrf.mxu0
    %v3131 = vpop.f32.mrf.mxu0
    %v3132 = vadd.f32 %v2971, %v3131
    %v3133 = vpop.f32.mrf.mxu0
    %3134 = vmatprep.mubr.bf16.mxu0 %v989
    %3135 = vmatmul.mubr.bf16.gmra.mxu0 %v988
    %v3136 = vpop.f32.mrf.mxu0
    %v3137 = vadd.f32 %v2976, %v3136
    %v3138 = vpop.f32.mrf.mxu0
    %v3139 = vpop.f32.mrf.mxu0
    %v3140 = vadd.f32 %v2979, %v3139
    %v3141 = vpop.f32.mrf.mxu0
    %3142 = vmatprep.mubr.bf16.mxu0 %v997
    %3143 = vmatmul.mubr.bf16.gmra.mxu0 %v996
    %v3144 = vpop.f32.mrf.mxu0
    %v3145 = vadd.f32 %v2984, %v3144
    %v3146 = vpop.f32.mrf.mxu0
    %v3147 = vpop.f32.mrf.mxu0
    %v3148 = vadd.f32 %v2987, %v3147
    %v3149 = vpop.f32.mrf.mxu0
    %3150 = vmatprep.mubr.bf16.mxu0 %v1005
    %3151 = vmatmul.mubr.bf16.gmra.mxu0 %v1004
    %v3152 = vpop.f32.mrf.mxu0
    %v3153 = vadd.f32 %v2992, %v3152
    %v3154 = vpop.f32.mrf.mxu0
    %v3155 = vpop.f32.mrf.mxu0
    %v3156 = vadd.f32 %v2995, %v3155
    %v3157 = vpop.f32.mrf.mxu0
    %3158 = vmatprep.mubr.bf16.mxu0 %v1013
    %3159 = vmatmul.mubr.bf16.gmra.mxu0 %v1012
    %v3160 = vpop.f32.mrf.mxu0
    %v3161 = vadd.f32 %v3000, %v3160
    %v3162 = vpop.f32.mrf.mxu0
    %v3163 = vpop.f32.mrf.mxu0
    %v3164 = vadd.f32 %v3003, %v3163
    %v3165 = vpop.f32.mrf.mxu0
    %3166 = vmatprep.mubr.bf16.mxu0 %v1021
    %3167 = vmatmul.mubr.bf16.gmra.mxu0 %v1020
    %v3168 = vpop.f32.mrf.mxu0
    %v3169 = vadd.f32 %v3008, %v3168
    %v3170 = vpop.f32.mrf.mxu0
    %v3171 = vpop.f32.mrf.mxu0
    %v3172 = vadd.f32 %v3011, %v3171
    %v3173 = vpop.f32.mrf.mxu0
    %3174 = vmatprep.mubr.bf16.mxu0 %v1029
    %3175 = vmatmul.mubr.bf16.gmra.mxu0 %v1028
    %v3176 = vpop.f32.mrf.mxu0
    %v3177 = vadd.f32 %v3016, %v3176
    %v3178 = vpop.f32.mrf.mxu0
    %v3179 = vpop.f32.mrf.mxu0
    %v3180 = vadd.f32 %v3019, %v3179
    %v3181 = vpop.f32.mrf.mxu0
    %3182 = vmatprep.mubr.bf16.mxu0 %v1037
    %3183 = vmatmul.mubr.bf16.gmra.mxu0 %v1036
    %v3184 = vpop.f32.mrf.mxu0
    %v3185 = vadd.f32 %v3024, %v3184
    %v3186 = vpop.f32.mrf.mxu0
    %v3187 = vpop.f32.mrf.mxu0
    %v3188 = vadd.f32 %v3027, %v3187
    %v3189 = vpop.f32.mrf.mxu0
    %3190 = vmatprep.mubr.bf16.mxu0 %v1045
    %3191 = vmatmul.mubr.bf16.gmra.mxu0 %v1044
    %v3192 = vpop.f32.mrf.mxu0
    %v3193 = vadd.f32 %v3032, %v3192
    %v3194 = vpop.f32.mrf.mxu0
    %v3195 = vpop.f32.mrf.mxu0
    %v3196 = vadd.f32 %v3035, %v3195
    %v3197 = vpop.f32.mrf.mxu0
    %3198 = vmatprep.mubr.bf16.mxu0 %v1053
    %3199 = vmatmul.mubr.bf16.gmra.mxu0 %v1052
    %v3200 = vpop.f32.mrf.mxu0
    %v3201 = vadd.f32 %v3040, %v3200
    %v3202 = vpop.f32.mrf.mxu0
    %v3203 = vpop.f32.mrf.mxu0
    %v3204 = vadd.f32 %v3043, %v3203
    %v3205 = vpop.f32.mrf.mxu0
    %3206 = vmatprep.mubr.bf16.mxu0 %v1061
    %3207 = vmatmul.mubr.bf16.gmra.mxu0 %v1060
    %v3208 = vpop.f32.mrf.mxu0
    %v3209 = vadd.f32 %v3048, %v3208
    %v3210 = vpop.f32.mrf.mxu0
    %v3211 = vpop.f32.mrf.mxu0
    %v3212 = vadd.f32 %v3051, %v3211
    %v3213 = vpop.f32.mrf.mxu0
    %3214 = vmatprep.mubr.bf16.mxu0 %v1069
    %3215 = vmatmul.mubr.bf16.gmra.mxu0 %v1068
    %v3216 = vpop.f32.mrf.mxu0
    %v3217 = vadd.f32 %v3056, %v3216
    %v3218 = vpop.f32.mrf.mxu0
    %v3219 = vpop.f32.mrf.mxu0
    %v3220 = vadd.f32 %v3059, %v3219
    %v3221 = vpop.f32.mrf.mxu0
    %3222 = vmatprep.mubr.bf16.mxu0 %v1077
    %3223 = vmatmul.mubr.bf16.gmra.mxu0 %v1076
    %v3224 = vpop.f32.mrf.mxu0
    %v3225 = vadd.f32 %v3064, %v3224
    %v3226 = vpop.f32.mrf.mxu0
    %v3227 = vpop.f32.mrf.mxu0
    %v3228 = vadd.f32 %v3067, %v3227
    %v3229 = vpop.f32.mrf.mxu0
    %3230 = vmatprep.mubr.bf16.mxu0 %v1085
    %3231 = vmatmul.mubr.bf16.gmra.mxu0 %v1084
    %v3232 = vpop.f32.mrf.mxu0
    %v3233 = vadd.f32 %v3072, %v3232
    %v3234 = vpop.f32.mrf.mxu0
    %v3235 = vpop.f32.mrf.mxu0
    %v3236 = vadd.f32 %v3075, %v3235
    %v3237 = vpop.f32.mrf.mxu0
    %3238 = vmatprep.mubr.bf16.mxu0 %v1093
    %3239 = vmatmul.mubr.bf16.gmra.mxu0 %v1092
    %v3240 = vpop.f32.mrf.mxu0
    %v3241 = vadd.f32 %v3080, %v3240
    %v3242 = vpop.f32.mrf.mxu0
    %v3243 = vpop.f32.mrf.mxu0
    %v3244 = vadd.f32 %v3083, %v3243
    %v3245 = vpop.f32.mrf.mxu0
    %3246 = vdwg.mxu0
    %3247 = vmatprep.subr.bf16.mxu0 0
    %3248 = vmatpush1.bf16.msra.mxu0 %v2691
    %3249 = vmatprep.subr.bf16.mxu0 0
    %3250 = vmatpush1.bf16.msra.mxu0 %v2690
    %3251 = vmatprep.subr.bf16.mxu0 0
    %3252 = vmatpush1.bf16.msra.mxu0 %v2689
    %3253 = vmatprep.subr.bf16.mxu0 0
    %3254 = vmatpush1.bf16.msra.mxu0 %v2688
    %3255 = vmatprep.subr.bf16.mxu0 0
    %3256 = vmatpush1.bf16.msra.mxu0 %v2687
    %3257 = vmatprep.subr.bf16.mxu0 0
    %3258 = vmatpush1.bf16.msra.mxu0 %v2686
    %3259 = vmatprep.subr.bf16.mxu0 0
    %3260 = vmatpush1.bf16.msra.mxu0 %v2685
    %3261 = vmatprep.subr.bf16.mxu0 0
    %3262 = vmatpush1.bf16.msra.mxu0 %v2684
    %3263 = vmatprep.subr.bf16.mxu0 0
    %3264 = vmatpush2.bf16.msra.mxu0 %v2699
    %3265 = vmatprep.subr.bf16.mxu0 0
    %3266 = vmatpush2.bf16.msra.mxu0 %v2698
    %3267 = vmatprep.subr.bf16.mxu0 0
    %3268 = vmatpush2.bf16.msra.mxu0 %v2697
    %3269 = vmatprep.subr.bf16.mxu0 0
    %3270 = vmatpush2.bf16.msra.mxu0 %v2696
    %3271 = vmatprep.subr.bf16.mxu0 0
    %3272 = vmatpush2.bf16.msra.mxu0 %v2695
    %3273 = vmatprep.subr.bf16.mxu0 0
    %3274 = vmatpush2.bf16.msra.mxu0 %v2694
    %3275 = vmatprep.subr.bf16.mxu0 0
    %3276 = vmatpush2.bf16.msra.mxu0 %v2693
    %3277 = vmatprep.subr.bf16.mxu0 0
    %3278 = vmatpush2.bf16.msra.mxu0 %v2692
    %3279 = vmatprep.mubr.bf16.mxu0 %v975
    %3280 = vmatmul.mubr.bf16.gmra.mxu0 %v974
    %v3281 = vpop.f32.mrf.mxu0
    %v3282 = vadd.f32 %v3121, %v3281
    %v3283 = vpop.f32.mrf.mxu0
    %v3284 = vpop.f32.mrf.mxu0
    %v3285 = vadd.f32 %v3124, %v3284
    %v3286 = vpop.f32.mrf.mxu0
    %3287 = vmatprep.mubr.bf16.mxu0 %v983
    %3288 = vmatmul.mubr.bf16.gmra.mxu0 %v982
    %v3289 = vpop.f32.mrf.mxu0
    %v3290 = vadd.f32 %v3129, %v3289
    %v3291 = vpop.f32.mrf.mxu0
    %v3292 = vpop.f32.mrf.mxu0
    %v3293 = vadd.f32 %v3132, %v3292
    %v3294 = vpop.f32.mrf.mxu0
    %3295 = vmatprep.mubr.bf16.mxu0 %v991
    %3296 = vmatmul.mubr.bf16.gmra.mxu0 %v990
    %v3297 = vpop.f32.mrf.mxu0
    %v3298 = vadd.f32 %v3137, %v3297
    %v3299 = vpop.f32.mrf.mxu0
    %v3300 = vpop.f32.mrf.mxu0
    %v3301 = vadd.f32 %v3140, %v3300
    %v3302 = vpop.f32.mrf.mxu0
    %3303 = vmatprep.mubr.bf16.mxu0 %v999
    %3304 = vmatmul.mubr.bf16.gmra.mxu0 %v998
    %v3305 = vpop.f32.mrf.mxu0
    %v3306 = vadd.f32 %v3145, %v3305
    %v3307 = vpop.f32.mrf.mxu0
    %v3308 = vpop.f32.mrf.mxu0
    %v3309 = vadd.f32 %v3148, %v3308
    %v3310 = vpop.f32.mrf.mxu0
    %3311 = vmatprep.mubr.bf16.mxu0 %v1007
    %3312 = vmatmul.mubr.bf16.gmra.mxu0 %v1006
    %v3313 = vpop.f32.mrf.mxu0
    %v3314 = vadd.f32 %v3153, %v3313
    %v3315 = vpop.f32.mrf.mxu0
    %v3316 = vpop.f32.mrf.mxu0
    %v3317 = vadd.f32 %v3156, %v3316
    %v3318 = vpop.f32.mrf.mxu0
    %3319 = vmatprep.mubr.bf16.mxu0 %v1015
    %3320 = vmatmul.mubr.bf16.gmra.mxu0 %v1014
    %v3321 = vpop.f32.mrf.mxu0
    %v3322 = vadd.f32 %v3161, %v3321
    %v3323 = vpop.f32.mrf.mxu0
    %v3324 = vpop.f32.mrf.mxu0
    %v3325 = vadd.f32 %v3164, %v3324
    %v3326 = vpop.f32.mrf.mxu0
    %3327 = vmatprep.mubr.bf16.mxu0 %v1023
    %3328 = vmatmul.mubr.bf16.gmra.mxu0 %v1022
    %v3329 = vpop.f32.mrf.mxu0
    %v3330 = vadd.f32 %v3169, %v3329
    %v3331 = vpop.f32.mrf.mxu0
    %v3332 = vpop.f32.mrf.mxu0
    %v3333 = vadd.f32 %v3172, %v3332
    %v3334 = vpop.f32.mrf.mxu0
    %3335 = vmatprep.mubr.bf16.mxu0 %v1031
    %3336 = vmatmul.mubr.bf16.gmra.mxu0 %v1030
    %v3337 = vpop.f32.mrf.mxu0
    %v3338 = vadd.f32 %v3177, %v3337
    %v3339 = vpop.f32.mrf.mxu0
    %v3340 = vpop.f32.mrf.mxu0
    %v3341 = vadd.f32 %v3180, %v3340
    %v3342 = vpop.f32.mrf.mxu0
    %3343 = vmatprep.mubr.bf16.mxu0 %v1039
    %3344 = vmatmul.mubr.bf16.gmra.mxu0 %v1038
    %v3345 = vpop.f32.mrf.mxu0
    %v3346 = vadd.f32 %v3185, %v3345
    %v3347 = vpop.f32.mrf.mxu0
    %v3348 = vpop.f32.mrf.mxu0
    %v3349 = vadd.f32 %v3188, %v3348
    %v3350 = vpop.f32.mrf.mxu0
    %3351 = vmatprep.mubr.bf16.mxu0 %v1047
    %3352 = vmatmul.mubr.bf16.gmra.mxu0 %v1046
    %v3353 = vpop.f32.mrf.mxu0
    %v3354 = vadd.f32 %v3193, %v3353
    %v3355 = vpop.f32.mrf.mxu0
    %v3356 = vpop.f32.mrf.mxu0
    %v3357 = vadd.f32 %v3196, %v3356
    %v3358 = vpop.f32.mrf.mxu0
    %3359 = vmatprep.mubr.bf16.mxu0 %v1055
    %3360 = vmatmul.mubr.bf16.gmra.mxu0 %v1054
    %v3361 = vpop.f32.mrf.mxu0
    %v3362 = vadd.f32 %v3201, %v3361
    %v3363 = vpop.f32.mrf.mxu0
    %v3364 = vpop.f32.mrf.mxu0
    %v3365 = vadd.f32 %v3204, %v3364
    %v3366 = vpop.f32.mrf.mxu0
    %3367 = vmatprep.mubr.bf16.mxu0 %v1063
    %3368 = vmatmul.mubr.bf16.gmra.mxu0 %v1062
    %v3369 = vpop.f32.mrf.mxu0
    %v3370 = vadd.f32 %v3209, %v3369
    %v3371 = vpop.f32.mrf.mxu0
    %v3372 = vpop.f32.mrf.mxu0
    %v3373 = vadd.f32 %v3212, %v3372
    %v3374 = vpop.f32.mrf.mxu0
    %3375 = vmatprep.mubr.bf16.mxu0 %v1071
    %3376 = vmatmul.mubr.bf16.gmra.mxu0 %v1070
    %v3377 = vpop.f32.mrf.mxu0
    %v3378 = vadd.f32 %v3217, %v3377
    %v3379 = vpop.f32.mrf.mxu0
    %v3380 = vpop.f32.mrf.mxu0
    %v3381 = vadd.f32 %v3220, %v3380
    %v3382 = vpop.f32.mrf.mxu0
    %3383 = vmatprep.mubr.bf16.mxu0 %v1079
    %3384 = vmatmul.mubr.bf16.gmra.mxu0 %v1078
    %v3385 = vpop.f32.mrf.mxu0
    %v3386 = vadd.f32 %v3225, %v3385
    %v3387 = vpop.f32.mrf.mxu0
    %v3388 = vpop.f32.mrf.mxu0
    %v3389 = vadd.f32 %v3228, %v3388
    %v3390 = vpop.f32.mrf.mxu0
    %3391 = vmatprep.mubr.bf16.mxu0 %v1087
    %3392 = vmatmul.mubr.bf16.gmra.mxu0 %v1086
    %v3393 = vpop.f32.mrf.mxu0
    %v3394 = vadd.f32 %v3233, %v3393
    %v3395 = vpop.f32.mrf.mxu0
    %v3396 = vpop.f32.mrf.mxu0
    %v3397 = vadd.f32 %v3236, %v3396
    %v3398 = vpop.f32.mrf.mxu0
    %3399 = vmatprep.mubr.bf16.mxu0 %v1095
    %3400 = vmatmul.mubr.bf16.gmra.mxu0 %v1094
    %v3401 = vpop.f32.mrf.mxu0
    %v3402 = vadd.f32 %v3241, %v3401
    %v3403 = vpop.f32.mrf.mxu0
    %v3404 = vpop.f32.mrf.mxu0
    %v3405 = vadd.f32 %v3244, %v3404
    %v3406 = vpop.f32.mrf.mxu0
    %3407 = vdwg.mxu0
    %v3408 = vld [vmem:[#allocation7] sm:$0xf]
    %v3409 = vld [vmem:[#allocation7 + $0x4] sm:$0xf]
    %v3410 = vld [vmem:[#allocation7 + $0x8] sm:$0xf]
    %v3411 = vld [vmem:[#allocation7 + $0xc] sm:$0xf]
    %v3412 = vld [vmem:[#allocation7 + $0x10] sm:$0xf]
    %v3413 = vld [vmem:[#allocation7 + $0x14] sm:$0xf]
    %v3414 = vld [vmem:[#allocation7 + $0x18] sm:$0xf]
    %v3415 = vld [vmem:[#allocation7 + $0x1c] sm:$0xf]
    %v3416 = vld [vmem:[#allocation7 + $0x20] sm:$0xf]
    %v3417 = vld [vmem:[#allocation7 + $0x24] sm:$0xf]
    %v3418 = vld [vmem:[#allocation7 + $0x28] sm:$0xf]
    %v3419 = vld [vmem:[#allocation7 + $0x2c] sm:$0xf]
    %v3420 = vld [vmem:[#allocation7 + $0x30] sm:$0xf]
    %v3421 = vld [vmem:[#allocation7 + $0x34] sm:$0xf]
    %v3422 = vld [vmem:[#allocation7 + $0x38] sm:$0xf]
    %v3423 = vld [vmem:[#allocation7 + $0x3c] sm:$0xf]
    %v3424 = vld [vmem:[#allocation7 + $0x40] sm:$0xf]
    %v3425 = vld [vmem:[#allocation7 + $0x44] sm:$0xf]
    %v3426 = vld [vmem:[#allocation7 + $0x48] sm:$0xf]
    %v3427 = vld [vmem:[#allocation7 + $0x4c] sm:$0xf]
    %v3428 = vld [vmem:[#allocation7 + $0x50] sm:$0xf]
    %v3429 = vld [vmem:[#allocation7 + $0x54] sm:$0xf]
    %v3430 = vld [vmem:[#allocation7 + $0x58] sm:$0xf]
    %v3431 = vld [vmem:[#allocation7 + $0x5c] sm:$0xf]
    %v3432 = vld [vmem:[#allocation7 + $0x60] sm:$0xf]
    %v3433 = vld [vmem:[#allocation7 + $0x64] sm:$0xf]
    %v3434 = vld [vmem:[#allocation7 + $0x68] sm:$0xf]
    %v3435 = vld [vmem:[#allocation7 + $0x6c] sm:$0xf]
    %v3436 = vld [vmem:[#allocation7 + $0x70] sm:$0xf]
    %v3437 = vld [vmem:[#allocation7 + $0x74] sm:$0xf]
    %v3438 = vld [vmem:[#allocation7 + $0x78] sm:$0xf]
    %v3439 = vld [vmem:[#allocation7 + $0x7c] sm:$0xf]
    %v3440 = vld [vmem:[#allocation7 + $0x80] sm:$0xf]
    %v3441 = vld [vmem:[#allocation7 + $0x84] sm:$0xf]
    %v3442 = vld [vmem:[#allocation7 + $0x88] sm:$0xf]
    %v3443 = vld [vmem:[#allocation7 + $0x8c] sm:$0xf]
    %v3444 = vld [vmem:[#allocation7 + $0x90] sm:$0xf]
    %v3445 = vld [vmem:[#allocation7 + $0x94] sm:$0xf]
    %v3446 = vld [vmem:[#allocation7 + $0x98] sm:$0xf]
    %v3447 = vld [vmem:[#allocation7 + $0x9c] sm:$0xf]
    %v3448 = vld [vmem:[#allocation7 + $0xa0] sm:$0xf]
    %v3449 = vld [vmem:[#allocation7 + $0xa4] sm:$0xf]
    %v3450 = vld [vmem:[#allocation7 + $0xa8] sm:$0xf]
    %v3451 = vld [vmem:[#allocation7 + $0xac] sm:$0xf]
    %v3452 = vld [vmem:[#allocation7 + $0xb0] sm:$0xf]
    %v3453 = vld [vmem:[#allocation7 + $0xb4] sm:$0xf]
    %v3454 = vld [vmem:[#allocation7 + $0xb8] sm:$0xf]
    %v3455 = vld [vmem:[#allocation7 + $0xbc] sm:$0xf]
    %v3456 = vld [vmem:[#allocation7 + $0xc0] sm:$0xf]
    %v3457 = vld [vmem:[#allocation7 + $0xc4] sm:$0xf]
    %v3458 = vld [vmem:[#allocation7 + $0xc8] sm:$0xf]
    %v3459 = vld [vmem:[#allocation7 + $0xcc] sm:$0xf]
    %v3460 = vld [vmem:[#allocation7 + $0xd0] sm:$0xf]
    %v3461 = vld [vmem:[#allocation7 + $0xd4] sm:$0xf]
    %v3462 = vld [vmem:[#allocation7 + $0xd8] sm:$0xf]
    %v3463 = vld [vmem:[#allocation7 + $0xdc] sm:$0xf]
    %v3464 = vld [vmem:[#allocation7 + $0xe0] sm:$0xf]
    %v3465 = vld [vmem:[#allocation7 + $0xe4] sm:$0xf]
    %v3466 = vld [vmem:[#allocation7 + $0xe8] sm:$0xf]
    %v3467 = vld [vmem:[#allocation7 + $0xec] sm:$0xf]
    %v3468 = vld [vmem:[#allocation7 + $0xf0] sm:$0xf]
    %v3469 = vld [vmem:[#allocation7 + $0xf4] sm:$0xf]
    %v3470 = vld [vmem:[#allocation7 + $0xf8] sm:$0xf]
    %v3471 = vld [vmem:[#allocation7 + $0xfc] sm:$0xf]
    %v3472 = vld [vmem:[#allocation7 + $0x100] sm:$0xf]
    %v3473 = vld [vmem:[#allocation7 + $0x104] sm:$0xf]
    %v3474 = vld [vmem:[#allocation7 + $0x108] sm:$0xf]
    %v3475 = vld [vmem:[#allocation7 + $0x10c] sm:$0xf]
    %v3476 = vld [vmem:[#allocation7 + $0x110] sm:$0xf]
    %v3477 = vld [vmem:[#allocation7 + $0x114] sm:$0xf]
    %v3478 = vld [vmem:[#allocation7 + $0x118] sm:$0xf]
    %v3479 = vld [vmem:[#allocation7 + $0x11c] sm:$0xf]
    %v3480 = vld [vmem:[#allocation7 + $0x120] sm:$0xf]
    %v3481 = vld [vmem:[#allocation7 + $0x124] sm:$0xf]
    %v3482 = vld [vmem:[#allocation7 + $0x128] sm:$0xf]
    %v3483 = vld [vmem:[#allocation7 + $0x12c] sm:$0xf]
    %v3484 = vld [vmem:[#allocation7 + $0x130] sm:$0xf]
    %v3485 = vld [vmem:[#allocation7 + $0x134] sm:$0xf]
    %v3486 = vld [vmem:[#allocation7 + $0x138] sm:$0xf]
    %v3487 = vld [vmem:[#allocation7 + $0x13c] sm:$0xf]
    %v3488 = vld [vmem:[#allocation7 + $0x140] sm:$0xf]
    %v3489 = vld [vmem:[#allocation7 + $0x144] sm:$0xf]
    %v3490 = vld [vmem:[#allocation7 + $0x148] sm:$0xf]
    %v3491 = vld [vmem:[#allocation7 + $0x14c] sm:$0xf]
    %v3492 = vld [vmem:[#allocation7 + $0x150] sm:$0xf]
    %v3493 = vld [vmem:[#allocation7 + $0x154] sm:$0xf]
    %v3494 = vld [vmem:[#allocation7 + $0x158] sm:$0xf]
    %v3495 = vld [vmem:[#allocation7 + $0x15c] sm:$0xf]
    %v3496 = vld [vmem:[#allocation7 + $0x160] sm:$0xf]
    %v3497 = vld [vmem:[#allocation7 + $0x164] sm:$0xf]
    %v3498 = vld [vmem:[#allocation7 + $0x168] sm:$0xf]
    %v3499 = vld [vmem:[#allocation7 + $0x16c] sm:$0xf]
    %v3500 = vld [vmem:[#allocation7 + $0x170] sm:$0xf]
    %v3501 = vld [vmem:[#allocation7 + $0x174] sm:$0xf]
    %v3502 = vld [vmem:[#allocation7 + $0x178] sm:$0xf]
    %v3503 = vld [vmem:[#allocation7 + $0x17c] sm:$0xf]
    %v3504 = vld [vmem:[#allocation7 + $0x180] sm:$0xf]
    %v3505 = vld [vmem:[#allocation7 + $0x184] sm:$0xf]
    %v3506 = vld [vmem:[#allocation7 + $0x188] sm:$0xf]
    %v3507 = vld [vmem:[#allocation7 + $0x18c] sm:$0xf]
    %v3508 = vld [vmem:[#allocation7 + $0x190] sm:$0xf]
    %v3509 = vld [vmem:[#allocation7 + $0x194] sm:$0xf]
    %v3510 = vld [vmem:[#allocation7 + $0x198] sm:$0xf]
    %v3511 = vld [vmem:[#allocation7 + $0x19c] sm:$0xf]
    %v3512 = vld [vmem:[#allocation7 + $0x1a0] sm:$0xf]
    %v3513 = vld [vmem:[#allocation7 + $0x1a4] sm:$0xf]
    %v3514 = vld [vmem:[#allocation7 + $0x1a8] sm:$0xf]
    %v3515 = vld [vmem:[#allocation7 + $0x1ac] sm:$0xf]
    %v3516 = vld [vmem:[#allocation7 + $0x1b0] sm:$0xf]
    %v3517 = vld [vmem:[#allocation7 + $0x1b4] sm:$0xf]
    %v3518 = vld [vmem:[#allocation7 + $0x1b8] sm:$0xf]
    %v3519 = vld [vmem:[#allocation7 + $0x1bc] sm:$0xf]
    %v3520 = vld [vmem:[#allocation7 + $0x1c0] sm:$0xf]
    %v3521 = vld [vmem:[#allocation7 + $0x1c4] sm:$0xf]
    %v3522 = vld [vmem:[#allocation7 + $0x1c8] sm:$0xf]
    %v3523 = vld [vmem:[#allocation7 + $0x1cc] sm:$0xf]
    %v3524 = vld [vmem:[#allocation7 + $0x1d0] sm:$0xf]
    %v3525 = vld [vmem:[#allocation7 + $0x1d4] sm:$0xf]
    %v3526 = vld [vmem:[#allocation7 + $0x1d8] sm:$0xf]
    %v3527 = vld [vmem:[#allocation7 + $0x1dc] sm:$0xf]
    %v3528 = vld [vmem:[#allocation7 + $0x1e0] sm:$0xf]
    %v3529 = vld [vmem:[#allocation7 + $0x1e4] sm:$0xf]
    %v3530 = vld [vmem:[#allocation7 + $0x1e8] sm:$0xf]
    %v3531 = vld [vmem:[#allocation7 + $0x1ec] sm:$0xf]
    %v3532 = vld [vmem:[#allocation7 + $0x1f0] sm:$0xf]
    %v3533 = vld [vmem:[#allocation7 + $0x1f4] sm:$0xf]
    %v3534 = vld [vmem:[#allocation7 + $0x1f8] sm:$0xf]
    %v3535 = vld [vmem:[#allocation7 + $0x1fc] sm:$0xf]
    %v3664 = vunpack.c.l.b16 %v3408
    %v3665 = vunpack.c.l.b16 %v3409
    %v3666 = vunpack.c.l.b16 %v3410
    %v3667 = vunpack.c.l.b16 %v3411
    %v3668 = vunpack.c.l.b16 %v3412
    %v3669 = vunpack.c.l.b16 %v3413
    %v3670 = vunpack.c.l.b16 %v3414
    %v3671 = vunpack.c.l.b16 %v3415
    %v3672 = vunpack.c.l.b16 %v3416
    %v3673 = vunpack.c.l.b16 %v3417
    %v3674 = vunpack.c.l.b16 %v3418
    %v3675 = vunpack.c.l.b16 %v3419
    %v3676 = vunpack.c.l.b16 %v3420
    %v3677 = vunpack.c.l.b16 %v3421
    %v3678 = vunpack.c.l.b16 %v3422
    %v3679 = vunpack.c.l.b16 %v3423
    %v3680 = vunpack.c.l.b16 %v3424
    %v3681 = vunpack.c.l.b16 %v3425
    %v3682 = vunpack.c.l.b16 %v3426
    %v3683 = vunpack.c.l.b16 %v3427
    %v3684 = vunpack.c.l.b16 %v3428
    %v3685 = vunpack.c.l.b16 %v3429
    %v3686 = vunpack.c.l.b16 %v3430
    %v3687 = vunpack.c.l.b16 %v3431
    %v3688 = vunpack.c.l.b16 %v3432
    %v3689 = vunpack.c.l.b16 %v3433
    %v3690 = vunpack.c.l.b16 %v3434
    %v3691 = vunpack.c.l.b16 %v3435
    %v3692 = vunpack.c.l.b16 %v3436
    %v3693 = vunpack.c.l.b16 %v3437
    %v3694 = vunpack.c.l.b16 %v3438
    %v3695 = vunpack.c.l.b16 %v3439
    %v3696 = vunpack.c.l.b16 %v3440
    %v3697 = vunpack.c.l.b16 %v3441
    %v3698 = vunpack.c.l.b16 %v3442
    %v3699 = vunpack.c.l.b16 %v3443
    %v3700 = vunpack.c.l.b16 %v3444
    %v3701 = vunpack.c.l.b16 %v3445
    %v3702 = vunpack.c.l.b16 %v3446
    %v3703 = vunpack.c.l.b16 %v3447
    %v3704 = vunpack.c.l.b16 %v3448
    %v3705 = vunpack.c.l.b16 %v3449
    %v3706 = vunpack.c.l.b16 %v3450
    %v3707 = vunpack.c.l.b16 %v3451
    %v3708 = vunpack.c.l.b16 %v3452
    %v3709 = vunpack.c.l.b16 %v3453
    %v3710 = vunpack.c.l.b16 %v3454
    %v3711 = vunpack.c.l.b16 %v3455
    %v3712 = vunpack.c.l.b16 %v3456
    %v3713 = vunpack.c.l.b16 %v3457
    %v3714 = vunpack.c.l.b16 %v3458
    %v3715 = vunpack.c.l.b16 %v3459
    %v3716 = vunpack.c.l.b16 %v3460
    %v3717 = vunpack.c.l.b16 %v3461
    %v3718 = vunpack.c.l.b16 %v3462
    %v3719 = vunpack.c.l.b16 %v3463
    %v3720 = vunpack.c.l.b16 %v3464
    %v3721 = vunpack.c.l.b16 %v3465
    %v3722 = vunpack.c.l.b16 %v3466
    %v3723 = vunpack.c.l.b16 %v3467
    %v3724 = vunpack.c.l.b16 %v3468
    %v3725 = vunpack.c.l.b16 %v3469
    %v3726 = vunpack.c.l.b16 %v3470
    %v3727 = vunpack.c.l.b16 %v3471
    %v3728 = vunpack.c.l.b16 %v3472
    %v3729 = vunpack.c.l.b16 %v3473
    %v3730 = vunpack.c.l.b16 %v3474
    %v3731 = vunpack.c.l.b16 %v3475
    %v3732 = vunpack.c.l.b16 %v3476
    %v3733 = vunpack.c.l.b16 %v3477
    %v3734 = vunpack.c.l.b16 %v3478
    %v3735 = vunpack.c.l.b16 %v3479
    %v3736 = vunpack.c.l.b16 %v3480
    %v3737 = vunpack.c.l.b16 %v3481
    %v3738 = vunpack.c.l.b16 %v3482
    %v3739 = vunpack.c.l.b16 %v3483
    %v3740 = vunpack.c.l.b16 %v3484
    %v3741 = vunpack.c.l.b16 %v3485
    %v3742 = vunpack.c.l.b16 %v3486
    %v3743 = vunpack.c.l.b16 %v3487
    %v3744 = vunpack.c.l.b16 %v3488
    %v3745 = vunpack.c.l.b16 %v3489
    %v3746 = vunpack.c.l.b16 %v3490
    %v3747 = vunpack.c.l.b16 %v3491
    %v3748 = vunpack.c.l.b16 %v3492
    %v3749 = vunpack.c.l.b16 %v3493
    %v3750 = vunpack.c.l.b16 %v3494
    %v3751 = vunpack.c.l.b16 %v3495
    %v3752 = vunpack.c.l.b16 %v3496
    %v3753 = vunpack.c.l.b16 %v3497
    %v3754 = vunpack.c.l.b16 %v3498
    %v3755 = vunpack.c.l.b16 %v3499
    %v3756 = vunpack.c.l.b16 %v3500
    %v3757 = vunpack.c.l.b16 %v3501
    %v3758 = vunpack.c.l.b16 %v3502
    %v3759 = vunpack.c.l.b16 %v3503
    %v3760 = vunpack.c.l.b16 %v3504
    %v3761 = vunpack.c.l.b16 %v3505
    %v3762 = vunpack.c.l.b16 %v3506
    %v3763 = vunpack.c.l.b16 %v3507
    %v3764 = vunpack.c.l.b16 %v3508
    %v3765 = vunpack.c.l.b16 %v3509
    %v3766 = vunpack.c.l.b16 %v3510
    %v3767 = vunpack.c.l.b16 %v3511
    %v3768 = vunpack.c.l.b16 %v3512
    %v3769 = vunpack.c.l.b16 %v3513
    %v3770 = vunpack.c.l.b16 %v3514
    %v3771 = vunpack.c.l.b16 %v3515
    %v3772 = vunpack.c.l.b16 %v3516
    %v3773 = vunpack.c.l.b16 %v3517
    %v3774 = vunpack.c.l.b16 %v3518
    %v3775 = vunpack.c.l.b16 %v3519
    %v3776 = vunpack.c.l.b16 %v3520
    %v3777 = vunpack.c.l.b16 %v3521
    %v3778 = vunpack.c.l.b16 %v3522
    %v3779 = vunpack.c.l.b16 %v3523
    %v3780 = vunpack.c.l.b16 %v3524
    %v3781 = vunpack.c.l.b16 %v3525
    %v3782 = vunpack.c.l.b16 %v3526
    %v3783 = vunpack.c.l.b16 %v3527
    %v3784 = vunpack.c.l.b16 %v3528
    %v3785 = vunpack.c.l.b16 %v3529
    %v3786 = vunpack.c.l.b16 %v3530
    %v3787 = vunpack.c.l.b16 %v3531
    %v3788 = vunpack.c.l.b16 %v3532
    %v3789 = vunpack.c.l.b16 %v3533
    %v3790 = vunpack.c.l.b16 %v3534
    %v3791 = vunpack.c.l.b16 %v3535
    %v3792 = vpack.c.b16 %v3665, %v3664
    %v3793 = vpack.c.b16 %v3667, %v3666
    %v3794 = vpack.c.b16 %v3669, %v3668
    %v3795 = vpack.c.b16 %v3671, %v3670
    %v3796 = vpack.c.b16 %v3673, %v3672
    %v3797 = vpack.c.b16 %v3675, %v3674
    %v3798 = vpack.c.b16 %v3677, %v3676
    %v3799 = vpack.c.b16 %v3679, %v3678
    %v3800 = vpack.c.b16 %v3681, %v3680
    %v3801 = vpack.c.b16 %v3683, %v3682
    %v3802 = vpack.c.b16 %v3685, %v3684
    %v3803 = vpack.c.b16 %v3687, %v3686
    %v3804 = vpack.c.b16 %v3689, %v3688
    %v3805 = vpack.c.b16 %v3691, %v3690
    %v3806 = vpack.c.b16 %v3693, %v3692
    %v3807 = vpack.c.b16 %v3695, %v3694
    %v3808 = vpack.c.b16 %v3697, %v3696
    %v3809 = vpack.c.b16 %v3699, %v3698
    %v3810 = vpack.c.b16 %v3701, %v3700
    %v3811 = vpack.c.b16 %v3703, %v3702
    %v3812 = vpack.c.b16 %v3705, %v3704
    %v3813 = vpack.c.b16 %v3707, %v3706
    %v3814 = vpack.c.b16 %v3709, %v3708
    %v3815 = vpack.c.b16 %v3711, %v3710
    %v3816 = vpack.c.b16 %v3713, %v3712
    %v3817 = vpack.c.b16 %v3715, %v3714
    %v3818 = vpack.c.b16 %v3717, %v3716
    %v3819 = vpack.c.b16 %v3719, %v3718
    %v3820 = vpack.c.b16 %v3721, %v3720
    %v3821 = vpack.c.b16 %v3723, %v3722
    %v3822 = vpack.c.b16 %v3725, %v3724
    %v3823 = vpack.c.b16 %v3727, %v3726
    %v3824 = vpack.c.b16 %v3729, %v3728
    %v3825 = vpack.c.b16 %v3731, %v3730
    %v3826 = vpack.c.b16 %v3733, %v3732
    %v3827 = vpack.c.b16 %v3735, %v3734
    %v3828 = vpack.c.b16 %v3737, %v3736
    %v3829 = vpack.c.b16 %v3739, %v3738
    %v3830 = vpack.c.b16 %v3741, %v3740
    %v3831 = vpack.c.b16 %v3743, %v3742
    %v3832 = vpack.c.b16 %v3745, %v3744
    %v3833 = vpack.c.b16 %v3747, %v3746
    %v3834 = vpack.c.b16 %v3749, %v3748
    %v3835 = vpack.c.b16 %v3751, %v3750
    %v3836 = vpack.c.b16 %v3753, %v3752
    %v3837 = vpack.c.b16 %v3755, %v3754
    %v3838 = vpack.c.b16 %v3757, %v3756
    %v3839 = vpack.c.b16 %v3759, %v3758
    %v3840 = vpack.c.b16 %v3761, %v3760
    %v3841 = vpack.c.b16 %v3763, %v3762
    %v3842 = vpack.c.b16 %v3765, %v3764
    %v3843 = vpack.c.b16 %v3767, %v3766
    %v3844 = vpack.c.b16 %v3769, %v3768
    %v3845 = vpack.c.b16 %v3771, %v3770
    %v3846 = vpack.c.b16 %v3773, %v3772
    %v3847 = vpack.c.b16 %v3775, %v3774
    %v3848 = vpack.c.b16 %v3777, %v3776
    %v3849 = vpack.c.b16 %v3779, %v3778
    %v3850 = vpack.c.b16 %v3781, %v3780
    %v3851 = vpack.c.b16 %v3783, %v3782
    %v3852 = vpack.c.b16 %v3785, %v3784
    %v3853 = vpack.c.b16 %v3787, %v3786
    %v3854 = vpack.c.b16 %v3789, %v3788
    %v3855 = vpack.c.b16 %v3791, %v3790
    %3920 = vmatprep.subr.bf16.mxu0 0
    %3921 = vmatpush1.bf16.msra.mxu0 %v3799
    %3922 = vmatprep.subr.bf16.mxu0 0
    %3923 = vmatpush1.bf16.msra.mxu0 %v3798
    %3924 = vmatprep.subr.bf16.mxu0 0
    %3925 = vmatpush1.bf16.msra.mxu0 %v3797
    %3926 = vmatprep.subr.bf16.mxu0 0
    %3927 = vmatpush1.bf16.msra.mxu0 %v3796
    %3928 = vmatprep.subr.bf16.mxu0 0
    %3929 = vmatpush1.bf16.msra.mxu0 %v3795
    %3930 = vmatprep.subr.bf16.mxu0 0
    %3931 = vmatpush1.bf16.msra.mxu0 %v3794
    %3932 = vmatprep.subr.bf16.mxu0 0
    %3933 = vmatpush1.bf16.msra.mxu0 %v3793
    %3934 = vmatprep.subr.bf16.mxu0 0
    %3935 = vmatpush1.bf16.msra.mxu0 %v3792
    %3936 = vmatprep.subr.bf16.mxu0 0
    %3937 = vmatpush2.bf16.msra.mxu0 %v3807
    %3938 = vmatprep.subr.bf16.mxu0 0
    %3939 = vmatpush2.bf16.msra.mxu0 %v3806
    %3940 = vmatprep.subr.bf16.mxu0 0
    %3941 = vmatpush2.bf16.msra.mxu0 %v3805
    %3942 = vmatprep.subr.bf16.mxu0 0
    %3943 = vmatpush2.bf16.msra.mxu0 %v3804
    %3944 = vmatprep.subr.bf16.mxu0 0
    %3945 = vmatpush2.bf16.msra.mxu0 %v3803
    %3946 = vmatprep.subr.bf16.mxu0 0
    %3947 = vmatpush2.bf16.msra.mxu0 %v3802
    %3948 = vmatprep.subr.bf16.mxu0 0
    %3949 = vmatpush2.bf16.msra.mxu0 %v3801
    %3950 = vmatprep.subr.bf16.mxu0 0
    %3951 = vmatpush2.bf16.msra.mxu0 %v3800
    %3952 = vmatprep.mubr.bf16.mxu0 %v969
    %3953 = vmatmul.mubr.bf16.gmra.mxu0 %v968
    %v3954 = vpop.f32.mrf.mxu0
    %v3955 = vadd.f32 0.0, %v3954
    %v3956 = vpop.f32.mrf.mxu0
    %v3957 = vpop.f32.mrf.mxu0
    %v3958 = vadd.f32 0.0, %v3957
    %v3959 = vpop.f32.mrf.mxu0
    %3960 = vmatprep.mubr.bf16.mxu0 %v977
    %3961 = vmatmul.mubr.bf16.gmra.mxu0 %v976
    %v3962 = vpop.f32.mrf.mxu0
    %v3963 = vadd.f32 0.0, %v3962
    %v3964 = vpop.f32.mrf.mxu0
    %v3965 = vpop.f32.mrf.mxu0
    %v3966 = vadd.f32 0.0, %v3965
    %v3967 = vpop.f32.mrf.mxu0
    %3968 = vmatprep.mubr.bf16.mxu0 %v985
    %3969 = vmatmul.mubr.bf16.gmra.mxu0 %v984
    %v3970 = vpop.f32.mrf.mxu0
    %v3971 = vadd.f32 0.0, %v3970
    %v3972 = vpop.f32.mrf.mxu0
    %v3973 = vpop.f32.mrf.mxu0
    %v3974 = vadd.f32 0.0, %v3973
    %v3975 = vpop.f32.mrf.mxu0
    %3976 = vmatprep.mubr.bf16.mxu0 %v993
    %3977 = vmatmul.mubr.bf16.gmra.mxu0 %v992
    %v3978 = vpop.f32.mrf.mxu0
    %v3979 = vadd.f32 0.0, %v3978
    %v3980 = vpop.f32.mrf.mxu0
    %v3981 = vpop.f32.mrf.mxu0
    %v3982 = vadd.f32 0.0, %v3981
    %v3983 = vpop.f32.mrf.mxu0
    %3984 = vmatprep.mubr.bf16.mxu0 %v1001
    %3985 = vmatmul.mubr.bf16.gmra.mxu0 %v1000
    %v3986 = vpop.f32.mrf.mxu0
    %v3987 = vadd.f32 0.0, %v3986
    %v3988 = vpop.f32.mrf.mxu0
    %v3989 = vpop.f32.mrf.mxu0
    %v3990 = vadd.f32 0.0, %v3989
    %v3991 = vpop.f32.mrf.mxu0
    %3992 = vmatprep.mubr.bf16.mxu0 %v1009
    %3993 = vmatmul.mubr.bf16.gmra.mxu0 %v1008
    %v3994 = vpop.f32.mrf.mxu0
    %v3995 = vadd.f32 0.0, %v3994
    %v3996 = vpop.f32.mrf.mxu0
    %v3997 = vpop.f32.mrf.mxu0
    %v3998 = vadd.f32 0.0, %v3997
    %v3999 = vpop.f32.mrf.mxu0
    %4000 = vmatprep.mubr.bf16.mxu0 %v1017
    %4001 = vmatmul.mubr.bf16.gmra.mxu0 %v1016
    %v4002 = vpop.f32.mrf.mxu0
    %v4003 = vadd.f32 0.0, %v4002
    %v4004 = vpop.f32.mrf.mxu0
    %v4005 = vpop.f32.mrf.mxu0
    %v4006 = vadd.f32 0.0, %v4005
    %v4007 = vpop.f32.mrf.mxu0
    %4008 = vmatprep.mubr.bf16.mxu0 %v1025
    %4009 = vmatmul.mubr.bf16.gmra.mxu0 %v1024
    %v4010 = vpop.f32.mrf.mxu0
    %v4011 = vadd.f32 0.0, %v4010
    %v4012 = vpop.f32.mrf.mxu0
    %v4013 = vpop.f32.mrf.mxu0
    %v4014 = vadd.f32 0.0, %v4013
    %v4015 = vpop.f32.mrf.mxu0
    %4016 = vmatprep.mubr.bf16.mxu0 %v1033
    %4017 = vmatmul.mubr.bf16.gmra.mxu0 %v1032
    %v4018 = vpop.f32.mrf.mxu0
    %v4019 = vadd.f32 0.0, %v4018
    %v4020 = vpop.f32.mrf.mxu0
    %v4021 = vpop.f32.mrf.mxu0
    %v4022 = vadd.f32 0.0, %v4021
    %v4023 = vpop.f32.mrf.mxu0
    %4024 = vmatprep.mubr.bf16.mxu0 %v1041
    %4025 = vmatmul.mubr.bf16.gmra.mxu0 %v1040
    %v4026 = vpop.f32.mrf.mxu0
    %v4027 = vadd.f32 0.0, %v4026
    %v4028 = vpop.f32.mrf.mxu0
    %v4029 = vpop.f32.mrf.mxu0
    %v4030 = vadd.f32 0.0, %v4029
    %v4031 = vpop.f32.mrf.mxu0
    %4032 = vmatprep.mubr.bf16.mxu0 %v1049
    %4033 = vmatmul.mubr.bf16.gmra.mxu0 %v1048
    %v4034 = vpop.f32.mrf.mxu0
    %v4035 = vadd.f32 0.0, %v4034
    %v4036 = vpop.f32.mrf.mxu0
    %v4037 = vpop.f32.mrf.mxu0
    %v4038 = vadd.f32 0.0, %v4037
    %v4039 = vpop.f32.mrf.mxu0
    %4040 = vmatprep.mubr.bf16.mxu0 %v1057
    %4041 = vmatmul.mubr.bf16.gmra.mxu0 %v1056
    %v4042 = vpop.f32.mrf.mxu0
    %v4043 = vadd.f32 0.0, %v4042
    %v4044 = vpop.f32.mrf.mxu0
    %v4045 = vpop.f32.mrf.mxu0
    %v4046 = vadd.f32 0.0, %v4045
    %v4047 = vpop.f32.mrf.mxu0
    %4048 = vmatprep.mubr.bf16.mxu0 %v1065
    %4049 = vmatmul.mubr.bf16.gmra.mxu0 %v1064
    %v4050 = vpop.f32.mrf.mxu0
    %v4051 = vadd.f32 0.0, %v4050
    %v4052 = vpop.f32.mrf.mxu0
    %v4053 = vpop.f32.mrf.mxu0
    %v4054 = vadd.f32 0.0, %v4053
    %v4055 = vpop.f32.mrf.mxu0
    %4056 = vmatprep.mubr.bf16.mxu0 %v1073
    %4057 = vmatmul.mubr.bf16.gmra.mxu0 %v1072
    %v4058 = vpop.f32.mrf.mxu0
    %v4059 = vadd.f32 0.0, %v4058
    %v4060 = vpop.f32.mrf.mxu0
    %v4061 = vpop.f32.mrf.mxu0
    %v4062 = vadd.f32 0.0, %v4061
    %v4063 = vpop.f32.mrf.mxu0
    %4064 = vmatprep.mubr.bf16.mxu0 %v1081
    %4065 = vmatmul.mubr.bf16.gmra.mxu0 %v1080
    %v4066 = vpop.f32.mrf.mxu0
    %v4067 = vadd.f32 0.0, %v4066
    %v4068 = vpop.f32.mrf.mxu0
    %v4069 = vpop.f32.mrf.mxu0
    %v4070 = vadd.f32 0.0, %v4069
    %v4071 = vpop.f32.mrf.mxu0
    %4072 = vmatprep.mubr.bf16.mxu0 %v1089
    %4073 = vmatmul.mubr.bf16.gmra.mxu0 %v1088
    %v4074 = vpop.f32.mrf.mxu0
    %v4075 = vadd.f32 0.0, %v4074
    %v4076 = vpop.f32.mrf.mxu0
    %v4077 = vpop.f32.mrf.mxu0
    %v4078 = vadd.f32 0.0, %v4077
    %v4079 = vpop.f32.mrf.mxu0
    %4080 = vdwg.mxu0
    %4081 = vmatprep.subr.bf16.mxu0 0
    %4082 = vmatpush1.bf16.msra.mxu0 %v3815
    %4083 = vmatprep.subr.bf16.mxu0 0
    %4084 = vmatpush1.bf16.msra.mxu0 %v3814
    %4085 = vmatprep.subr.bf16.mxu0 0
    %4086 = vmatpush1.bf16.msra.mxu0 %v3813
    %4087 = vmatprep.subr.bf16.mxu0 0
    %4088 = vmatpush1.bf16.msra.mxu0 %v3812
    %4089 = vmatprep.subr.bf16.mxu0 0
    %4090 = vmatpush1.bf16.msra.mxu0 %v3811
    %4091 = vmatprep.subr.bf16.mxu0 0
    %4092 = vmatpush1.bf16.msra.mxu0 %v3810
    %4093 = vmatprep.subr.bf16.mxu0 0
    %4094 = vmatpush1.bf16.msra.mxu0 %v3809
    %4095 = vmatprep.subr.bf16.mxu0 0
    %4096 = vmatpush1.bf16.msra.mxu0 %v3808
    %4097 = vmatprep.subr.bf16.mxu0 0
    %4098 = vmatpush2.bf16.msra.mxu0 %v3823
    %4099 = vmatprep.subr.bf16.mxu0 0
    %4100 = vmatpush2.bf16.msra.mxu0 %v3822
    %4101 = vmatprep.subr.bf16.mxu0 0
    %4102 = vmatpush2.bf16.msra.mxu0 %v3821
    %4103 = vmatprep.subr.bf16.mxu0 0
    %4104 = vmatpush2.bf16.msra.mxu0 %v3820
    %4105 = vmatprep.subr.bf16.mxu0 0
    %4106 = vmatpush2.bf16.msra.mxu0 %v3819
    %4107 = vmatprep.subr.bf16.mxu0 0
    %4108 = vmatpush2.bf16.msra.mxu0 %v3818
    %4109 = vmatprep.subr.bf16.mxu0 0
    %4110 = vmatpush2.bf16.msra.mxu0 %v3817
    %4111 = vmatprep.subr.bf16.mxu0 0
    %4112 = vmatpush2.bf16.msra.mxu0 %v3816
    %4113 = vmatprep.mubr.bf16.mxu0 %v971
    %4114 = vmatmul.mubr.bf16.gmra.mxu0 %v970
    %v4115 = vpop.f32.mrf.mxu0
    %v4116 = vadd.f32 %v3955, %v4115
    %v4117 = vpop.f32.mrf.mxu0
    %v4118 = vpop.f32.mrf.mxu0
    %v4119 = vadd.f32 %v3958, %v4118
    %v4120 = vpop.f32.mrf.mxu0
    %4121 = vmatprep.mubr.bf16.mxu0 %v979
    %4122 = vmatmul.mubr.bf16.gmra.mxu0 %v978
    %v4123 = vpop.f32.mrf.mxu0
    %v4124 = vadd.f32 %v3963, %v4123
    %v4125 = vpop.f32.mrf.mxu0
    %v4126 = vpop.f32.mrf.mxu0
    %v4127 = vadd.f32 %v3966, %v4126
    %v4128 = vpop.f32.mrf.mxu0
    %4129 = vmatprep.mubr.bf16.mxu0 %v987
    %4130 = vmatmul.mubr.bf16.gmra.mxu0 %v986
    %v4131 = vpop.f32.mrf.mxu0
    %v4132 = vadd.f32 %v3971, %v4131
    %v4133 = vpop.f32.mrf.mxu0
    %v4134 = vpop.f32.mrf.mxu0
    %v4135 = vadd.f32 %v3974, %v4134
    %v4136 = vpop.f32.mrf.mxu0
    %4137 = vmatprep.mubr.bf16.mxu0 %v995
    %4138 = vmatmul.mubr.bf16.gmra.mxu0 %v994
    %v4139 = vpop.f32.mrf.mxu0
    %v4140 = vadd.f32 %v3979, %v4139
    %v4141 = vpop.f32.mrf.mxu0
    %v4142 = vpop.f32.mrf.mxu0
    %v4143 = vadd.f32 %v3982, %v4142
    %v4144 = vpop.f32.mrf.mxu0
    %4145 = vmatprep.mubr.bf16.mxu0 %v1003
    %4146 = vmatmul.mubr.bf16.gmra.mxu0 %v1002
    %v4147 = vpop.f32.mrf.mxu0
    %v4148 = vadd.f32 %v3987, %v4147
    %v4149 = vpop.f32.mrf.mxu0
    %v4150 = vpop.f32.mrf.mxu0
    %v4151 = vadd.f32 %v3990, %v4150
    %v4152 = vpop.f32.mrf.mxu0
    %4153 = vmatprep.mubr.bf16.mxu0 %v1011
    %4154 = vmatmul.mubr.bf16.gmra.mxu0 %v1010
    %v4155 = vpop.f32.mrf.mxu0
    %v4156 = vadd.f32 %v3995, %v4155
    %v4157 = vpop.f32.mrf.mxu0
    %v4158 = vpop.f32.mrf.mxu0
    %v4159 = vadd.f32 %v3998, %v4158
    %v4160 = vpop.f32.mrf.mxu0
    %4161 = vmatprep.mubr.bf16.mxu0 %v1019
    %4162 = vmatmul.mubr.bf16.gmra.mxu0 %v1018
    %v4163 = vpop.f32.mrf.mxu0
    %v4164 = vadd.f32 %v4003, %v4163
    %v4165 = vpop.f32.mrf.mxu0
    %v4166 = vpop.f32.mrf.mxu0
    %v4167 = vadd.f32 %v4006, %v4166
    %v4168 = vpop.f32.mrf.mxu0
    %4169 = vmatprep.mubr.bf16.mxu0 %v1027
    %4170 = vmatmul.mubr.bf16.gmra.mxu0 %v1026
    %v4171 = vpop.f32.mrf.mxu0
    %v4172 = vadd.f32 %v4011, %v4171
    %v4173 = vpop.f32.mrf.mxu0
    %v4174 = vpop.f32.mrf.mxu0
    %v4175 = vadd.f32 %v4014, %v4174
    %v4176 = vpop.f32.mrf.mxu0
    %4177 = vmatprep.mubr.bf16.mxu0 %v1035
    %4178 = vmatmul.mubr.bf16.gmra.mxu0 %v1034
    %v4179 = vpop.f32.mrf.mxu0
    %v4180 = vadd.f32 %v4019, %v4179
    %v4181 = vpop.f32.mrf.mxu0
    %v4182 = vpop.f32.mrf.mxu0
    %v4183 = vadd.f32 %v4022, %v4182
    %v4184 = vpop.f32.mrf.mxu0
    %4185 = vmatprep.mubr.bf16.mxu0 %v1043
    %4186 = vmatmul.mubr.bf16.gmra.mxu0 %v1042
    %v4187 = vpop.f32.mrf.mxu0
    %v4188 = vadd.f32 %v4027, %v4187
    %v4189 = vpop.f32.mrf.mxu0
    %v4190 = vpop.f32.mrf.mxu0
    %v4191 = vadd.f32 %v4030, %v4190
    %v4192 = vpop.f32.mrf.mxu0
    %4193 = vmatprep.mubr.bf16.mxu0 %v1051
    %4194 = vmatmul.mubr.bf16.gmra.mxu0 %v1050
    %v4195 = vpop.f32.mrf.mxu0
    %v4196 = vadd.f32 %v4035, %v4195
    %v4197 = vpop.f32.mrf.mxu0
    %v4198 = vpop.f32.mrf.mxu0
    %v4199 = vadd.f32 %v4038, %v4198
    %v4200 = vpop.f32.mrf.mxu0
    %4201 = vmatprep.mubr.bf16.mxu0 %v1059
    %4202 = vmatmul.mubr.bf16.gmra.mxu0 %v1058
    %v4203 = vpop.f32.mrf.mxu0
    %v4204 = vadd.f32 %v4043, %v4203
    %v4205 = vpop.f32.mrf.mxu0
    %v4206 = vpop.f32.mrf.mxu0
    %v4207 = vadd.f32 %v4046, %v4206
    %v4208 = vpop.f32.mrf.mxu0
    %4209 = vmatprep.mubr.bf16.mxu0 %v1067
    %4210 = vmatmul.mubr.bf16.gmra.mxu0 %v1066
    %v4211 = vpop.f32.mrf.mxu0
    %v4212 = vadd.f32 %v4051, %v4211
    %v4213 = vpop.f32.mrf.mxu0
    %v4214 = vpop.f32.mrf.mxu0
    %v4215 = vadd.f32 %v4054, %v4214
    %v4216 = vpop.f32.mrf.mxu0
    %4217 = vmatprep.mubr.bf16.mxu0 %v1075
    %4218 = vmatmul.mubr.bf16.gmra.mxu0 %v1074
    %v4219 = vpop.f32.mrf.mxu0
    %v4220 = vadd.f32 %v4059, %v4219
    %v4221 = vpop.f32.mrf.mxu0
    %v4222 = vpop.f32.mrf.mxu0
    %v4223 = vadd.f32 %v4062, %v4222
    %v4224 = vpop.f32.mrf.mxu0
    %4225 = vmatprep.mubr.bf16.mxu0 %v1083
    %4226 = vmatmul.mubr.bf16.gmra.mxu0 %v1082
    %v4227 = vpop.f32.mrf.mxu0
    %v4228 = vadd.f32 %v4067, %v4227
    %v4229 = vpop.f32.mrf.mxu0
    %v4230 = vpop.f32.mrf.mxu0
    %v4231 = vadd.f32 %v4070, %v4230
    %v4232 = vpop.f32.mrf.mxu0
    %4233 = vmatprep.mubr.bf16.mxu0 %v1091
    %4234 = vmatmul.mubr.bf16.gmra.mxu0 %v1090
    %v4235 = vpop.f32.mrf.mxu0
    %v4236 = vadd.f32 %v4075, %v4235
    %v4237 = vpop.f32.mrf.mxu0
    %v4238 = vpop.f32.mrf.mxu0
    %v4239 = vadd.f32 %v4078, %v4238
    %v4240 = vpop.f32.mrf.mxu0
    %4241 = vdwg.mxu0
    %4242 = vmatprep.subr.bf16.mxu0 0
    %4243 = vmatpush1.bf16.msra.mxu0 %v3831
    %4244 = vmatprep.subr.bf16.mxu0 0
    %4245 = vmatpush1.bf16.msra.mxu0 %v3830
    %4246 = vmatprep.subr.bf16.mxu0 0
    %4247 = vmatpush1.bf16.msra.mxu0 %v3829
    %4248 = vmatprep.subr.bf16.mxu0 0
    %4249 = vmatpush1.bf16.msra.mxu0 %v3828
    %4250 = vmatprep.subr.bf16.mxu0 0
    %4251 = vmatpush1.bf16.msra.mxu0 %v3827
    %4252 = vmatprep.subr.bf16.mxu0 0
    %4253 = vmatpush1.bf16.msra.mxu0 %v3826
    %4254 = vmatprep.subr.bf16.mxu0 0
    %4255 = vmatpush1.bf16.msra.mxu0 %v3825
    %4256 = vmatprep.subr.bf16.mxu0 0
    %4257 = vmatpush1.bf16.msra.mxu0 %v3824
    %4258 = vmatprep.subr.bf16.mxu0 0
    %4259 = vmatpush2.bf16.msra.mxu0 %v3839
    %4260 = vmatprep.subr.bf16.mxu0 0
    %4261 = vmatpush2.bf16.msra.mxu0 %v3838
    %4262 = vmatprep.subr.bf16.mxu0 0
    %4263 = vmatpush2.bf16.msra.mxu0 %v3837
    %4264 = vmatprep.subr.bf16.mxu0 0
    %4265 = vmatpush2.bf16.msra.mxu0 %v3836
    %4266 = vmatprep.subr.bf16.mxu0 0
    %4267 = vmatpush2.bf16.msra.mxu0 %v3835
    %4268 = vmatprep.subr.bf16.mxu0 0
    %4269 = vmatpush2.bf16.msra.mxu0 %v3834
    %4270 = vmatprep.subr.bf16.mxu0 0
    %4271 = vmatpush2.bf16.msra.mxu0 %v3833
    %4272 = vmatprep.subr.bf16.mxu0 0
    %4273 = vmatpush2.bf16.msra.mxu0 %v3832
    %4274 = vmatprep.mubr.bf16.mxu0 %v973
    %4275 = vmatmul.mubr.bf16.gmra.mxu0 %v972
    %v4276 = vpop.f32.mrf.mxu0
    %v4277 = vadd.f32 %v4116, %v4276
    %v4278 = vpop.f32.mrf.mxu0
    %v4279 = vpop.f32.mrf.mxu0
    %v4280 = vadd.f32 %v4119, %v4279
    %v4281 = vpop.f32.mrf.mxu0
    %4282 = vmatprep.mubr.bf16.mxu0 %v981
    %4283 = vmatmul.mubr.bf16.gmra.mxu0 %v980
    %v4284 = vpop.f32.mrf.mxu0
    %v4285 = vadd.f32 %v4124, %v4284
    %v4286 = vpop.f32.mrf.mxu0
    %v4287 = vpop.f32.mrf.mxu0
    %v4288 = vadd.f32 %v4127, %v4287
    %v4289 = vpop.f32.mrf.mxu0
    %4290 = vmatprep.mubr.bf16.mxu0 %v989
    %4291 = vmatmul.mubr.bf16.gmra.mxu0 %v988
    %v4292 = vpop.f32.mrf.mxu0
    %v4293 = vadd.f32 %v4132, %v4292
    %v4294 = vpop.f32.mrf.mxu0
    %v4295 = vpop.f32.mrf.mxu0
    %v4296 = vadd.f32 %v4135, %v4295
    %v4297 = vpop.f32.mrf.mxu0
    %4298 = vmatprep.mubr.bf16.mxu0 %v997
    %4299 = vmatmul.mubr.bf16.gmra.mxu0 %v996
    %v4300 = vpop.f32.mrf.mxu0
    %v4301 = vadd.f32 %v4140, %v4300
    %v4302 = vpop.f32.mrf.mxu0
    %v4303 = vpop.f32.mrf.mxu0
    %v4304 = vadd.f32 %v4143, %v4303
    %v4305 = vpop.f32.mrf.mxu0
    %4306 = vmatprep.mubr.bf16.mxu0 %v1005
    %4307 = vmatmul.mubr.bf16.gmra.mxu0 %v1004
    %v4308 = vpop.f32.mrf.mxu0
    %v4309 = vadd.f32 %v4148, %v4308
    %v4310 = vpop.f32.mrf.mxu0
    %v4311 = vpop.f32.mrf.mxu0
    %v4312 = vadd.f32 %v4151, %v4311
    %v4313 = vpop.f32.mrf.mxu0
    %4314 = vmatprep.mubr.bf16.mxu0 %v1013
    %4315 = vmatmul.mubr.bf16.gmra.mxu0 %v1012
    %v4316 = vpop.f32.mrf.mxu0
    %v4317 = vadd.f32 %v4156, %v4316
    %v4318 = vpop.f32.mrf.mxu0
    %v4319 = vpop.f32.mrf.mxu0
    %v4320 = vadd.f32 %v4159, %v4319
    %v4321 = vpop.f32.mrf.mxu0
    %4322 = vmatprep.mubr.bf16.mxu0 %v1021
    %4323 = vmatmul.mubr.bf16.gmra.mxu0 %v1020
    %v4324 = vpop.f32.mrf.mxu0
    %v4325 = vadd.f32 %v4164, %v4324
    %v4326 = vpop.f32.mrf.mxu0
    %v4327 = vpop.f32.mrf.mxu0
    %v4328 = vadd.f32 %v4167, %v4327
    %v4329 = vpop.f32.mrf.mxu0
    %4330 = vmatprep.mubr.bf16.mxu0 %v1029
    %4331 = vmatmul.mubr.bf16.gmra.mxu0 %v1028
    %v4332 = vpop.f32.mrf.mxu0
    %v4333 = vadd.f32 %v4172, %v4332
    %v4334 = vpop.f32.mrf.mxu0
    %v4335 = vpop.f32.mrf.mxu0
    %v4336 = vadd.f32 %v4175, %v4335
    %v4337 = vpop.f32.mrf.mxu0
    %4338 = vmatprep.mubr.bf16.mxu0 %v1037
    %4339 = vmatmul.mubr.bf16.gmra.mxu0 %v1036
    %v4340 = vpop.f32.mrf.mxu0
    %v4341 = vadd.f32 %v4180, %v4340
    %v4342 = vpop.f32.mrf.mxu0
    %v4343 = vpop.f32.mrf.mxu0
    %v4344 = vadd.f32 %v4183, %v4343
    %v4345 = vpop.f32.mrf.mxu0
    %4346 = vmatprep.mubr.bf16.mxu0 %v1045
    %4347 = vmatmul.mubr.bf16.gmra.mxu0 %v1044
    %v4348 = vpop.f32.mrf.mxu0
    %v4349 = vadd.f32 %v4188, %v4348
    %v4350 = vpop.f32.mrf.mxu0
    %v4351 = vpop.f32.mrf.mxu0
    %v4352 = vadd.f32 %v4191, %v4351
    %v4353 = vpop.f32.mrf.mxu0
    %4354 = vmatprep.mubr.bf16.mxu0 %v1053
    %4355 = vmatmul.mubr.bf16.gmra.mxu0 %v1052
    %v4356 = vpop.f32.mrf.mxu0
    %v4357 = vadd.f32 %v4196, %v4356
    %v4358 = vpop.f32.mrf.mxu0
    %v4359 = vpop.f32.mrf.mxu0
    %v4360 = vadd.f32 %v4199, %v4359
    %v4361 = vpop.f32.mrf.mxu0
    %4362 = vmatprep.mubr.bf16.mxu0 %v1061
    %4363 = vmatmul.mubr.bf16.gmra.mxu0 %v1060
    %v4364 = vpop.f32.mrf.mxu0
    %v4365 = vadd.f32 %v4204, %v4364
    %v4366 = vpop.f32.mrf.mxu0
    %v4367 = vpop.f32.mrf.mxu0
    %v4368 = vadd.f32 %v4207, %v4367
    %v4369 = vpop.f32.mrf.mxu0
    %4370 = vmatprep.mubr.bf16.mxu0 %v1069
    %4371 = vmatmul.mubr.bf16.gmra.mxu0 %v1068
    %v4372 = vpop.f32.mrf.mxu0
    %v4373 = vadd.f32 %v4212, %v4372
    %v4374 = vpop.f32.mrf.mxu0
    %v4375 = vpop.f32.mrf.mxu0
    %v4376 = vadd.f32 %v4215, %v4375
    %v4377 = vpop.f32.mrf.mxu0
    %4378 = vmatprep.mubr.bf16.mxu0 %v1077
    %4379 = vmatmul.mubr.bf16.gmra.mxu0 %v1076
    %v4380 = vpop.f32.mrf.mxu0
    %v4381 = vadd.f32 %v4220, %v4380
    %v4382 = vpop.f32.mrf.mxu0
    %v4383 = vpop.f32.mrf.mxu0
    %v4384 = vadd.f32 %v4223, %v4383
    %v4385 = vpop.f32.mrf.mxu0
    %4386 = vmatprep.mubr.bf16.mxu0 %v1085
    %4387 = vmatmul.mubr.bf16.gmra.mxu0 %v1084
    %v4388 = vpop.f32.mrf.mxu0
    %v4389 = vadd.f32 %v4228, %v4388
    %v4390 = vpop.f32.mrf.mxu0
    %v4391 = vpop.f32.mrf.mxu0
    %v4392 = vadd.f32 %v4231, %v4391
    %v4393 = vpop.f32.mrf.mxu0
    %4394 = vmatprep.mubr.bf16.mxu0 %v1093
    %4395 = vmatmul.mubr.bf16.gmra.mxu0 %v1092
    %v4396 = vpop.f32.mrf.mxu0
    %v4397 = vadd.f32 %v4236, %v4396
    %v4398 = vpop.f32.mrf.mxu0
    %v4399 = vpop.f32.mrf.mxu0
    %v4400 = vadd.f32 %v4239, %v4399
    %v4401 = vpop.f32.mrf.mxu0
    %4402 = vdwg.mxu0
    %4403 = vmatprep.subr.bf16.mxu0 0
    %4404 = vmatpush1.bf16.msra.mxu0 %v3847
    %4405 = vmatprep.subr.bf16.mxu0 0
    %4406 = vmatpush1.bf16.msra.mxu0 %v3846
    %4407 = vmatprep.subr.bf16.mxu0 0
    %4408 = vmatpush1.bf16.msra.mxu0 %v3845
    %4409 = vmatprep.subr.bf16.mxu0 0
    %4410 = vmatpush1.bf16.msra.mxu0 %v3844
    %4411 = vmatprep.subr.bf16.mxu0 0
    %4412 = vmatpush1.bf16.msra.mxu0 %v3843
    %4413 = vmatprep.subr.bf16.mxu0 0
    %4414 = vmatpush1.bf16.msra.mxu0 %v3842
    %4415 = vmatprep.subr.bf16.mxu0 0
    %4416 = vmatpush1.bf16.msra.mxu0 %v3841
    %4417 = vmatprep.subr.bf16.mxu0 0
    %4418 = vmatpush1.bf16.msra.mxu0 %v3840
    %4419 = vmatprep.subr.bf16.mxu0 0
    %4420 = vmatpush2.bf16.msra.mxu0 %v3855
    %4421 = vmatprep.subr.bf16.mxu0 0
    %4422 = vmatpush2.bf16.msra.mxu0 %v3854
    %4423 = vmatprep.subr.bf16.mxu0 0
    %4424 = vmatpush2.bf16.msra.mxu0 %v3853
    %4425 = vmatprep.subr.bf16.mxu0 0
    %4426 = vmatpush2.bf16.msra.mxu0 %v3852
    %4427 = vmatprep.subr.bf16.mxu0 0
    %4428 = vmatpush2.bf16.msra.mxu0 %v3851
    %4429 = vmatprep.subr.bf16.mxu0 0
    %4430 = vmatpush2.bf16.msra.mxu0 %v3850
    %4431 = vmatprep.subr.bf16.mxu0 0
    %4432 = vmatpush2.bf16.msra.mxu0 %v3849
    %4433 = vmatprep.subr.bf16.mxu0 0
    %4434 = vmatpush2.bf16.msra.mxu0 %v3848
    %4435 = vmatprep.mubr.bf16.mxu0 %v975
    %4436 = vmatmul.mubr.bf16.gmra.mxu0 %v974
    %v4437 = vpop.f32.mrf.mxu0
    %v4438 = vadd.f32 %v4277, %v4437
    %v4439 = vpop.f32.mrf.mxu0
    %v4440 = vpop.f32.mrf.mxu0
    %v4441 = vadd.f32 %v4280, %v4440
    %v4442 = vpop.f32.mrf.mxu0
    %4443 = vmatprep.mubr.bf16.mxu0 %v983
    %4444 = vmatmul.mubr.bf16.gmra.mxu0 %v982
    %v4445 = vpop.f32.mrf.mxu0
    %v4446 = vadd.f32 %v4285, %v4445
    %v4447 = vpop.f32.mrf.mxu0
    %v4448 = vpop.f32.mrf.mxu0
    %v4449 = vadd.f32 %v4288, %v4448
    %v4450 = vpop.f32.mrf.mxu0
    %4451 = vmatprep.mubr.bf16.mxu0 %v991
    %4452 = vmatmul.mubr.bf16.gmra.mxu0 %v990
    %v4453 = vpop.f32.mrf.mxu0
    %v4454 = vadd.f32 %v4293, %v4453
    %v4455 = vpop.f32.mrf.mxu0
    %v4456 = vpop.f32.mrf.mxu0
    %v4457 = vadd.f32 %v4296, %v4456
    %v4458 = vpop.f32.mrf.mxu0
    %4459 = vmatprep.mubr.bf16.mxu0 %v999
    %4460 = vmatmul.mubr.bf16.gmra.mxu0 %v998
    %v4461 = vpop.f32.mrf.mxu0
    %v4462 = vadd.f32 %v4301, %v4461
    %v4463 = vpop.f32.mrf.mxu0
    %v4464 = vpop.f32.mrf.mxu0
    %v4465 = vadd.f32 %v4304, %v4464
    %v4466 = vpop.f32.mrf.mxu0
    %4467 = vmatprep.mubr.bf16.mxu0 %v1007
    %4468 = vmatmul.mubr.bf16.gmra.mxu0 %v1006
    %v4469 = vpop.f32.mrf.mxu0
    %v4470 = vadd.f32 %v4309, %v4469
    %v4471 = vpop.f32.mrf.mxu0
    %v4472 = vpop.f32.mrf.mxu0
    %v4473 = vadd.f32 %v4312, %v4472
    %v4474 = vpop.f32.mrf.mxu0
    %4475 = vmatprep.mubr.bf16.mxu0 %v1015
    %4476 = vmatmul.mubr.bf16.gmra.mxu0 %v1014
    %v4477 = vpop.f32.mrf.mxu0
    %v4478 = vadd.f32 %v4317, %v4477
    %v4479 = vpop.f32.mrf.mxu0
    %v4480 = vpop.f32.mrf.mxu0
    %v4481 = vadd.f32 %v4320, %v4480
    %v4482 = vpop.f32.mrf.mxu0
    %4483 = vmatprep.mubr.bf16.mxu0 %v1023
    %4484 = vmatmul.mubr.bf16.gmra.mxu0 %v1022
    %v4485 = vpop.f32.mrf.mxu0
    %v4486 = vadd.f32 %v4325, %v4485
    %v4487 = vpop.f32.mrf.mxu0
    %v4488 = vpop.f32.mrf.mxu0
    %v4489 = vadd.f32 %v4328, %v4488
    %v4490 = vpop.f32.mrf.mxu0
    %4491 = vmatprep.mubr.bf16.mxu0 %v1031
    %4492 = vmatmul.mubr.bf16.gmra.mxu0 %v1030
    %v4493 = vpop.f32.mrf.mxu0
    %v4494 = vadd.f32 %v4333, %v4493
    %v4495 = vpop.f32.mrf.mxu0
    %v4496 = vpop.f32.mrf.mxu0
    %v4497 = vadd.f32 %v4336, %v4496
    %v4498 = vpop.f32.mrf.mxu0
    %4499 = vmatprep.mubr.bf16.mxu0 %v1039
    %4500 = vmatmul.mubr.bf16.gmra.mxu0 %v1038
    %v4501 = vpop.f32.mrf.mxu0
    %v4502 = vadd.f32 %v4341, %v4501
    %v4503 = vpop.f32.mrf.mxu0
    %v4504 = vpop.f32.mrf.mxu0
    %v4505 = vadd.f32 %v4344, %v4504
    %v4506 = vpop.f32.mrf.mxu0
    %4507 = vmatprep.mubr.bf16.mxu0 %v1047
    %4508 = vmatmul.mubr.bf16.gmra.mxu0 %v1046
    %v4509 = vpop.f32.mrf.mxu0
    %v4510 = vadd.f32 %v4349, %v4509
    %v4511 = vpop.f32.mrf.mxu0
    %v4512 = vpop.f32.mrf.mxu0
    %v4513 = vadd.f32 %v4352, %v4512
    %v4514 = vpop.f32.mrf.mxu0
    %4515 = vmatprep.mubr.bf16.mxu0 %v1055
    %4516 = vmatmul.mubr.bf16.gmra.mxu0 %v1054
    %v4517 = vpop.f32.mrf.mxu0
    %v4518 = vadd.f32 %v4357, %v4517
    %v4519 = vpop.f32.mrf.mxu0
    %v4520 = vpop.f32.mrf.mxu0
    %v4521 = vadd.f32 %v4360, %v4520
    %v4522 = vpop.f32.mrf.mxu0
    %4523 = vmatprep.mubr.bf16.mxu0 %v1063
    %4524 = vmatmul.mubr.bf16.gmra.mxu0 %v1062
    %v4525 = vpop.f32.mrf.mxu0
    %v4526 = vadd.f32 %v4365, %v4525
    %v4527 = vpop.f32.mrf.mxu0
    %v4528 = vpop.f32.mrf.mxu0
    %v4529 = vadd.f32 %v4368, %v4528
    %v4530 = vpop.f32.mrf.mxu0
    %4531 = vmatprep.mubr.bf16.mxu0 %v1071
    %4532 = vmatmul.mubr.bf16.gmra.mxu0 %v1070
    %v4533 = vpop.f32.mrf.mxu0
    %v4534 = vadd.f32 %v4373, %v4533
    %v4535 = vpop.f32.mrf.mxu0
    %v4536 = vpop.f32.mrf.mxu0
    %v4537 = vadd.f32 %v4376, %v4536
    %v4538 = vpop.f32.mrf.mxu0
    %4539 = vmatprep.mubr.bf16.mxu0 %v1079
    %4540 = vmatmul.mubr.bf16.gmra.mxu0 %v1078
    %v4541 = vpop.f32.mrf.mxu0
    %v4542 = vadd.f32 %v4381, %v4541
    %v4543 = vpop.f32.mrf.mxu0
    %v4544 = vpop.f32.mrf.mxu0
    %v4545 = vadd.f32 %v4384, %v4544
    %v4546 = vpop.f32.mrf.mxu0
    %4547 = vmatprep.mubr.bf16.mxu0 %v1087
    %4548 = vmatmul.mubr.bf16.gmra.mxu0 %v1086
    %v4549 = vpop.f32.mrf.mxu0
    %v4550 = vadd.f32 %v4389, %v4549
    %v4551 = vpop.f32.mrf.mxu0
    %v4552 = vpop.f32.mrf.mxu0
    %v4553 = vadd.f32 %v4392, %v4552
    %v4554 = vpop.f32.mrf.mxu0
    %4555 = vmatprep.mubr.bf16.mxu0 %v1095
    %4556 = vmatmul.mubr.bf16.gmra.mxu0 %v1094
    %v4557 = vpop.f32.mrf.mxu0
    %v4558 = vadd.f32 %v4397, %v4557
    %v4559 = vpop.f32.mrf.mxu0
    %v4560 = vpop.f32.mrf.mxu0
    %v4561 = vadd.f32 %v4400, %v4560
    %v4562 = vpop.f32.mrf.mxu0
    %4563 = vdwg.mxu0
    %v4564 = vadd.f32 %v3282, %v4438
    %v4565 = vadd.f32 %v3285, %v4441
    %v4566 = vadd.f32 %v3290, %v4446
    %v4567 = vadd.f32 %v3293, %v4449
    %v4568 = vadd.f32 %v3298, %v4454
    %v4569 = vadd.f32 %v3301, %v4457
    %v4570 = vadd.f32 %v3306, %v4462
    %v4571 = vadd.f32 %v3309, %v4465
    %v4572 = vadd.f32 %v3314, %v4470
    %v4573 = vadd.f32 %v3317, %v4473
    %v4574 = vadd.f32 %v3322, %v4478
    %v4575 = vadd.f32 %v3325, %v4481
    %v4576 = vadd.f32 %v3330, %v4486
    %v4577 = vadd.f32 %v3333, %v4489
    %v4578 = vadd.f32 %v3338, %v4494
    %v4579 = vadd.f32 %v3341, %v4497
    %v4580 = vadd.f32 %v3346, %v4502
    %v4581 = vadd.f32 %v3349, %v4505
    %v4582 = vadd.f32 %v3354, %v4510
    %v4583 = vadd.f32 %v3357, %v4513
    %v4584 = vadd.f32 %v3362, %v4518
    %v4585 = vadd.f32 %v3365, %v4521
    %v4586 = vadd.f32 %v3370, %v4526
    %v4587 = vadd.f32 %v3373, %v4529
    %v4588 = vadd.f32 %v3378, %v4534
    %v4589 = vadd.f32 %v3381, %v4537
    %v4590 = vadd.f32 %v3386, %v4542
    %v4591 = vadd.f32 %v3389, %v4545
    %v4592 = vadd.f32 %v3394, %v4550
    %v4593 = vadd.f32 %v3397, %v4553
    %v4594 = vadd.f32 %v3402, %v4558
    %v4595 = vadd.f32 %v3405, %v4561
    %v4596 = vld [vmem:[%s4] sm:$0xff]
    %v4597 = vadd.f32 %v4564, %v4596
    %v4598 = vadd.f32 %v4565, %v4596
    %v4599 = vadd.f32 %v4566, %v4596
    %v4600 = vadd.f32 %v4567, %v4596
    %v4601 = vadd.f32 %v4568, %v4596
    %v4602 = vadd.f32 %v4569, %v4596
    %v4603 = vadd.f32 %v4570, %v4596
    %v4604 = vadd.f32 %v4571, %v4596
    %v4605 = vadd.f32 %v4572, %v4596
    %v4606 = vadd.f32 %v4573, %v4596
    %v4607 = vadd.f32 %v4574, %v4596
    %v4608 = vadd.f32 %v4575, %v4596
    %v4609 = vadd.f32 %v4576, %v4596
    %v4610 = vadd.f32 %v4577, %v4596
    %v4611 = vadd.f32 %v4578, %v4596
    %v4612 = vadd.f32 %v4579, %v4596
    %v4613 = vadd.f32 %v4580, %v4596
    %v4614 = vadd.f32 %v4581, %v4596
    %v4615 = vadd.f32 %v4582, %v4596
    %v4616 = vadd.f32 %v4583, %v4596
    %v4617 = vadd.f32 %v4584, %v4596
    %v4618 = vadd.f32 %v4585, %v4596
    %v4619 = vadd.f32 %v4586, %v4596
    %v4620 = vadd.f32 %v4587, %v4596
    %v4621 = vadd.f32 %v4588, %v4596
    %v4622 = vadd.f32 %v4589, %v4596
    %v4623 = vadd.f32 %v4590, %v4596
    %v4624 = vadd.f32 %v4591, %v4596
    %v4625 = vadd.f32 %v4592, %v4596
    %v4626 = vadd.f32 %v4593, %v4596
    %v4627 = vadd.f32 %v4594, %v4596
    %v4628 = vadd.f32 %v4595, %v4596
    %4629 = vst [vmem:[#allocation8] sm:$0xff] %v4597
    %4630 = vst [vmem:[#allocation8 + $0x8] sm:$0xff] %v4598
    %4631 = vst [vmem:[#allocation8 + $0x10] sm:$0xff] %v4599
    %4632 = vst [vmem:[#allocation8 + $0x18] sm:$0xff] %v4600
    %4633 = vst [vmem:[#allocation8 + $0x20] sm:$0xff] %v4601
    %4634 = vst [vmem:[#allocation8 + $0x28] sm:$0xff] %v4602
    %4635 = vst [vmem:[#allocation8 + $0x30] sm:$0xff] %v4603
    %4636 = vst [vmem:[#allocation8 + $0x38] sm:$0xff] %v4604
    %4637 = vst [vmem:[#allocation8 + $0x40] sm:$0xff] %v4605
    %4638 = vst [vmem:[#allocation8 + $0x48] sm:$0xff] %v4606
    %4639 = vst [vmem:[#allocation8 + $0x50] sm:$0xff] %v4607
    %4640 = vst [vmem:[#allocation8 + $0x58] sm:$0xff] %v4608
    %4641 = vst [vmem:[#allocation8 + $0x60] sm:$0xff] %v4609
    %4642 = vst [vmem:[#allocation8 + $0x68] sm:$0xff] %v4610
    %4643 = vst [vmem:[#allocation8 + $0x70] sm:$0xff] %v4611
    %4644 = vst [vmem:[#allocation8 + $0x78] sm:$0xff] %v4612
    %4645 = vst [vmem:[#allocation8 + $0x80] sm:$0xff] %v4613
    %4646 = vst [vmem:[#allocation8 + $0x88] sm:$0xff] %v4614
    %4647 = vst [vmem:[#allocation8 + $0x90] sm:$0xff] %v4615
    %4648 = vst [vmem:[#allocation8 + $0x98] sm:$0xff] %v4616
    %4649 = vst [vmem:[#allocation8 + $0xa0] sm:$0xff] %v4617
    %4650 = vst [vmem:[#allocation8 + $0xa8] sm:$0xff] %v4618
    %4651 = vst [vmem:[#allocation8 + $0xb0] sm:$0xff] %v4619
    %4652 = vst [vmem:[#allocation8 + $0xb8] sm:$0xff] %v4620
    %4653 = vst [vmem:[#allocation8 + $0xc0] sm:$0xff] %v4621
    %4654 = vst [vmem:[#allocation8 + $0xc8] sm:$0xff] %v4622
    %4655 = vst [vmem:[#allocation8 + $0xd0] sm:$0xff] %v4623
    %4656 = vst [vmem:[#allocation8 + $0xd8] sm:$0xff] %v4624
    %4657 = vst [vmem:[#allocation8 + $0xe0] sm:$0xff] %v4625
    %4658 = vst [vmem:[#allocation8 + $0xe8] sm:$0xff] %v4626
    %4659 = vst [vmem:[#allocation8 + $0xf0] sm:$0xff] %v4627
    %4660 = vst [vmem:[#allocation8 + $0xf8] sm:$0xff] %v4628
    // Predicated region
    $region34: #{tpu_custom_call.1} parent=1 // pred_check
      _
    $region35: #{tpu_custom_call.1} parent=1 // pred_check_branch
      %4662 = sbr.rel (0) target = $region37
    $region36: #{tpu_custom_call.1} parent=1 // pred_region
      %s4664 = ssub.s32 4096, 4096
      %4665 = vsyncadd [#allocation4], %s4664
      %s4666 = sshll.u32 [#allocation8], 4
      %s4667 = int_to_ptr.vmem [resolvable:$true] %s4666
      %4672 = dma.vmem_to_hbm [thread:$0]  %s4667, 4096, %s5, [#allocation4], 128, 128, 8
    $region37: #{tpu_custom_call.1} parent=1 // pred_fallthru
      _
    // Predicated region
    $region38: #{tpu_custom_call.1} parent=1 // pred_check
      _
    $region39: #{tpu_custom_call.1} parent=1 // pred_check_branch
      %4674 = sbr.rel (0) target = $region41
    $region40: #{tpu_custom_call.1} parent=1 // pred_region
      %4675 = dma.done [#allocation4], 4096
    $region41: #{tpu_custom_call.1} parent=1 // pred_fallthru
      _
    %4676 = vsyncpa [#allocation3], 1
    %4677 = vsyncpa [#allocation6], 1
    %4678 = vsyncpa [#allocation4], 1

</llo_original>
